<compile_context>
chip_gen: v6e
topology: v6e:2x2x1
jax: 0.10.0
libtpu: 0.0.40
codegen_flags: <defaults>
</compile_context>

<pallas_src>
import functools

import jax
import jax.numpy as jnp
from jax.experimental import pallas as pl
from jax.experimental.pallas import tpu as pltpu


F_PAD = 128  # lane-dense padded feature width (>= max(nfeat, nhid, nclass))
N_ALIGN = 128  # node/row dimension alignment (lane-dense adj, full-K MXU passes)


def _round_up(n, m):
    return ((n + m - 1) // m) * m


def _pad_to(a, shape):
    return jnp.pad(a, [(0, s - d) for s, d in zip(shape, a.shape)])


def _full_spec(shape):
    # Full-array block resident in VMEM (no grid; total working set < 1 MiB here).
    return pl.BlockSpec(shape, lambda: tuple(0 for _ in shape),
                        memory_space=pltpu.VMEM)


# ---------------------------------------------------------------------------
# Fused kernel: the entire 10-layer ResGCN forward, everything VMEM-resident.
# ---------------------------------------------------------------------------

def _resgcn_fused_kernel(x_ref, adj_ref, w_ref, b_ref, o_ref, *, n_layers, nclass):
    """x_ref:   [N_PAD, F_PAD]        bf16  zero-padded input features
       adj_ref: [N_PAD, N_PAD]        bf16  zero-padded normalized adjacency
       w_ref:   [L, F_PAD, F_PAD]     bf16  zero-padded stacked weights
       b_ref:   [L, 1, F_PAD]         f32   zero-padded stacked biases
       o_ref:   [N_PAD, F_PAD]        f32   log-probs in cols [0, nclass), junk in pad rows
    """
    f32 = jnp.float32
    bf16 = jnp.bfloat16
    adj = adj_ref[...]

    # ---- Layer 1: relu((adj @ x) @ W1 + b1)  (re-associated: nfeat < nhid)
    ax = jnp.dot(adj, x_ref[...], preferred_element_type=f32)
    h = jnp.dot(ax.astype(bf16), w_ref[0], preferred_element_type=f32)
    act = jnp.maximum(h + b_ref[0], 0.0)

    # ---- Layers 2..L-1: residual GCN layers (dropout == identity at inference)
    for i in range(1, n_layers - 1):
        support = jnp.dot(act.astype(bf16), w_ref[i], preferred_element_type=f32)
        h = jnp.dot(adj, support.astype(bf16), preferred_element_type=f32)
        act = jnp.maximum(h + b_ref[i], 0.0) + act

    # ---- Final layer: relu(gc_L(act)) then log_softmax over the class axis
    i = n_layers - 1
    support = jnp.dot(act.astype(bf16), w_ref[i], preferred_element_type=f32)
    h = jnp.dot(adj, support.astype(bf16), preferred_element_type=f32)
    z = jnp.maximum(h + b_ref[i], 0.0)

    # Exclude the zero-padded lanes (cols >= nclass) from the softmax.
    lane = jax.lax.broadcasted_iota(jnp.int32, z.shape, dimension=1)
    valid = lane < nclass
    z = jnp.where(valid, z, -jnp.inf)
    m = jnp.max(z, axis=-1, keepdims=True)
    shifted = z - m
    lse = jnp.log(jnp.sum(jnp.exp(shifted), axis=-1, keepdims=True))
    o_ref[...] = jnp.where(valid, shifted - lse, 0.0)


# ---------------------------------------------------------------------------
# One-time packing (done OUTSIDE the jitted forward, per review feedback).
# ---------------------------------------------------------------------------

def pack_params(params):
    """Stack + zero-pad weights/biases to a lane-dense F_PAD-wide bf16/f32 layout."""
    w_stack = jnp.stack([_pad_to(w, (F_PAD, F_PAD)) for w, _ in params]).astype(jnp.bfloat16)
    b_stack = jnp.stack([_pad_to(b.reshape(1, -1), (1, F_PAD)) for _, b in params]).astype(jnp.float32)
    return w_stack, b_stack


def pack_graph(x, adj):
    """Zero-pad node dim to a multiple of 128 and features to F_PAD; cast to bf16 once."""
    n = x.shape[0]
    n_pad = _round_up(n, N_ALIGN)
    x_p = _pad_to(x, (n_pad, F_PAD)).astype(jnp.bfloat16)
    adj_p = _pad_to(adj, (n_pad, n_pad)).astype(jnp.bfloat16)
    return x_p, adj_p


# ---------------------------------------------------------------------------
# ResGCN forward (inference): packed inputs -> log-probs.
# ---------------------------------------------------------------------------

@functools.partial(jax.jit, static_argnames=("n", "nclass"))
def resgcn_forward(x_p, adj_p, w_stack, b_stack, *, n, nclass):
    n_pad = x_p.shape[0]
    n_layers = w_stack.shape[0]

    kernel = functools.partial(_resgcn_fused_kernel,
                               n_layers=n_layers, nclass=nclass)

    # Working-set sizing for the scoped VMEM limit (everything single-buffered,
    # no grid): inputs + output, with generous headroom.
    in_bytes = (x_p.size * 2 + adj_p.size * 2 + w_stack.size * 2 + b_stack.size * 4)
    out_bytes = n_pad * F_PAD * 4
    vmem_bytes = min(2 * (in_bytes + out_bytes) + (4 << 20), 64 << 20)

    # Advisory cost estimate (two matmuls per layer: act@W and adj@support).
    flops = int(n_layers * (2 * n_pad * F_PAD * F_PAD + 2 * n_pad * n_pad * F_PAD))
    cost = pl.CostEstimate(flops=flops,
                           transcendentals=int(n_pad * F_PAD),
                           bytes_accessed=int(in_bytes + out_bytes))

    out_pad = pl.pallas_call(
        kernel,
        out_shape=jax.ShapeDtypeStruct((n_pad, F_PAD), jnp.float32),
        in_specs=[_full_spec(x_p.shape), _full_spec(adj_p.shape),
                  _full_spec(w_stack.shape), _full_spec(b_stack.shape)],
        out_specs=_full_spec((n_pad, F_PAD)),
        compiler_params=pltpu.CompilerParams(vmem_limit_bytes=int(vmem_bytes)),
        cost_estimate=cost,
    )(x_p, adj_p, w_stack, b_stack)

    # Lane-dense writeback inside the kernel; slice the true rows/classes here.
    return out_pad[:n, :nclass]


# ---------------------------------------------------------------------------
# Pure-JAX reference mirroring the kernel math (bf16 operands, f32 accumulate).
# ---------------------------------------------------------------------------

def resgcn_reference(x, adj, params):
    f32, bf16 = jnp.float32, jnp.bfloat16
    adj_b = adj.astype(bf16)
    w, b = params[0]
    ax = jnp.dot(adj_b, x.astype(bf16), preferred_element_type=f32)
    act = jnp.maximum(jnp.dot(ax.astype(bf16), w.astype(bf16),
                              preferred_element_type=f32) + b, 0.0)
    for w, b in params[1:-1]:
        s = jnp.dot(act.astype(bf16), w.astype(bf16), preferred_element_type=f32)
        h = jnp.dot(adj_b, s.astype(bf16), preferred_element_type=f32)
        act = jnp.maximum(h + b, 0.0) + act
    w, b = params[-1]
    s = jnp.dot(act.astype(bf16), w.astype(bf16), preferred_element_type=f32)
    h = jnp.dot(adj_b, s.astype(bf16), preferred_element_type=f32)
    z = jnp.maximum(h + b, 0.0)
    return jax.nn.log_softmax(z, axis=1)


def init_params(key, nfeat, nhid, nclass):
    """Deterministic init matching GraphConvolution: U(-stdv, stdv), stdv=1/sqrt(fan_out)."""
    dims = [(nfeat, nhid)] + [(nhid, nhid)] * 8 + [(nhid, nclass)]
    params = []
    for (fin, fout) in dims:
        key, kw, kb = jax.random.split(key, 3)
        stdv = 1.0 / (fout ** 0.5)
        w = jax.random.uniform(kw, (fin, fout), jnp.float32, -stdv, stdv)
        b = jax.random.uniform(kb, (fout,), jnp.float32, -stdv, stdv)
        params.append((w, b))
    return params


if __name__ == "__main__":
    key = jax.random.PRNGKey(0)
    N, nfeat, nhid, nclass = 64, 16, 32, 8

    k_x, k_adj, k_p = jax.random.split(key, 3)
    x = jax.random.normal(k_x, (N, nfeat), jnp.float32)

    # Symmetrically-normalized random adjacency (deterministic).
    a = (jax.random.uniform(k_adj, (N, N)) < 0.1).astype(jnp.float32)
    a = jnp.maximum(a, a.T) + jnp.eye(N, dtype=jnp.float32)
    deg = jnp.sum(a, axis=1)
    d_inv_sqrt = 1.0 / jnp.sqrt(deg)
    adj = a * d_inv_sqrt[:, None] * d_inv_sqrt[None, :]

    params = init_params(k_p, nfeat, nhid, nclass)

    # One-time packing (outside the jitted forward).
    w_stack, b_stack = pack_params(params)
    x_p, adj_p = pack_graph(x, adj)

    out = resgcn_forward(x_p, adj_p, w_stack, b_stack, n=N, nclass=nclass)
    jax.block_until_ready(out)

    assert out.shape == (N, nclass)
    # Rows must be valid log-probability distributions (exact f32 normalization).
    row_sums = jnp.sum(jnp.exp(out), axis=-1)
    assert bool(jnp.all(jnp.isfinite(out)))
    assert bool(jnp.all(jnp.abs(row_sums - 1.0) < 1e-3))
    # Matches the bf16-operand / f32-accumulate reference of the same math.
    ref = resgcn_reference(x, adj, params)
    assert bool(jnp.max(jnp.abs(out - ref)) < 5e-3)
    print("KERNEL_OK")
</pallas_src>

<mosaic_0001>
module attributes {stable_mosaic.version = 11 : i64} {
  func.func @_resgcn_fused_kernel(%arg0: memref<128x128xbf16, #tpu.memory_space<vmem>>, %arg1: memref<128x128xbf16, #tpu.memory_space<vmem>>, %arg2: memref<10x128x128xbf16, #tpu.memory_space<vmem>>, %arg3: memref<10x1x128xf32, #tpu.memory_space<vmem>>, %arg4: memref<128x128xf32, #tpu.memory_space<vmem>>) attributes {dimension_semantics = [], scalar_prefetch = 0 : i64, scratch_operands = 0 : i64, tpu.core_type = #tpu.core_type<tc>} {
    %c0 = arith.constant 0 : index
    %c0_0 = arith.constant 0 : index
    %0 = vector.load %arg1[%c0, %c0_0] : memref<128x128xbf16, #tpu.memory_space<vmem>>, vector<128x128xbf16>
    %c0_1 = arith.constant 0 : index
    %c0_2 = arith.constant 0 : index
    %1 = vector.load %arg0[%c0_1, %c0_2] : memref<128x128xbf16, #tpu.memory_space<vmem>>, vector<128x128xbf16>
    %cst = arith.constant dense<0.000000e+00> : vector<128x128xf32>
    %2 = tpu.matmul %0, %1, %cst {dimension_numbers = #tpu.dot_dimension_numbers<[1], [0], [0], [1], [0, 0, 1, 1], [], []>} : vector<128x128xbf16>, vector<128x128xbf16>, vector<128x128xf32> -> vector<128x128xf32>
    %3 = arith.truncf %2 : vector<128x128xf32> to vector<128x128xbf16>
    %c0_3 = arith.constant 0 : index
    %c0_4 = arith.constant 0 : index
    %c0_5 = arith.constant 0 : index
    %4 = vector.load %arg2[%c0_3, %c0_4, %c0_5] : memref<10x128x128xbf16, #tpu.memory_space<vmem>>, vector<1x128x128xbf16>
    %5 = vector.shape_cast %4 : vector<1x128x128xbf16> to vector<128x128xbf16>
    %cst_6 = arith.constant dense<0.000000e+00> : vector<128x128xf32>
    %6 = tpu.matmul %3, %5, %cst_6 {dimension_numbers = #tpu.dot_dimension_numbers<[1], [0], [0], [1], [0, 0, 1, 1], [], []>} : vector<128x128xbf16>, vector<128x128xbf16>, vector<128x128xf32> -> vector<128x128xf32>
    %c0_7 = arith.constant 0 : index
    %c0_8 = arith.constant 0 : index
    %c0_9 = arith.constant 0 : index
    %7 = vector.load %arg3[%c0_7, %c0_8, %c0_9] : memref<10x1x128xf32, #tpu.memory_space<vmem>>, vector<1x1x128xf32>
    %8 = vector.shape_cast %7 : vector<1x1x128xf32> to vector<1x128xf32>
    %9 = vector.broadcast %8 : vector<1x128xf32> to vector<128x128xf32>
    %10 = arith.addf %6, %9 : vector<128x128xf32>
    %cst_10 = arith.constant 0.000000e+00 : f32
    %11 = vector.broadcast %cst_10 : f32 to vector<128x128xf32>
    %12 = arith.maximumf %10, %11 : vector<128x128xf32>
    %13 = arith.truncf %12 : vector<128x128xf32> to vector<128x128xbf16>
    %c1 = arith.constant 1 : index
    %c0_11 = arith.constant 0 : index
    %c0_12 = arith.constant 0 : index
    %14 = vector.load %arg2[%c1, %c0_11, %c0_12] : memref<10x128x128xbf16, #tpu.memory_space<vmem>>, vector<1x128x128xbf16>
    %15 = vector.shape_cast %14 : vector<1x128x128xbf16> to vector<128x128xbf16>
    %cst_13 = arith.constant dense<0.000000e+00> : vector<128x128xf32>
    %16 = tpu.matmul %13, %15, %cst_13 {dimension_numbers = #tpu.dot_dimension_numbers<[1], [0], [0], [1], [0, 0, 1, 1], [], []>} : vector<128x128xbf16>, vector<128x128xbf16>, vector<128x128xf32> -> vector<128x128xf32>
    %17 = arith.truncf %16 : vector<128x128xf32> to vector<128x128xbf16>
    %cst_14 = arith.constant dense<0.000000e+00> : vector<128x128xf32>
    %18 = tpu.matmul %0, %17, %cst_14 {dimension_numbers = #tpu.dot_dimension_numbers<[1], [0], [0], [1], [0, 0, 1, 1], [], []>} : vector<128x128xbf16>, vector<128x128xbf16>, vector<128x128xf32> -> vector<128x128xf32>
    %c1_15 = arith.constant 1 : index
    %c0_16 = arith.constant 0 : index
    %c0_17 = arith.constant 0 : index
    %19 = vector.load %arg3[%c1_15, %c0_16, %c0_17] : memref<10x1x128xf32, #tpu.memory_space<vmem>>, vector<1x1x128xf32>
    %20 = vector.shape_cast %19 : vector<1x1x128xf32> to vector<1x128xf32>
    %21 = vector.broadcast %20 : vector<1x128xf32> to vector<128x128xf32>
    %22 = arith.addf %18, %21 : vector<128x128xf32>
    %cst_18 = arith.constant 0.000000e+00 : f32
    %23 = vector.broadcast %cst_18 : f32 to vector<128x128xf32>
    %24 = arith.maximumf %22, %23 : vector<128x128xf32>
    %25 = arith.addf %24, %12 : vector<128x128xf32>
    %26 = arith.truncf %25 : vector<128x128xf32> to vector<128x128xbf16>
    %c2 = arith.constant 2 : index
    %c0_19 = arith.constant 0 : index
    %c0_20 = arith.constant 0 : index
    %27 = vector.load %arg2[%c2, %c0_19, %c0_20] : memref<10x128x128xbf16, #tpu.memory_space<vmem>>, vector<1x128x128xbf16>
    %28 = vector.shape_cast %27 : vector<1x128x128xbf16> to vector<128x128xbf16>
    %cst_21 = arith.constant dense<0.000000e+00> : vector<128x128xf32>
    %29 = tpu.matmul %26, %28, %cst_21 {dimension_numbers = #tpu.dot_dimension_numbers<[1], [0], [0], [1], [0, 0, 1, 1], [], []>} : vector<128x128xbf16>, vector<128x128xbf16>, vector<128x128xf32> -> vector<128x128xf32>
    %30 = arith.truncf %29 : vector<128x128xf32> to vector<128x128xbf16>
    %cst_22 = arith.constant dense<0.000000e+00> : vector<128x128xf32>
    %31 = tpu.matmul %0, %30, %cst_22 {dimension_numbers = #tpu.dot_dimension_numbers<[1], [0], [0], [1], [0, 0, 1, 1], [], []>} : vector<128x128xbf16>, vector<128x128xbf16>, vector<128x128xf32> -> vector<128x128xf32>
    %c2_23 = arith.constant 2 : index
    %c0_24 = arith.constant 0 : index
    %c0_25 = arith.constant 0 : index
    %32 = vector.load %arg3[%c2_23, %c0_24, %c0_25] : memref<10x1x128xf32, #tpu.memory_space<vmem>>, vector<1x1x128xf32>
    %33 = vector.shape_cast %32 : vector<1x1x128xf32> to vector<1x128xf32>
    %34 = vector.broadcast %33 : vector<1x128xf32> to vector<128x128xf32>
    %35 = arith.addf %31, %34 : vector<128x128xf32>
    %cst_26 = arith.constant 0.000000e+00 : f32
    %36 = vector.broadcast %cst_26 : f32 to vector<128x128xf32>
    %37 = arith.maximumf %35, %36 : vector<128x128xf32>
    %38 = arith.addf %37, %25 : vector<128x128xf32>
    %39 = arith.truncf %38 : vector<128x128xf32> to vector<128x128xbf16>
    %c3 = arith.constant 3 : index
    %c0_27 = arith.constant 0 : index
    %c0_28 = arith.constant 0 : index
    %40 = vector.load %arg2[%c3, %c0_27, %c0_28] : memref<10x128x128xbf16, #tpu.memory_space<vmem>>, vector<1x128x128xbf16>
    %41 = vector.shape_cast %40 : vector<1x128x128xbf16> to vector<128x128xbf16>
    %cst_29 = arith.constant dense<0.000000e+00> : vector<128x128xf32>
    %42 = tpu.matmul %39, %41, %cst_29 {dimension_numbers = #tpu.dot_dimension_numbers<[1], [0], [0], [1], [0, 0, 1, 1], [], []>} : vector<128x128xbf16>, vector<128x128xbf16>, vector<128x128xf32> -> vector<128x128xf32>
    %43 = arith.truncf %42 : vector<128x128xf32> to vector<128x128xbf16>
    %cst_30 = arith.constant dense<0.000000e+00> : vector<128x128xf32>
    %44 = tpu.matmul %0, %43, %cst_30 {dimension_numbers = #tpu.dot_dimension_numbers<[1], [0], [0], [1], [0, 0, 1, 1], [], []>} : vector<128x128xbf16>, vector<128x128xbf16>, vector<128x128xf32> -> vector<128x128xf32>
    %c3_31 = arith.constant 3 : index
    %c0_32 = arith.constant 0 : index
    %c0_33 = arith.constant 0 : index
    %45 = vector.load %arg3[%c3_31, %c0_32, %c0_33] : memref<10x1x128xf32, #tpu.memory_space<vmem>>, vector<1x1x128xf32>
    %46 = vector.shape_cast %45 : vector<1x1x128xf32> to vector<1x128xf32>
    %47 = vector.broadcast %46 : vector<1x128xf32> to vector<128x128xf32>
    %48 = arith.addf %44, %47 : vector<128x128xf32>
    %cst_34 = arith.constant 0.000000e+00 : f32
    %49 = vector.broadcast %cst_34 : f32 to vector<128x128xf32>
    %50 = arith.maximumf %48, %49 : vector<128x128xf32>
    %51 = arith.addf %50, %38 : vector<128x128xf32>
    %52 = arith.truncf %51 : vector<128x128xf32> to vector<128x128xbf16>
    %c4 = arith.constant 4 : index
    %c0_35 = arith.constant 0 : index
    %c0_36 = arith.constant 0 : index
    %53 = vector.load %arg2[%c4, %c0_35, %c0_36] : memref<10x128x128xbf16, #tpu.memory_space<vmem>>, vector<1x128x128xbf16>
    %54 = vector.shape_cast %53 : vector<1x128x128xbf16> to vector<128x128xbf16>
    %cst_37 = arith.constant dense<0.000000e+00> : vector<128x128xf32>
    %55 = tpu.matmul %52, %54, %cst_37 {dimension_numbers = #tpu.dot_dimension_numbers<[1], [0], [0], [1], [0, 0, 1, 1], [], []>} : vector<128x128xbf16>, vector<128x128xbf16>, vector<128x128xf32> -> vector<128x128xf32>
    %56 = arith.truncf %55 : vector<128x128xf32> to vector<128x128xbf16>
    %cst_38 = arith.constant dense<0.000000e+00> : vector<128x128xf32>
    %57 = tpu.matmul %0, %56, %cst_38 {dimension_numbers = #tpu.dot_dimension_numbers<[1], [0], [0], [1], [0, 0, 1, 1], [], []>} : vector<128x128xbf16>, vector<128x128xbf16>, vector<128x128xf32> -> vector<128x128xf32>
    %c4_39 = arith.constant 4 : index
    %c0_40 = arith.constant 0 : index
    %c0_41 = arith.constant 0 : index
    %58 = vector.load %arg3[%c4_39, %c0_40, %c0_41] : memref<10x1x128xf32, #tpu.memory_space<vmem>>, vector<1x1x128xf32>
    %59 = vector.shape_cast %58 : vector<1x1x128xf32> to vector<1x128xf32>
    %60 = vector.broadcast %59 : vector<1x128xf32> to vector<128x128xf32>
    %61 = arith.addf %57, %60 : vector<128x128xf32>
    %cst_42 = arith.constant 0.000000e+00 : f32
    %62 = vector.broadcast %cst_42 : f32 to vector<128x128xf32>
    %63 = arith.maximumf %61, %62 : vector<128x128xf32>
    %64 = arith.addf %63, %51 : vector<128x128xf32>
    %65 = arith.truncf %64 : vector<128x128xf32> to vector<128x128xbf16>
    %c5 = arith.constant 5 : index
    %c0_43 = arith.constant 0 : index
    %c0_44 = arith.constant 0 : index
    %66 = vector.load %arg2[%c5, %c0_43, %c0_44] : memref<10x128x128xbf16, #tpu.memory_space<vmem>>, vector<1x128x128xbf16>
    %67 = vector.shape_cast %66 : vector<1x128x128xbf16> to vector<128x128xbf16>
    %cst_45 = arith.constant dense<0.000000e+00> : vector<128x128xf32>
    %68 = tpu.matmul %65, %67, %cst_45 {dimension_numbers = #tpu.dot_dimension_numbers<[1], [0], [0], [1], [0, 0, 1, 1], [], []>} : vector<128x128xbf16>, vector<128x128xbf16>, vector<128x128xf32> -> vector<128x128xf32>
    %69 = arith.truncf %68 : vector<128x128xf32> to vector<128x128xbf16>
    %cst_46 = arith.constant dense<0.000000e+00> : vector<128x128xf32>
    %70 = tpu.matmul %0, %69, %cst_46 {dimension_numbers = #tpu.dot_dimension_numbers<[1], [0], [0], [1], [0, 0, 1, 1], [], []>} : vector<128x128xbf16>, vector<128x128xbf16>, vector<128x128xf32> -> vector<128x128xf32>
    %c5_47 = arith.constant 5 : index
    %c0_48 = arith.constant 0 : index
    %c0_49 = arith.constant 0 : index
    %71 = vector.load %arg3[%c5_47, %c0_48, %c0_49] : memref<10x1x128xf32, #tpu.memory_space<vmem>>, vector<1x1x128xf32>
    %72 = vector.shape_cast %71 : vector<1x1x128xf32> to vector<1x128xf32>
    %73 = vector.broadcast %72 : vector<1x128xf32> to vector<128x128xf32>
    %74 = arith.addf %70, %73 : vector<128x128xf32>
    %cst_50 = arith.constant 0.000000e+00 : f32
    %75 = vector.broadcast %cst_50 : f32 to vector<128x128xf32>
    %76 = arith.maximumf %74, %75 : vector<128x128xf32>
    %77 = arith.addf %76, %64 : vector<128x128xf32>
    %78 = arith.truncf %77 : vector<128x128xf32> to vector<128x128xbf16>
    %c6 = arith.constant 6 : index
    %c0_51 = arith.constant 0 : index
    %c0_52 = arith.constant 0 : index
    %79 = vector.load %arg2[%c6, %c0_51, %c0_52] : memref<10x128x128xbf16, #tpu.memory_space<vmem>>, vector<1x128x128xbf16>
    %80 = vector.shape_cast %79 : vector<1x128x128xbf16> to vector<128x128xbf16>
    %cst_53 = arith.constant dense<0.000000e+00> : vector<128x128xf32>
    %81 = tpu.matmul %78, %80, %cst_53 {dimension_numbers = #tpu.dot_dimension_numbers<[1], [0], [0], [1], [0, 0, 1, 1], [], []>} : vector<128x128xbf16>, vector<128x128xbf16>, vector<128x128xf32> -> vector<128x128xf32>
    %82 = arith.truncf %81 : vector<128x128xf32> to vector<128x128xbf16>
    %cst_54 = arith.constant dense<0.000000e+00> : vector<128x128xf32>
    %83 = tpu.matmul %0, %82, %cst_54 {dimension_numbers = #tpu.dot_dimension_numbers<[1], [0], [0], [1], [0, 0, 1, 1], [], []>} : vector<128x128xbf16>, vector<128x128xbf16>, vector<128x128xf32> -> vector<128x128xf32>
    %c6_55 = arith.constant 6 : index
    %c0_56 = arith.constant 0 : index
    %c0_57 = arith.constant 0 : index
    %84 = vector.load %arg3[%c6_55, %c0_56, %c0_57] : memref<10x1x128xf32, #tpu.memory_space<vmem>>, vector<1x1x128xf32>
    %85 = vector.shape_cast %84 : vector<1x1x128xf32> to vector<1x128xf32>
    %86 = vector.broadcast %85 : vector<1x128xf32> to vector<128x128xf32>
    %87 = arith.addf %83, %86 : vector<128x128xf32>
    %cst_58 = arith.constant 0.000000e+00 : f32
    %88 = vector.broadcast %cst_58 : f32 to vector<128x128xf32>
    %89 = arith.maximumf %87, %88 : vector<128x128xf32>
    %90 = arith.addf %89, %77 : vector<128x128xf32>
    %91 = arith.truncf %90 : vector<128x128xf32> to vector<128x128xbf16>
    %c7 = arith.constant 7 : index
    %c0_59 = arith.constant 0 : index
    %c0_60 = arith.constant 0 : index
    %92 = vector.load %arg2[%c7, %c0_59, %c0_60] : memref<10x128x128xbf16, #tpu.memory_space<vmem>>, vector<1x128x128xbf16>
    %93 = vector.shape_cast %92 : vector<1x128x128xbf16> to vector<128x128xbf16>
    %cst_61 = arith.constant dense<0.000000e+00> : vector<128x128xf32>
    %94 = tpu.matmul %91, %93, %cst_61 {dimension_numbers = #tpu.dot_dimension_numbers<[1], [0], [0], [1], [0, 0, 1, 1], [], []>} : vector<128x128xbf16>, vector<128x128xbf16>, vector<128x128xf32> -> vector<128x128xf32>
    %95 = arith.truncf %94 : vector<128x128xf32> to vector<128x128xbf16>
    %cst_62 = arith.constant dense<0.000000e+00> : vector<128x128xf32>
    %96 = tpu.matmul %0, %95, %cst_62 {dimension_numbers = #tpu.dot_dimension_numbers<[1], [0], [0], [1], [0, 0, 1, 1], [], []>} : vector<128x128xbf16>, vector<128x128xbf16>, vector<128x128xf32> -> vector<128x128xf32>
    %c7_63 = arith.constant 7 : index
    %c0_64 = arith.constant 0 : index
    %c0_65 = arith.constant 0 : index
    %97 = vector.load %arg3[%c7_63, %c0_64, %c0_65] : memref<10x1x128xf32, #tpu.memory_space<vmem>>, vector<1x1x128xf32>
    %98 = vector.shape_cast %97 : vector<1x1x128xf32> to vector<1x128xf32>
    %99 = vector.broadcast %98 : vector<1x128xf32> to vector<128x128xf32>
    %100 = arith.addf %96, %99 : vector<128x128xf32>
    %cst_66 = arith.constant 0.000000e+00 : f32
    %101 = vector.broadcast %cst_66 : f32 to vector<128x128xf32>
    %102 = arith.maximumf %100, %101 : vector<128x128xf32>
    %103 = arith.addf %102, %90 : vector<128x128xf32>
    %104 = arith.truncf %103 : vector<128x128xf32> to vector<128x128xbf16>
    %c8 = arith.constant 8 : index
    %c0_67 = arith.constant 0 : index
    %c0_68 = arith.constant 0 : index
    %105 = vector.load %arg2[%c8, %c0_67, %c0_68] : memref<10x128x128xbf16, #tpu.memory_space<vmem>>, vector<1x128x128xbf16>
    %106 = vector.shape_cast %105 : vector<1x128x128xbf16> to vector<128x128xbf16>
    %cst_69 = arith.constant dense<0.000000e+00> : vector<128x128xf32>
    %107 = tpu.matmul %104, %106, %cst_69 {dimension_numbers = #tpu.dot_dimension_numbers<[1], [0], [0], [1], [0, 0, 1, 1], [], []>} : vector<128x128xbf16>, vector<128x128xbf16>, vector<128x128xf32> -> vector<128x128xf32>
    %108 = arith.truncf %107 : vector<128x128xf32> to vector<128x128xbf16>
    %cst_70 = arith.constant dense<0.000000e+00> : vector<128x128xf32>
    %109 = tpu.matmul %0, %108, %cst_70 {dimension_numbers = #tpu.dot_dimension_numbers<[1], [0], [0], [1], [0, 0, 1, 1], [], []>} : vector<128x128xbf16>, vector<128x128xbf16>, vector<128x128xf32> -> vector<128x128xf32>
    %c8_71 = arith.constant 8 : index
    %c0_72 = arith.constant 0 : index
    %c0_73 = arith.constant 0 : index
    %110 = vector.load %arg3[%c8_71, %c0_72, %c0_73] : memref<10x1x128xf32, #tpu.memory_space<vmem>>, vector<1x1x128xf32>
    %111 = vector.shape_cast %110 : vector<1x1x128xf32> to vector<1x128xf32>
    %112 = vector.broadcast %111 : vector<1x128xf32> to vector<128x128xf32>
    %113 = arith.addf %109, %112 : vector<128x128xf32>
    %cst_74 = arith.constant 0.000000e+00 : f32
    %114 = vector.broadcast %cst_74 : f32 to vector<128x128xf32>
    %115 = arith.maximumf %113, %114 : vector<128x128xf32>
    %116 = arith.addf %115, %103 : vector<128x128xf32>
    %117 = arith.truncf %116 : vector<128x128xf32> to vector<128x128xbf16>
    %c9 = arith.constant 9 : index
    %c0_75 = arith.constant 0 : index
    %c0_76 = arith.constant 0 : index
    %118 = vector.load %arg2[%c9, %c0_75, %c0_76] : memref<10x128x128xbf16, #tpu.memory_space<vmem>>, vector<1x128x128xbf16>
    %119 = vector.shape_cast %118 : vector<1x128x128xbf16> to vector<128x128xbf16>
    %cst_77 = arith.constant dense<0.000000e+00> : vector<128x128xf32>
    %120 = tpu.matmul %117, %119, %cst_77 {dimension_numbers = #tpu.dot_dimension_numbers<[1], [0], [0], [1], [0, 0, 1, 1], [], []>} : vector<128x128xbf16>, vector<128x128xbf16>, vector<128x128xf32> -> vector<128x128xf32>
    %121 = arith.truncf %120 : vector<128x128xf32> to vector<128x128xbf16>
    %cst_78 = arith.constant dense<0.000000e+00> : vector<128x128xf32>
    %122 = tpu.matmul %0, %121, %cst_78 {dimension_numbers = #tpu.dot_dimension_numbers<[1], [0], [0], [1], [0, 0, 1, 1], [], []>} : vector<128x128xbf16>, vector<128x128xbf16>, vector<128x128xf32> -> vector<128x128xf32>
    %c9_79 = arith.constant 9 : index
    %c0_80 = arith.constant 0 : index
    %c0_81 = arith.constant 0 : index
    %123 = vector.load %arg3[%c9_79, %c0_80, %c0_81] : memref<10x1x128xf32, #tpu.memory_space<vmem>>, vector<1x1x128xf32>
    %124 = vector.shape_cast %123 : vector<1x1x128xf32> to vector<1x128xf32>
    %125 = vector.broadcast %124 : vector<1x128xf32> to vector<128x128xf32>
    %126 = arith.addf %122, %125 : vector<128x128xf32>
    %cst_82 = arith.constant 0.000000e+00 : f32
    %127 = vector.broadcast %cst_82 : f32 to vector<128x128xf32>
    %128 = arith.maximumf %126, %127 : vector<128x128xf32>
    %129 = tpu.iota {dimensions = array<i32: 1>} : vector<128x128xi32>
    %c8_i32 = arith.constant 8 : i32
    %130 = vector.broadcast %c8_i32 : i32 to vector<128x128xi32>
    %131 = arith.cmpi slt, %129, %130 : vector<128x128xi32>
    %cst_83 = arith.constant 0xFF800000 : f32
    %132 = vector.broadcast %cst_83 : f32 to vector<128x128xf32>
    %133 = arith.select %131, %128, %132 : vector<128x128xi1>, vector<128x128xf32>
    %cst_84 = arith.constant dense<0xFF800000> : vector<128xf32>
    %134 = vector.multi_reduction <maximumf>, %133, %cst_84 [1] : vector<128x128xf32> to vector<128xf32>
    %135 = vector.shape_cast %134 : vector<128xf32> to vector<128x1xf32>
    %136 = vector.broadcast %135 : vector<128x1xf32> to vector<128x128xf32>
    %137 = arith.subf %133, %136 : vector<128x128xf32>
    %138 = math.exp %137 : vector<128x128xf32>
    %cst_85 = arith.constant dense<0.000000e+00> : vector<128xf32>
    %139 = vector.multi_reduction <add>, %138, %cst_85 [1] : vector<128x128xf32> to vector<128xf32>
    %140 = vector.shape_cast %139 : vector<128xf32> to vector<128x1xf32>
    %141 = math.log %140 : vector<128x1xf32>
    %142 = vector.broadcast %141 : vector<128x1xf32> to vector<128x128xf32>
    %143 = arith.subf %137, %142 : vector<128x128xf32>
    %cst_86 = arith.constant 0.000000e+00 : f32
    %144 = vector.broadcast %cst_86 : f32 to vector<128x128xf32>
    %145 = arith.select %131, %143, %144 : vector<128x128xi1>, vector<128x128xf32>
    %c0_87 = arith.constant 0 : index
    %c0_88 = arith.constant 0 : index
    %146 = vector.load %arg4[%c0_87, %c0_88] : memref<128x128xf32, #tpu.memory_space<vmem>>, vector<128x128xf32>
    tpu.vector_store %arg4[%c0_87, %c0_88], %145 {strides = array<i32>} : memref<128x128xf32, #tpu.memory_space<vmem>>, vector<128x128xf32>,
    return
  }
}

</mosaic_0001>

<llo_original>
// kernel: resgcn_forward.1
$region0: #{resgcn_forward.1}
  #allocation0 [shape = 'u32[]', space=smem, size = 0x4, offset = 0x4, fixed_abs, tag = 'smem constant byte address 0x4 - core index']
  #allocation1 [shape = 'u32[144,128]{1,0:T(1,128)}', space=vmem, size = 0x12000, scoped, tag = 'internal scratch']
  %s0 = inlined_call_operand.hbm [shape: bf16[128,128], index: 0, kind: input, shape index: {}]
  %s1 = inlined_call_operand.hbm [shape: bf16[128,128], index: 1, kind: input, shape index: {}]
  %s2 = inlined_call_operand.hbm [shape: bf16[10,128,128], index: 2, kind: input, shape index: {}]
  %s3 = inlined_call_operand.hbm [shape: f32[10,1,128], index: 3, kind: input, shape index: {}]
  %s4 = inlined_call_operand.vmem [shape: f32[128,128], index: 4, kind: output, shape index: {}]
  %s5 = sld [smem:[#allocation0]]
  $region42: #{resgcn_forward.1} parent=0
    _
  %s7 = ssub.s32 1, %s5
  %s8 = scalar_select 0, %s7, %s5
  $region1: #{resgcn_forward.1} parent=0
    #allocation2 [shape = 'u8[32768]{0}', space=vmem, size = 0x8000, scoped, tag = 'input window, operand 0, single buffered']
    #allocation3 [shape = 's32[1]{0}', space=sflag, size = 0x4, scoped, tag = 'scoped memory for resgcn_forward.1']
    #allocation4 [shape = 'u8[32768]{0}', space=vmem, size = 0x8000, scoped, tag = 'input window, operand 1, single buffered']
    #allocation5 [shape = 's32[1]{0}', space=sflag, size = 0x4, scoped, tag = 'scoped memory for resgcn_forward.1']
    #allocation6 [shape = 'u8[327680]{0}', space=vmem, size = 0x50000, scoped, tag = 'input window, operand 2, single buffered']
    #allocation7 [shape = 'u8[5120]{0}', space=vmem, size = 0x1400, scoped, tag = 'input window, operand 3, single buffered']
    #allocation8 [shape = 's32[1]{0}', space=sflag, size = 0x4, scoped, tag = 'scoped memory for resgcn_forward.1']
    %9 = vsyncpa [#allocation3], 0
    %10 = vsyncpa [#allocation5], 0
    %11 = vsyncpa [#allocation8], 0
    // Predicated region
    $region2: #{resgcn_forward.1} parent=1 // pred_check
      _
    $region3: #{resgcn_forward.1} parent=1 // pred_check_branch
      %13 = sbr.rel (0) target = $region5
    $region4: #{resgcn_forward.1} parent=1 // pred_region
      %s15 = ssub.s32 1024, 1024
      %16 = vsyncadd [#allocation3], %s15
      %s17 = sshll.u32 [#allocation2], 4
      %s18 = int_to_ptr.vmem [resolvable:$true] %s17
      %23 = dma.hbm_to_vmem [thread:$0]  %s0, 1024, %s18, [#allocation3], 64, 64, 4
    $region5: #{resgcn_forward.1} parent=1 // pred_fallthru
      _
    // Predicated region
    $region6: #{resgcn_forward.1} parent=1 // pred_check
      _
    $region7: #{resgcn_forward.1} parent=1 // pred_check_branch
      %25 = sbr.rel (0) target = $region9
    $region8: #{resgcn_forward.1} parent=1 // pred_region
      %s27 = ssub.s32 1024, 1024
      %28 = vsyncadd [#allocation5], %s27
      %s29 = sshll.u32 [#allocation4], 4
      %s30 = int_to_ptr.vmem [resolvable:$true] %s29
      %35 = dma.hbm_to_vmem [thread:$0]  %s1, 1024, %s30, [#allocation5], 64, 64, 4
    $region9: #{resgcn_forward.1} parent=1 // pred_fallthru
      _
    // Predicated region
    $region10: #{resgcn_forward.1} parent=1 // pred_check
      _
    $region11: #{resgcn_forward.1} parent=1 // pred_check_branch
      %37 = sbr.rel (0) target = $region13
    $region12: #{resgcn_forward.1} parent=1 // pred_region
      %s39 = ssub.s32 10240, 10240
      %40 = vsyncadd [#allocation5], %s39
      %s41 = sshll.u32 [#allocation6], 4
      %s42 = int_to_ptr.vmem [resolvable:$true] %s41
      %47 = dma.hbm_to_vmem [thread:$0]  %s2, 10240, %s42, [#allocation5], 64, 64, 4
    $region13: #{resgcn_forward.1} parent=1 // pred_fallthru
      _
    // Predicated region
    $region14: #{resgcn_forward.1} parent=1 // pred_check
      _
    $region15: #{resgcn_forward.1} parent=1 // pred_check_branch
      %49 = sbr.rel (0) target = $region17
    $region16: #{resgcn_forward.1} parent=1 // pred_region
      %s51 = ssub.s32 160, 160
      %52 = vsyncadd [#allocation8], %s51
      %s53 = sshll.u32 [#allocation7], 4
      %s54 = int_to_ptr.vmem [resolvable:$true] %s53
      %59 = dma.hbm_to_vmem [thread:$0]  %s3, 160, %s54, [#allocation8], 16, 16, 1
    $region17: #{resgcn_forward.1} parent=1 // pred_fallthru
      _
    // Predicated region
    $region18: #{resgcn_forward.1} parent=1 // pred_check
      _
    $region19: #{resgcn_forward.1} parent=1 // pred_check_branch
      %61 = sbr.rel (0) target = $region21
    $region20: #{resgcn_forward.1} parent=1 // pred_region
      %62 = dma.done [#allocation3], 1024
    $region21: #{resgcn_forward.1} parent=1 // pred_fallthru
      _
    // Predicated region
    $region22: #{resgcn_forward.1} parent=1 // pred_check
      _
    $region23: #{resgcn_forward.1} parent=1 // pred_check_branch
      %64 = sbr.rel (0) target = $region25
    $region24: #{resgcn_forward.1} parent=1 // pred_region
      %65 = dma.done [#allocation5], 1024
    $region25: #{resgcn_forward.1} parent=1 // pred_fallthru
      _
    // Predicated region
    $region26: #{resgcn_forward.1} parent=1 // pred_check
      _
    $region27: #{resgcn_forward.1} parent=1 // pred_check_branch
      %67 = sbr.rel (0) target = $region29
    $region28: #{resgcn_forward.1} parent=1 // pred_region
      %68 = dma.done [#allocation5], 10240
    $region29: #{resgcn_forward.1} parent=1 // pred_fallthru
      _
    // Predicated region
    $region30: #{resgcn_forward.1} parent=1 // pred_check
      _
    $region31: #{resgcn_forward.1} parent=1 // pred_check_branch
      %70 = sbr.rel (0) target = $region33
    $region32: #{resgcn_forward.1} parent=1 // pred_region
      %71 = dma.done [#allocation8], 160
    $region33: #{resgcn_forward.1} parent=1 // pred_fallthru
      _
    %v73 = vld [vmem:[#allocation4] sm:$0xf]
    %v74 = vld [vmem:[#allocation4 + $0x4] sm:$0xf]
    %v75 = vld [vmem:[#allocation4 + $0x8] sm:$0xf]
    %v76 = vld [vmem:[#allocation4 + $0xc] sm:$0xf]
    %v77 = vld [vmem:[#allocation4 + $0x10] sm:$0xf]
    %v78 = vld [vmem:[#allocation4 + $0x14] sm:$0xf]
    %v79 = vld [vmem:[#allocation4 + $0x18] sm:$0xf]
    %v80 = vld [vmem:[#allocation4 + $0x1c] sm:$0xf]
    %v81 = vld [vmem:[#allocation4 + $0x20] sm:$0xf]
    %v82 = vld [vmem:[#allocation4 + $0x24] sm:$0xf]
    %v83 = vld [vmem:[#allocation4 + $0x28] sm:$0xf]
    %v84 = vld [vmem:[#allocation4 + $0x2c] sm:$0xf]
    %v85 = vld [vmem:[#allocation4 + $0x30] sm:$0xf]
    %v86 = vld [vmem:[#allocation4 + $0x34] sm:$0xf]
    %v87 = vld [vmem:[#allocation4 + $0x38] sm:$0xf]
    %v88 = vld [vmem:[#allocation4 + $0x3c] sm:$0xf]
    %v89 = vld [vmem:[#allocation2] sm:$0xf]
    %v90 = vld [vmem:[#allocation2 + $0x4] sm:$0xf]
    %v91 = vld [vmem:[#allocation2 + $0x8] sm:$0xf]
    %v92 = vld [vmem:[#allocation2 + $0xc] sm:$0xf]
    %v93 = vld [vmem:[#allocation2 + $0x10] sm:$0xf]
    %v94 = vld [vmem:[#allocation2 + $0x14] sm:$0xf]
    %v95 = vld [vmem:[#allocation2 + $0x18] sm:$0xf]
    %v96 = vld [vmem:[#allocation2 + $0x1c] sm:$0xf]
    %v97 = vld [vmem:[#allocation2 + $0x20] sm:$0xf]
    %v98 = vld [vmem:[#allocation2 + $0x24] sm:$0xf]
    %v99 = vld [vmem:[#allocation2 + $0x28] sm:$0xf]
    %v100 = vld [vmem:[#allocation2 + $0x2c] sm:$0xf]
    %v101 = vld [vmem:[#allocation2 + $0x30] sm:$0xf]
    %v102 = vld [vmem:[#allocation2 + $0x34] sm:$0xf]
    %v103 = vld [vmem:[#allocation2 + $0x38] sm:$0xf]
    %v104 = vld [vmem:[#allocation2 + $0x3c] sm:$0xf]
    %v121 = vunpack.c.l.b16 %v73
    %v122 = vunpack.c.l.b16 %v74
    %v123 = vunpack.c.l.b16 %v75
    %v124 = vunpack.c.l.b16 %v76
    %v125 = vunpack.c.l.b16 %v77
    %v126 = vunpack.c.l.b16 %v78
    %v127 = vunpack.c.l.b16 %v79
    %v128 = vunpack.c.l.b16 %v80
    %v129 = vunpack.c.l.b16 %v81
    %v130 = vunpack.c.l.b16 %v82
    %v131 = vunpack.c.l.b16 %v83
    %v132 = vunpack.c.l.b16 %v84
    %v133 = vunpack.c.l.b16 %v85
    %v134 = vunpack.c.l.b16 %v86
    %v135 = vunpack.c.l.b16 %v87
    %v136 = vunpack.c.l.b16 %v88
    %v137 = vpack.c.b16 %v122, %v121
    %v138 = vpack.c.b16 %v124, %v123
    %v139 = vpack.c.b16 %v126, %v125
    %v140 = vpack.c.b16 %v128, %v127
    %v141 = vpack.c.b16 %v130, %v129
    %v142 = vpack.c.b16 %v132, %v131
    %v143 = vpack.c.b16 %v134, %v133
    %v144 = vpack.c.b16 %v136, %v135
    %v169 = vunpack.c.l.b16 %v89
    %v170 = vunpack.c.l.b16 %v90
    %v171 = vunpack.c.l.b16 %v91
    %v172 = vunpack.c.l.b16 %v92
    %v173 = vunpack.c.l.b16 %v93
    %v174 = vunpack.c.l.b16 %v94
    %v175 = vunpack.c.l.b16 %v95
    %v176 = vunpack.c.l.b16 %v96
    %v177 = vunpack.c.l.b16 %v97
    %v178 = vunpack.c.l.b16 %v98
    %v179 = vunpack.c.l.b16 %v99
    %v180 = vunpack.c.l.b16 %v100
    %v181 = vunpack.c.l.b16 %v101
    %v182 = vunpack.c.l.b16 %v102
    %v183 = vunpack.c.l.b16 %v103
    %v184 = vunpack.c.l.b16 %v104
    %v185 = vpack.c.b16 %v170, %v169
    %v186 = vpack.c.b16 %v172, %v171
    %v187 = vpack.c.b16 %v174, %v173
    %v188 = vpack.c.b16 %v176, %v175
    %v189 = vpack.c.b16 %v178, %v177
    %v190 = vpack.c.b16 %v180, %v179
    %v191 = vpack.c.b16 %v182, %v181
    %v192 = vpack.c.b16 %v184, %v183
    %201 = vmatprep.subr.bf16.mxu0 0
    %202 = vmatpush1.bf16.msra.mxu0 %v192
    %203 = vmatprep.subr.bf16.mxu0 0
    %204 = vmatpush1.bf16.msra.mxu0 %v191
    %205 = vmatprep.subr.bf16.mxu0 0
    %206 = vmatpush1.bf16.msra.mxu0 %v190
    %207 = vmatprep.subr.bf16.mxu0 0
    %208 = vmatpush1.bf16.msra.mxu0 %v189
    %209 = vmatprep.subr.bf16.mxu0 0
    %210 = vmatpush1.bf16.msra.mxu0 %v188
    %211 = vmatprep.subr.bf16.mxu0 0
    %212 = vmatpush1.bf16.msra.mxu0 %v187
    %213 = vmatprep.subr.bf16.mxu0 0
    %214 = vmatpush1.bf16.msra.mxu0 %v186
    %215 = vmatprep.subr.bf16.mxu0 0
    %216 = vmatpush1.bf16.msra.mxu0 %v185
    %217 = vmatprep.subr.bf16.mxu0 0
    %218 = vmatpush2.bf16.msra.mxu0 0
    %219 = vmatprep.subr.bf16.mxu0 0
    %220 = vmatpush2.bf16.msra.mxu0 0
    %221 = vmatprep.subr.bf16.mxu0 0
    %222 = vmatpush2.bf16.msra.mxu0 0
    %223 = vmatprep.subr.bf16.mxu0 0
    %224 = vmatpush2.bf16.msra.mxu0 0
    %225 = vmatprep.subr.bf16.mxu0 0
    %226 = vmatpush2.bf16.msra.mxu0 0
    %227 = vmatprep.subr.bf16.mxu0 0
    %228 = vmatpush2.bf16.msra.mxu0 0
    %229 = vmatprep.subr.bf16.mxu0 0
    %230 = vmatpush2.bf16.msra.mxu0 0
    %231 = vmatprep.subr.bf16.mxu0 0
    %232 = vmatpush2.bf16.msra.mxu0 0
    %233 = vmatprep.mubr.bf16.mxu0 0
    %234 = vmatmul.mubr.bf16.gmra.mxu0 %v137
    %v235 = vpop.f32.mrf.mxu0
    %v236 = vadd.f32 0.0, %v235
    %v237 = vpop.f32.mrf.mxu0
    %v238 = vpop.f32.mrf.mxu0
    %v239 = vadd.f32 0.0, %v238
    %v240 = vpop.f32.mrf.mxu0
    %241 = vmatprep.mubr.bf16.mxu0 0
    %242 = vmatmul.mubr.bf16.gmra.mxu0 %v138
    %v243 = vpop.f32.mrf.mxu0
    %v244 = vadd.f32 0.0, %v243
    %v245 = vpop.f32.mrf.mxu0
    %v246 = vpop.f32.mrf.mxu0
    %v247 = vadd.f32 0.0, %v246
    %v248 = vpop.f32.mrf.mxu0
    %249 = vmatprep.mubr.bf16.mxu0 0
    %250 = vmatmul.mubr.bf16.gmra.mxu0 %v139
    %v251 = vpop.f32.mrf.mxu0
    %v252 = vadd.f32 0.0, %v251
    %v253 = vpop.f32.mrf.mxu0
    %v254 = vpop.f32.mrf.mxu0
    %v255 = vadd.f32 0.0, %v254
    %v256 = vpop.f32.mrf.mxu0
    %257 = vmatprep.mubr.bf16.mxu0 0
    %258 = vmatmul.mubr.bf16.gmra.mxu0 %v140
    %v259 = vpop.f32.mrf.mxu0
    %v260 = vadd.f32 0.0, %v259
    %v261 = vpop.f32.mrf.mxu0
    %v262 = vpop.f32.mrf.mxu0
    %v263 = vadd.f32 0.0, %v262
    %v264 = vpop.f32.mrf.mxu0
    %265 = vmatprep.mubr.bf16.mxu0 0
    %266 = vmatmul.mubr.bf16.gmra.mxu0 %v141
    %v267 = vpop.f32.mrf.mxu0
    %v268 = vadd.f32 0.0, %v267
    %v269 = vpop.f32.mrf.mxu0
    %v270 = vpop.f32.mrf.mxu0
    %v271 = vadd.f32 0.0, %v270
    %v272 = vpop.f32.mrf.mxu0
    %273 = vmatprep.mubr.bf16.mxu0 0
    %274 = vmatmul.mubr.bf16.gmra.mxu0 %v142
    %v275 = vpop.f32.mrf.mxu0
    %v276 = vadd.f32 0.0, %v275
    %v277 = vpop.f32.mrf.mxu0
    %v278 = vpop.f32.mrf.mxu0
    %v279 = vadd.f32 0.0, %v278
    %v280 = vpop.f32.mrf.mxu0
    %281 = vmatprep.mubr.bf16.mxu0 0
    %282 = vmatmul.mubr.bf16.gmra.mxu0 %v143
    %v283 = vpop.f32.mrf.mxu0
    %v284 = vadd.f32 0.0, %v283
    %v285 = vpop.f32.mrf.mxu0
    %v286 = vpop.f32.mrf.mxu0
    %v287 = vadd.f32 0.0, %v286
    %v288 = vpop.f32.mrf.mxu0
    %289 = vmatprep.mubr.bf16.mxu0 0
    %290 = vmatmul.mubr.bf16.gmra.mxu0 %v144
    %v291 = vpop.f32.mrf.mxu0
    %v292 = vadd.f32 0.0, %v291
    %v293 = vpop.f32.mrf.mxu0
    %v294 = vpop.f32.mrf.mxu0
    %v295 = vadd.f32 0.0, %v294
    %v296 = vpop.f32.mrf.mxu0
    %297 = vdwg.mxu0
    %v298 = vpack.c.bf16 %v239, %v236
    %v299 = vpack.c.bf16 %v247, %v244
    %v300 = vpack.c.bf16 %v255, %v252
    %v301 = vpack.c.bf16 %v263, %v260
    %v302 = vpack.c.bf16 %v271, %v268
    %v303 = vpack.c.bf16 %v279, %v276
    %v304 = vpack.c.bf16 %v287, %v284
    %v305 = vpack.c.bf16 %v295, %v292
    %v306 = vld [vmem:[#allocation6] sm:$0xf]
    %v307 = vld [vmem:[#allocation6 + $0x4] sm:$0xf]
    %v308 = vld [vmem:[#allocation6 + $0x8] sm:$0xf]
    %v309 = vld [vmem:[#allocation6 + $0xc] sm:$0xf]
    %v310 = vld [vmem:[#allocation6 + $0x10] sm:$0xf]
    %v311 = vld [vmem:[#allocation6 + $0x14] sm:$0xf]
    %v312 = vld [vmem:[#allocation6 + $0x18] sm:$0xf]
    %v313 = vld [vmem:[#allocation6 + $0x1c] sm:$0xf]
    %v314 = vld [vmem:[#allocation6 + $0x20] sm:$0xf]
    %v315 = vld [vmem:[#allocation6 + $0x24] sm:$0xf]
    %v316 = vld [vmem:[#allocation6 + $0x28] sm:$0xf]
    %v317 = vld [vmem:[#allocation6 + $0x2c] sm:$0xf]
    %v318 = vld [vmem:[#allocation6 + $0x30] sm:$0xf]
    %v319 = vld [vmem:[#allocation6 + $0x34] sm:$0xf]
    %v320 = vld [vmem:[#allocation6 + $0x38] sm:$0xf]
    %v321 = vld [vmem:[#allocation6 + $0x3c] sm:$0xf]
    %v322 = vld [vmem:[#allocation7] sm:$0x1]
    %v324 = vlaneseq
    %v325 = vshrl.u32 %v324, 7
    %v326 = vsub.s32 0, %v325
    %v327 = vrot.slane %v322, %v326
    %v345 = vunpack.c.l.b16 %v306
    %v346 = vunpack.c.l.b16 %v307
    %v347 = vunpack.c.l.b16 %v308
    %v348 = vunpack.c.l.b16 %v309
    %v349 = vunpack.c.l.b16 %v310
    %v350 = vunpack.c.l.b16 %v311
    %v351 = vunpack.c.l.b16 %v312
    %v352 = vunpack.c.l.b16 %v313
    %v353 = vunpack.c.l.b16 %v314
    %v354 = vunpack.c.l.b16 %v315
    %v355 = vunpack.c.l.b16 %v316
    %v356 = vunpack.c.l.b16 %v317
    %v357 = vunpack.c.l.b16 %v318
    %v358 = vunpack.c.l.b16 %v319
    %v359 = vunpack.c.l.b16 %v320
    %v360 = vunpack.c.l.b16 %v321
    %v361 = vpack.c.b16 %v346, %v345
    %v362 = vpack.c.b16 %v348, %v347
    %v363 = vpack.c.b16 %v350, %v349
    %v364 = vpack.c.b16 %v352, %v351
    %v365 = vpack.c.b16 %v354, %v353
    %v366 = vpack.c.b16 %v356, %v355
    %v367 = vpack.c.b16 %v358, %v357
    %v368 = vpack.c.b16 %v360, %v359
    %377 = vmatprep.subr.bf16.mxu0 0
    %378 = vmatpush1.bf16.msra.mxu0 %v368
    %379 = vmatprep.subr.bf16.mxu0 0
    %380 = vmatpush1.bf16.msra.mxu0 %v367
    %381 = vmatprep.subr.bf16.mxu0 0
    %382 = vmatpush1.bf16.msra.mxu0 %v366
    %383 = vmatprep.subr.bf16.mxu0 0
    %384 = vmatpush1.bf16.msra.mxu0 %v365
    %385 = vmatprep.subr.bf16.mxu0 0
    %386 = vmatpush1.bf16.msra.mxu0 %v364
    %387 = vmatprep.subr.bf16.mxu0 0
    %388 = vmatpush1.bf16.msra.mxu0 %v363
    %389 = vmatprep.subr.bf16.mxu0 0
    %390 = vmatpush1.bf16.msra.mxu0 %v362
    %391 = vmatprep.subr.bf16.mxu0 0
    %392 = vmatpush1.bf16.msra.mxu0 %v361
    %393 = vmatprep.subr.bf16.mxu0 0
    %394 = vmatpush2.bf16.msra.mxu0 0
    %395 = vmatprep.subr.bf16.mxu0 0
    %396 = vmatpush2.bf16.msra.mxu0 0
    %397 = vmatprep.subr.bf16.mxu0 0
    %398 = vmatpush2.bf16.msra.mxu0 0
    %399 = vmatprep.subr.bf16.mxu0 0
    %400 = vmatpush2.bf16.msra.mxu0 0
    %401 = vmatprep.subr.bf16.mxu0 0
    %402 = vmatpush2.bf16.msra.mxu0 0
    %403 = vmatprep.subr.bf16.mxu0 0
    %404 = vmatpush2.bf16.msra.mxu0 0
    %405 = vmatprep.subr.bf16.mxu0 0
    %406 = vmatpush2.bf16.msra.mxu0 0
    %407 = vmatprep.subr.bf16.mxu0 0
    %408 = vmatpush2.bf16.msra.mxu0 0
    %409 = vmatprep.mubr.bf16.mxu0 0
    %410 = vmatmul.mubr.bf16.gmra.mxu0 %v298
    %v411 = vpop.f32.mrf.mxu0
    %v412 = vadd.f32 %v327, %v411
    %v413 = vpop.f32.mrf.mxu0
    %v414 = vpop.f32.mrf.mxu0
    %v415 = vadd.f32 %v327, %v414
    %v416 = vpop.f32.mrf.mxu0
    %417 = vmatprep.mubr.bf16.mxu0 0
    %418 = vmatmul.mubr.bf16.gmra.mxu0 %v299
    %v419 = vpop.f32.mrf.mxu0
    %v420 = vadd.f32 %v327, %v419
    %v421 = vpop.f32.mrf.mxu0
    %v422 = vpop.f32.mrf.mxu0
    %v423 = vadd.f32 %v327, %v422
    %v424 = vpop.f32.mrf.mxu0
    %425 = vmatprep.mubr.bf16.mxu0 0
    %426 = vmatmul.mubr.bf16.gmra.mxu0 %v300
    %v427 = vpop.f32.mrf.mxu0
    %v428 = vadd.f32 %v327, %v427
    %v429 = vpop.f32.mrf.mxu0
    %v430 = vpop.f32.mrf.mxu0
    %v431 = vadd.f32 %v327, %v430
    %v432 = vpop.f32.mrf.mxu0
    %433 = vmatprep.mubr.bf16.mxu0 0
    %434 = vmatmul.mubr.bf16.gmra.mxu0 %v301
    %v435 = vpop.f32.mrf.mxu0
    %v436 = vadd.f32 %v327, %v435
    %v437 = vpop.f32.mrf.mxu0
    %v438 = vpop.f32.mrf.mxu0
    %v439 = vadd.f32 %v327, %v438
    %v440 = vpop.f32.mrf.mxu0
    %441 = vmatprep.mubr.bf16.mxu0 0
    %442 = vmatmul.mubr.bf16.gmra.mxu0 %v302
    %v443 = vpop.f32.mrf.mxu0
    %v444 = vadd.f32 %v327, %v443
    %v445 = vpop.f32.mrf.mxu0
    %v446 = vpop.f32.mrf.mxu0
    %v447 = vadd.f32 %v327, %v446
    %v448 = vpop.f32.mrf.mxu0
    %449 = vmatprep.mubr.bf16.mxu0 0
    %450 = vmatmul.mubr.bf16.gmra.mxu0 %v303
    %v451 = vpop.f32.mrf.mxu0
    %v452 = vadd.f32 %v327, %v451
    %v453 = vpop.f32.mrf.mxu0
    %v454 = vpop.f32.mrf.mxu0
    %v455 = vadd.f32 %v327, %v454
    %v456 = vpop.f32.mrf.mxu0
    %457 = vmatprep.mubr.bf16.mxu0 0
    %458 = vmatmul.mubr.bf16.gmra.mxu0 %v304
    %v459 = vpop.f32.mrf.mxu0
    %v460 = vadd.f32 %v327, %v459
    %v461 = vpop.f32.mrf.mxu0
    %v462 = vpop.f32.mrf.mxu0
    %v463 = vadd.f32 %v327, %v462
    %v464 = vpop.f32.mrf.mxu0
    %465 = vmatprep.mubr.bf16.mxu0 0
    %466 = vmatmul.mubr.bf16.gmra.mxu0 %v305
    %v467 = vpop.f32.mrf.mxu0
    %v468 = vadd.f32 %v327, %v467
    %v469 = vpop.f32.mrf.mxu0
    %v470 = vpop.f32.mrf.mxu0
    %v471 = vadd.f32 %v327, %v470
    %v472 = vpop.f32.mrf.mxu0
    %473 = vdwg.mxu0
    %v474 = vmax.f32 %v412, 0.0
    %v475 = vmax.f32 %v415, 0.0
    %v476 = vmax.f32 %v420, 0.0
    %v477 = vmax.f32 %v423, 0.0
    %v478 = vmax.f32 %v428, 0.0
    %v479 = vmax.f32 %v431, 0.0
    %v480 = vmax.f32 %v436, 0.0
    %v481 = vmax.f32 %v439, 0.0
    %v482 = vmax.f32 %v444, 0.0
    %v483 = vmax.f32 %v447, 0.0
    %v484 = vmax.f32 %v452, 0.0
    %v485 = vmax.f32 %v455, 0.0
    %v486 = vmax.f32 %v460, 0.0
    %v487 = vmax.f32 %v463, 0.0
    %v488 = vmax.f32 %v468, 0.0
    %v489 = vmax.f32 %v471, 0.0
    %v490 = vpack.c.bf16 %v475, %v474
    %v491 = vpack.c.bf16 %v477, %v476
    %v492 = vpack.c.bf16 %v479, %v478
    %v493 = vpack.c.bf16 %v481, %v480
    %v494 = vpack.c.bf16 %v483, %v482
    %v495 = vpack.c.bf16 %v485, %v484
    %v496 = vpack.c.bf16 %v487, %v486
    %v497 = vpack.c.bf16 %v489, %v488
    %s498 = scalar_lea.vmem [#allocation6], 64
    %v499 = vld [vmem:[%s498] sm:$0xf]
    %v500 = vld [vmem:[%s498 + $0x4] sm:$0xf]
    %v501 = vld [vmem:[%s498 + $0x8] sm:$0xf]
    %v502 = vld [vmem:[%s498 + $0xc] sm:$0xf]
    %v503 = vld [vmem:[%s498 + $0x10] sm:$0xf]
    %v504 = vld [vmem:[%s498 + $0x14] sm:$0xf]
    %v505 = vld [vmem:[%s498 + $0x18] sm:$0xf]
    %v506 = vld [vmem:[%s498 + $0x1c] sm:$0xf]
    %v507 = vld [vmem:[%s498 + $0x20] sm:$0xf]
    %v508 = vld [vmem:[%s498 + $0x24] sm:$0xf]
    %v509 = vld [vmem:[%s498 + $0x28] sm:$0xf]
    %v510 = vld [vmem:[%s498 + $0x2c] sm:$0xf]
    %v511 = vld [vmem:[%s498 + $0x30] sm:$0xf]
    %v512 = vld [vmem:[%s498 + $0x34] sm:$0xf]
    %v513 = vld [vmem:[%s498 + $0x38] sm:$0xf]
    %v514 = vld [vmem:[%s498 + $0x3c] sm:$0xf]
    %v531 = vunpack.c.l.b16 %v499
    %v532 = vunpack.c.l.b16 %v500
    %v533 = vunpack.c.l.b16 %v501
    %v534 = vunpack.c.l.b16 %v502
    %v535 = vunpack.c.l.b16 %v503
    %v536 = vunpack.c.l.b16 %v504
    %v537 = vunpack.c.l.b16 %v505
    %v538 = vunpack.c.l.b16 %v506
    %v539 = vunpack.c.l.b16 %v507
    %v540 = vunpack.c.l.b16 %v508
    %v541 = vunpack.c.l.b16 %v509
    %v542 = vunpack.c.l.b16 %v510
    %v543 = vunpack.c.l.b16 %v511
    %v544 = vunpack.c.l.b16 %v512
    %v545 = vunpack.c.l.b16 %v513
    %v546 = vunpack.c.l.b16 %v514
    %v547 = vpack.c.b16 %v532, %v531
    %v548 = vpack.c.b16 %v534, %v533
    %v549 = vpack.c.b16 %v536, %v535
    %v550 = vpack.c.b16 %v538, %v537
    %v551 = vpack.c.b16 %v540, %v539
    %v552 = vpack.c.b16 %v542, %v541
    %v553 = vpack.c.b16 %v544, %v543
    %v554 = vpack.c.b16 %v546, %v545
    %563 = vmatprep.subr.bf16.mxu0 0
    %564 = vmatpush1.bf16.msra.mxu0 %v554
    %565 = vmatprep.subr.bf16.mxu0 0
    %566 = vmatpush1.bf16.msra.mxu0 %v553
    %567 = vmatprep.subr.bf16.mxu0 0
    %568 = vmatpush1.bf16.msra.mxu0 %v552
    %569 = vmatprep.subr.bf16.mxu0 0
    %570 = vmatpush1.bf16.msra.mxu0 %v551
    %571 = vmatprep.subr.bf16.mxu0 0
    %572 = vmatpush1.bf16.msra.mxu0 %v550
    %573 = vmatprep.subr.bf16.mxu0 0
    %574 = vmatpush1.bf16.msra.mxu0 %v549
    %575 = vmatprep.subr.bf16.mxu0 0
    %576 = vmatpush1.bf16.msra.mxu0 %v548
    %577 = vmatprep.subr.bf16.mxu0 0
    %578 = vmatpush1.bf16.msra.mxu0 %v547
    %579 = vmatprep.subr.bf16.mxu0 0
    %580 = vmatpush2.bf16.msra.mxu0 0
    %581 = vmatprep.subr.bf16.mxu0 0
    %582 = vmatpush2.bf16.msra.mxu0 0
    %583 = vmatprep.subr.bf16.mxu0 0
    %584 = vmatpush2.bf16.msra.mxu0 0
    %585 = vmatprep.subr.bf16.mxu0 0
    %586 = vmatpush2.bf16.msra.mxu0 0
    %587 = vmatprep.subr.bf16.mxu0 0
    %588 = vmatpush2.bf16.msra.mxu0 0
    %589 = vmatprep.subr.bf16.mxu0 0
    %590 = vmatpush2.bf16.msra.mxu0 0
    %591 = vmatprep.subr.bf16.mxu0 0
    %592 = vmatpush2.bf16.msra.mxu0 0
    %593 = vmatprep.subr.bf16.mxu0 0
    %594 = vmatpush2.bf16.msra.mxu0 0
    %595 = vmatprep.mubr.bf16.mxu0 0
    %596 = vmatmul.mubr.bf16.gmra.mxu0 %v490
    %v597 = vpop.f32.mrf.mxu0
    %v598 = vadd.f32 0.0, %v597
    %v599 = vpop.f32.mrf.mxu0
    %v600 = vpop.f32.mrf.mxu0
    %v601 = vadd.f32 0.0, %v600
    %v602 = vpop.f32.mrf.mxu0
    %603 = vmatprep.mubr.bf16.mxu0 0
    %604 = vmatmul.mubr.bf16.gmra.mxu0 %v491
    %v605 = vpop.f32.mrf.mxu0
    %v606 = vadd.f32 0.0, %v605
    %v607 = vpop.f32.mrf.mxu0
    %v608 = vpop.f32.mrf.mxu0
    %v609 = vadd.f32 0.0, %v608
    %v610 = vpop.f32.mrf.mxu0
    %611 = vmatprep.mubr.bf16.mxu0 0
    %612 = vmatmul.mubr.bf16.gmra.mxu0 %v492
    %v613 = vpop.f32.mrf.mxu0
    %v614 = vadd.f32 0.0, %v613
    %v615 = vpop.f32.mrf.mxu0
    %v616 = vpop.f32.mrf.mxu0
    %v617 = vadd.f32 0.0, %v616
    %v618 = vpop.f32.mrf.mxu0
    %619 = vmatprep.mubr.bf16.mxu0 0
    %620 = vmatmul.mubr.bf16.gmra.mxu0 %v493
    %v621 = vpop.f32.mrf.mxu0
    %v622 = vadd.f32 0.0, %v621
    %v623 = vpop.f32.mrf.mxu0
    %v624 = vpop.f32.mrf.mxu0
    %v625 = vadd.f32 0.0, %v624
    %v626 = vpop.f32.mrf.mxu0
    %627 = vmatprep.mubr.bf16.mxu0 0
    %628 = vmatmul.mubr.bf16.gmra.mxu0 %v494
    %v629 = vpop.f32.mrf.mxu0
    %v630 = vadd.f32 0.0, %v629
    %v631 = vpop.f32.mrf.mxu0
    %v632 = vpop.f32.mrf.mxu0
    %v633 = vadd.f32 0.0, %v632
    %v634 = vpop.f32.mrf.mxu0
    %635 = vmatprep.mubr.bf16.mxu0 0
    %636 = vmatmul.mubr.bf16.gmra.mxu0 %v495
    %v637 = vpop.f32.mrf.mxu0
    %v638 = vadd.f32 0.0, %v637
    %v639 = vpop.f32.mrf.mxu0
    %v640 = vpop.f32.mrf.mxu0
    %v641 = vadd.f32 0.0, %v640
    %v642 = vpop.f32.mrf.mxu0
    %643 = vmatprep.mubr.bf16.mxu0 0
    %644 = vmatmul.mubr.bf16.gmra.mxu0 %v496
    %v645 = vpop.f32.mrf.mxu0
    %v646 = vadd.f32 0.0, %v645
    %v647 = vpop.f32.mrf.mxu0
    %v648 = vpop.f32.mrf.mxu0
    %v649 = vadd.f32 0.0, %v648
    %v650 = vpop.f32.mrf.mxu0
    %651 = vmatprep.mubr.bf16.mxu0 0
    %652 = vmatmul.mubr.bf16.gmra.mxu0 %v497
    %v653 = vpop.f32.mrf.mxu0
    %v654 = vadd.f32 0.0, %v653
    %v655 = vpop.f32.mrf.mxu0
    %v656 = vpop.f32.mrf.mxu0
    %v657 = vadd.f32 0.0, %v656
    %v658 = vpop.f32.mrf.mxu0
    %659 = vdwg.mxu0
    %v660 = vpack.c.bf16 %v601, %v598
    %v661 = vpack.c.bf16 %v609, %v606
    %v662 = vpack.c.bf16 %v617, %v614
    %v663 = vpack.c.bf16 %v625, %v622
    %v664 = vpack.c.bf16 %v633, %v630
    %v665 = vpack.c.bf16 %v641, %v638
    %v666 = vpack.c.bf16 %v649, %v646
    %v667 = vpack.c.bf16 %v657, %v654
    %s668 = scalar_lea.vmem [#allocation7], 1
    %v669 = vld [vmem:[%s668] sm:$0x1]
    %v671 = vlaneseq
    %v672 = vshrl.u32 %v671, 7
    %v673 = vsub.s32 0, %v672
    %v674 = vrot.slane %v669, %v673
    %676 = vmatprep.subr.bf16.mxu0 0
    %677 = vmatpush1.bf16.msra.mxu0 %v667
    %678 = vmatprep.subr.bf16.mxu0 0
    %679 = vmatpush1.bf16.msra.mxu0 %v666
    %680 = vmatprep.subr.bf16.mxu0 0
    %681 = vmatpush1.bf16.msra.mxu0 %v665
    %682 = vmatprep.subr.bf16.mxu0 0
    %683 = vmatpush1.bf16.msra.mxu0 %v664
    %684 = vmatprep.subr.bf16.mxu0 0
    %685 = vmatpush1.bf16.msra.mxu0 %v663
    %686 = vmatprep.subr.bf16.mxu0 0
    %687 = vmatpush1.bf16.msra.mxu0 %v662
    %688 = vmatprep.subr.bf16.mxu0 0
    %689 = vmatpush1.bf16.msra.mxu0 %v661
    %690 = vmatprep.subr.bf16.mxu0 0
    %691 = vmatpush1.bf16.msra.mxu0 %v660
    %692 = vmatprep.subr.bf16.mxu0 0
    %693 = vmatpush2.bf16.msra.mxu0 0
    %694 = vmatprep.subr.bf16.mxu0 0
    %695 = vmatpush2.bf16.msra.mxu0 0
    %696 = vmatprep.subr.bf16.mxu0 0
    %697 = vmatpush2.bf16.msra.mxu0 0
    %698 = vmatprep.subr.bf16.mxu0 0
    %699 = vmatpush2.bf16.msra.mxu0 0
    %700 = vmatprep.subr.bf16.mxu0 0
    %701 = vmatpush2.bf16.msra.mxu0 0
    %702 = vmatprep.subr.bf16.mxu0 0
    %703 = vmatpush2.bf16.msra.mxu0 0
    %704 = vmatprep.subr.bf16.mxu0 0
    %705 = vmatpush2.bf16.msra.mxu0 0
    %706 = vmatprep.subr.bf16.mxu0 0
    %707 = vmatpush2.bf16.msra.mxu0 0
    %708 = vmatprep.mubr.bf16.mxu0 0
    %709 = vmatmul.mubr.bf16.gmra.mxu0 %v137
    %v710 = vpop.f32.mrf.mxu0
    %v711 = vadd.f32 %v674, %v710
    %v712 = vpop.f32.mrf.mxu0
    %v713 = vpop.f32.mrf.mxu0
    %v714 = vadd.f32 %v674, %v713
    %v715 = vpop.f32.mrf.mxu0
    %716 = vmatprep.mubr.bf16.mxu0 0
    %717 = vmatmul.mubr.bf16.gmra.mxu0 %v138
    %v718 = vpop.f32.mrf.mxu0
    %v719 = vadd.f32 %v674, %v718
    %v720 = vpop.f32.mrf.mxu0
    %v721 = vpop.f32.mrf.mxu0
    %v722 = vadd.f32 %v674, %v721
    %v723 = vpop.f32.mrf.mxu0
    %724 = vmatprep.mubr.bf16.mxu0 0
    %725 = vmatmul.mubr.bf16.gmra.mxu0 %v139
    %v726 = vpop.f32.mrf.mxu0
    %v727 = vadd.f32 %v674, %v726
    %v728 = vpop.f32.mrf.mxu0
    %v729 = vpop.f32.mrf.mxu0
    %v730 = vadd.f32 %v674, %v729
    %v731 = vpop.f32.mrf.mxu0
    %732 = vmatprep.mubr.bf16.mxu0 0
    %733 = vmatmul.mubr.bf16.gmra.mxu0 %v140
    %v734 = vpop.f32.mrf.mxu0
    %v735 = vadd.f32 %v674, %v734
    %v736 = vpop.f32.mrf.mxu0
    %v737 = vpop.f32.mrf.mxu0
    %v738 = vadd.f32 %v674, %v737
    %v739 = vpop.f32.mrf.mxu0
    %740 = vmatprep.mubr.bf16.mxu0 0
    %741 = vmatmul.mubr.bf16.gmra.mxu0 %v141
    %v742 = vpop.f32.mrf.mxu0
    %v743 = vadd.f32 %v674, %v742
    %v744 = vpop.f32.mrf.mxu0
    %v745 = vpop.f32.mrf.mxu0
    %v746 = vadd.f32 %v674, %v745
    %v747 = vpop.f32.mrf.mxu0
    %748 = vmatprep.mubr.bf16.mxu0 0
    %749 = vmatmul.mubr.bf16.gmra.mxu0 %v142
    %v750 = vpop.f32.mrf.mxu0
    %v751 = vadd.f32 %v674, %v750
    %v752 = vpop.f32.mrf.mxu0
    %v753 = vpop.f32.mrf.mxu0
    %v754 = vadd.f32 %v674, %v753
    %v755 = vpop.f32.mrf.mxu0
    %756 = vmatprep.mubr.bf16.mxu0 0
    %757 = vmatmul.mubr.bf16.gmra.mxu0 %v143
    %v758 = vpop.f32.mrf.mxu0
    %v759 = vadd.f32 %v674, %v758
    %v760 = vpop.f32.mrf.mxu0
    %v761 = vpop.f32.mrf.mxu0
    %v762 = vadd.f32 %v674, %v761
    %v763 = vpop.f32.mrf.mxu0
    %764 = vmatprep.mubr.bf16.mxu0 0
    %765 = vmatmul.mubr.bf16.gmra.mxu0 %v144
    %v766 = vpop.f32.mrf.mxu0
    %v767 = vadd.f32 %v674, %v766
    %v768 = vpop.f32.mrf.mxu0
    %v769 = vpop.f32.mrf.mxu0
    %v770 = vadd.f32 %v674, %v769
    %v771 = vpop.f32.mrf.mxu0
    %772 = vdwg.mxu0
    %v773 = vmax.f32 %v711, 0.0
    %v774 = vmax.f32 %v714, 0.0
    %v775 = vmax.f32 %v719, 0.0
    %v776 = vmax.f32 %v722, 0.0
    %v777 = vmax.f32 %v727, 0.0
    %v778 = vmax.f32 %v730, 0.0
    %v779 = vmax.f32 %v735, 0.0
    %v780 = vmax.f32 %v738, 0.0
    %v781 = vmax.f32 %v743, 0.0
    %v782 = vmax.f32 %v746, 0.0
    %v783 = vmax.f32 %v751, 0.0
    %v784 = vmax.f32 %v754, 0.0
    %v785 = vmax.f32 %v759, 0.0
    %v786 = vmax.f32 %v762, 0.0
    %v787 = vmax.f32 %v767, 0.0
    %v788 = vmax.f32 %v770, 0.0
    %v789 = vadd.f32 %v773, %v474
    %v790 = vadd.f32 %v774, %v475
    %v791 = vadd.f32 %v775, %v476
    %v792 = vadd.f32 %v776, %v477
    %v793 = vadd.f32 %v777, %v478
    %v794 = vadd.f32 %v778, %v479
    %v795 = vadd.f32 %v779, %v480
    %v796 = vadd.f32 %v780, %v481
    %v797 = vadd.f32 %v781, %v482
    %v798 = vadd.f32 %v782, %v483
    %v799 = vadd.f32 %v783, %v484
    %v800 = vadd.f32 %v784, %v485
    %v801 = vadd.f32 %v785, %v486
    %v802 = vadd.f32 %v786, %v487
    %v803 = vadd.f32 %v787, %v488
    %v804 = vadd.f32 %v788, %v489
    %v805 = vpack.c.bf16 %v790, %v789
    %v806 = vpack.c.bf16 %v792, %v791
    %v807 = vpack.c.bf16 %v794, %v793
    %v808 = vpack.c.bf16 %v796, %v795
    %v809 = vpack.c.bf16 %v798, %v797
    %v810 = vpack.c.bf16 %v800, %v799
    %v811 = vpack.c.bf16 %v802, %v801
    %v812 = vpack.c.bf16 %v804, %v803
    %s813 = scalar_lea.vmem [#allocation6], 128
    %v814 = vld [vmem:[%s813] sm:$0xf]
    %v815 = vld [vmem:[%s813 + $0x4] sm:$0xf]
    %v816 = vld [vmem:[%s813 + $0x8] sm:$0xf]
    %v817 = vld [vmem:[%s813 + $0xc] sm:$0xf]
    %v818 = vld [vmem:[%s813 + $0x10] sm:$0xf]
    %v819 = vld [vmem:[%s813 + $0x14] sm:$0xf]
    %v820 = vld [vmem:[%s813 + $0x18] sm:$0xf]
    %v821 = vld [vmem:[%s813 + $0x1c] sm:$0xf]
    %v822 = vld [vmem:[%s813 + $0x20] sm:$0xf]
    %v823 = vld [vmem:[%s813 + $0x24] sm:$0xf]
    %v824 = vld [vmem:[%s813 + $0x28] sm:$0xf]
    %v825 = vld [vmem:[%s813 + $0x2c] sm:$0xf]
    %v826 = vld [vmem:[%s813 + $0x30] sm:$0xf]
    %v827 = vld [vmem:[%s813 + $0x34] sm:$0xf]
    %v828 = vld [vmem:[%s813 + $0x38] sm:$0xf]
    %v829 = vld [vmem:[%s813 + $0x3c] sm:$0xf]
    %v846 = vunpack.c.l.b16 %v814
    %v847 = vunpack.c.l.b16 %v815
    %v848 = vunpack.c.l.b16 %v816
    %v849 = vunpack.c.l.b16 %v817
    %v850 = vunpack.c.l.b16 %v818
    %v851 = vunpack.c.l.b16 %v819
    %v852 = vunpack.c.l.b16 %v820
    %v853 = vunpack.c.l.b16 %v821
    %v854 = vunpack.c.l.b16 %v822
    %v855 = vunpack.c.l.b16 %v823
    %v856 = vunpack.c.l.b16 %v824
    %v857 = vunpack.c.l.b16 %v825
    %v858 = vunpack.c.l.b16 %v826
    %v859 = vunpack.c.l.b16 %v827
    %v860 = vunpack.c.l.b16 %v828
    %v861 = vunpack.c.l.b16 %v829
    %v862 = vpack.c.b16 %v847, %v846
    %v863 = vpack.c.b16 %v849, %v848
    %v864 = vpack.c.b16 %v851, %v850
    %v865 = vpack.c.b16 %v853, %v852
    %v866 = vpack.c.b16 %v855, %v854
    %v867 = vpack.c.b16 %v857, %v856
    %v868 = vpack.c.b16 %v859, %v858
    %v869 = vpack.c.b16 %v861, %v860
    %878 = vmatprep.subr.bf16.mxu0 0
    %879 = vmatpush1.bf16.msra.mxu0 %v869
    %880 = vmatprep.subr.bf16.mxu0 0
    %881 = vmatpush1.bf16.msra.mxu0 %v868
    %882 = vmatprep.subr.bf16.mxu0 0
    %883 = vmatpush1.bf16.msra.mxu0 %v867
    %884 = vmatprep.subr.bf16.mxu0 0
    %885 = vmatpush1.bf16.msra.mxu0 %v866
    %886 = vmatprep.subr.bf16.mxu0 0
    %887 = vmatpush1.bf16.msra.mxu0 %v865
    %888 = vmatprep.subr.bf16.mxu0 0
    %889 = vmatpush1.bf16.msra.mxu0 %v864
    %890 = vmatprep.subr.bf16.mxu0 0
    %891 = vmatpush1.bf16.msra.mxu0 %v863
    %892 = vmatprep.subr.bf16.mxu0 0
    %893 = vmatpush1.bf16.msra.mxu0 %v862
    %894 = vmatprep.subr.bf16.mxu0 0
    %895 = vmatpush2.bf16.msra.mxu0 0
    %896 = vmatprep.subr.bf16.mxu0 0
    %897 = vmatpush2.bf16.msra.mxu0 0
    %898 = vmatprep.subr.bf16.mxu0 0
    %899 = vmatpush2.bf16.msra.mxu0 0
    %900 = vmatprep.subr.bf16.mxu0 0
    %901 = vmatpush2.bf16.msra.mxu0 0
    %902 = vmatprep.subr.bf16.mxu0 0
    %903 = vmatpush2.bf16.msra.mxu0 0
    %904 = vmatprep.subr.bf16.mxu0 0
    %905 = vmatpush2.bf16.msra.mxu0 0
    %906 = vmatprep.subr.bf16.mxu0 0
    %907 = vmatpush2.bf16.msra.mxu0 0
    %908 = vmatprep.subr.bf16.mxu0 0
    %909 = vmatpush2.bf16.msra.mxu0 0
    %910 = vmatprep.mubr.bf16.mxu0 0
    %911 = vmatmul.mubr.bf16.gmra.mxu0 %v805
    %v912 = vpop.f32.mrf.mxu0
    %v913 = vadd.f32 0.0, %v912
    %v914 = vpop.f32.mrf.mxu0
    %v915 = vpop.f32.mrf.mxu0
    %v916 = vadd.f32 0.0, %v915
    %v917 = vpop.f32.mrf.mxu0
    %918 = vmatprep.mubr.bf16.mxu0 0
    %919 = vmatmul.mubr.bf16.gmra.mxu0 %v806
    %v920 = vpop.f32.mrf.mxu0
    %v921 = vadd.f32 0.0, %v920
    %v922 = vpop.f32.mrf.mxu0
    %v923 = vpop.f32.mrf.mxu0
    %v924 = vadd.f32 0.0, %v923
    %v925 = vpop.f32.mrf.mxu0
    %926 = vmatprep.mubr.bf16.mxu0 0
    %927 = vmatmul.mubr.bf16.gmra.mxu0 %v807
    %v928 = vpop.f32.mrf.mxu0
    %v929 = vadd.f32 0.0, %v928
    %v930 = vpop.f32.mrf.mxu0
    %v931 = vpop.f32.mrf.mxu0
    %v932 = vadd.f32 0.0, %v931
    %v933 = vpop.f32.mrf.mxu0
    %934 = vmatprep.mubr.bf16.mxu0 0
    %935 = vmatmul.mubr.bf16.gmra.mxu0 %v808
    %v936 = vpop.f32.mrf.mxu0
    %v937 = vadd.f32 0.0, %v936
    %v938 = vpop.f32.mrf.mxu0
    %v939 = vpop.f32.mrf.mxu0
    %v940 = vadd.f32 0.0, %v939
    %v941 = vpop.f32.mrf.mxu0
    %942 = vmatprep.mubr.bf16.mxu0 0
    %943 = vmatmul.mubr.bf16.gmra.mxu0 %v809
    %v944 = vpop.f32.mrf.mxu0
    %v945 = vadd.f32 0.0, %v944
    %v946 = vpop.f32.mrf.mxu0
    %v947 = vpop.f32.mrf.mxu0
    %v948 = vadd.f32 0.0, %v947
    %v949 = vpop.f32.mrf.mxu0
    %950 = vmatprep.mubr.bf16.mxu0 0
    %951 = vmatmul.mubr.bf16.gmra.mxu0 %v810
    %v952 = vpop.f32.mrf.mxu0
    %v953 = vadd.f32 0.0, %v952
    %v954 = vpop.f32.mrf.mxu0
    %v955 = vpop.f32.mrf.mxu0
    %v956 = vadd.f32 0.0, %v955
    %v957 = vpop.f32.mrf.mxu0
    %958 = vmatprep.mubr.bf16.mxu0 0
    %959 = vmatmul.mubr.bf16.gmra.mxu0 %v811
    %v960 = vpop.f32.mrf.mxu0
    %v961 = vadd.f32 0.0, %v960
    %v962 = vpop.f32.mrf.mxu0
    %v963 = vpop.f32.mrf.mxu0
    %v964 = vadd.f32 0.0, %v963
    %v965 = vpop.f32.mrf.mxu0
    %966 = vmatprep.mubr.bf16.mxu0 0
    %967 = vmatmul.mubr.bf16.gmra.mxu0 %v812
    %v968 = vpop.f32.mrf.mxu0
    %v969 = vadd.f32 0.0, %v968
    %v970 = vpop.f32.mrf.mxu0
    %v971 = vpop.f32.mrf.mxu0
    %v972 = vadd.f32 0.0, %v971
    %v973 = vpop.f32.mrf.mxu0
    %974 = vdwg.mxu0
    %v975 = vpack.c.bf16 %v916, %v913
    %v976 = vpack.c.bf16 %v924, %v921
    %v977 = vpack.c.bf16 %v932, %v929
    %v978 = vpack.c.bf16 %v940, %v937
    %v979 = vpack.c.bf16 %v948, %v945
    %v980 = vpack.c.bf16 %v956, %v953
    %v981 = vpack.c.bf16 %v964, %v961
    %v982 = vpack.c.bf16 %v972, %v969
    %s983 = scalar_lea.vmem [#allocation7], 2
    %v984 = vld [vmem:[%s983] sm:$0x1]
    %v986 = vlaneseq
    %v987 = vshrl.u32 %v986, 7
    %v988 = vsub.s32 0, %v987
    %v989 = vrot.slane %v984, %v988
    %991 = vmatprep.subr.bf16.mxu0 0
    %992 = vmatpush1.bf16.msra.mxu0 %v982
    %993 = vmatprep.subr.bf16.mxu0 0
    %994 = vmatpush1.bf16.msra.mxu0 %v981
    %995 = vmatprep.subr.bf16.mxu0 0
    %996 = vmatpush1.bf16.msra.mxu0 %v980
    %997 = vmatprep.subr.bf16.mxu0 0
    %998 = vmatpush1.bf16.msra.mxu0 %v979
    %999 = vmatprep.subr.bf16.mxu0 0
    %1000 = vmatpush1.bf16.msra.mxu0 %v978
    %1001 = vmatprep.subr.bf16.mxu0 0
    %1002 = vmatpush1.bf16.msra.mxu0 %v977
    %1003 = vmatprep.subr.bf16.mxu0 0
    %1004 = vmatpush1.bf16.msra.mxu0 %v976
    %1005 = vmatprep.subr.bf16.mxu0 0
    %1006 = vmatpush1.bf16.msra.mxu0 %v975
    %1007 = vmatprep.subr.bf16.mxu0 0
    %1008 = vmatpush2.bf16.msra.mxu0 0
    %1009 = vmatprep.subr.bf16.mxu0 0
    %1010 = vmatpush2.bf16.msra.mxu0 0
    %1011 = vmatprep.subr.bf16.mxu0 0
    %1012 = vmatpush2.bf16.msra.mxu0 0
    %1013 = vmatprep.subr.bf16.mxu0 0
    %1014 = vmatpush2.bf16.msra.mxu0 0
    %1015 = vmatprep.subr.bf16.mxu0 0
    %1016 = vmatpush2.bf16.msra.mxu0 0
    %1017 = vmatprep.subr.bf16.mxu0 0
    %1018 = vmatpush2.bf16.msra.mxu0 0
    %1019 = vmatprep.subr.bf16.mxu0 0
    %1020 = vmatpush2.bf16.msra.mxu0 0
    %1021 = vmatprep.subr.bf16.mxu0 0
    %1022 = vmatpush2.bf16.msra.mxu0 0
    %1023 = vmatprep.mubr.bf16.mxu0 0
    %1024 = vmatmul.mubr.bf16.gmra.mxu0 %v137
    %v1025 = vpop.f32.mrf.mxu0
    %v1026 = vadd.f32 %v989, %v1025
    %v1027 = vpop.f32.mrf.mxu0
    %v1028 = vpop.f32.mrf.mxu0
    %v1029 = vadd.f32 %v989, %v1028
    %v1030 = vpop.f32.mrf.mxu0
    %1031 = vmatprep.mubr.bf16.mxu0 0
    %1032 = vmatmul.mubr.bf16.gmra.mxu0 %v138
    %v1033 = vpop.f32.mrf.mxu0
    %v1034 = vadd.f32 %v989, %v1033
    %v1035 = vpop.f32.mrf.mxu0
    %v1036 = vpop.f32.mrf.mxu0
    %v1037 = vadd.f32 %v989, %v1036
    %v1038 = vpop.f32.mrf.mxu0
    %1039 = vmatprep.mubr.bf16.mxu0 0
    %1040 = vmatmul.mubr.bf16.gmra.mxu0 %v139
    %v1041 = vpop.f32.mrf.mxu0
    %v1042 = vadd.f32 %v989, %v1041
    %v1043 = vpop.f32.mrf.mxu0
    %v1044 = vpop.f32.mrf.mxu0
    %v1045 = vadd.f32 %v989, %v1044
    %v1046 = vpop.f32.mrf.mxu0
    %1047 = vmatprep.mubr.bf16.mxu0 0
    %1048 = vmatmul.mubr.bf16.gmra.mxu0 %v140
    %v1049 = vpop.f32.mrf.mxu0
    %v1050 = vadd.f32 %v989, %v1049
    %v1051 = vpop.f32.mrf.mxu0
    %v1052 = vpop.f32.mrf.mxu0
    %v1053 = vadd.f32 %v989, %v1052
    %v1054 = vpop.f32.mrf.mxu0
    %1055 = vmatprep.mubr.bf16.mxu0 0
    %1056 = vmatmul.mubr.bf16.gmra.mxu0 %v141
    %v1057 = vpop.f32.mrf.mxu0
    %v1058 = vadd.f32 %v989, %v1057
    %v1059 = vpop.f32.mrf.mxu0
    %v1060 = vpop.f32.mrf.mxu0
    %v1061 = vadd.f32 %v989, %v1060
    %v1062 = vpop.f32.mrf.mxu0
    %1063 = vmatprep.mubr.bf16.mxu0 0
    %1064 = vmatmul.mubr.bf16.gmra.mxu0 %v142
    %v1065 = vpop.f32.mrf.mxu0
    %v1066 = vadd.f32 %v989, %v1065
    %v1067 = vpop.f32.mrf.mxu0
    %v1068 = vpop.f32.mrf.mxu0
    %v1069 = vadd.f32 %v989, %v1068
    %v1070 = vpop.f32.mrf.mxu0
    %1071 = vmatprep.mubr.bf16.mxu0 0
    %1072 = vmatmul.mubr.bf16.gmra.mxu0 %v143
    %v1073 = vpop.f32.mrf.mxu0
    %v1074 = vadd.f32 %v989, %v1073
    %v1075 = vpop.f32.mrf.mxu0
    %v1076 = vpop.f32.mrf.mxu0
    %v1077 = vadd.f32 %v989, %v1076
    %v1078 = vpop.f32.mrf.mxu0
    %1079 = vmatprep.mubr.bf16.mxu0 0
    %1080 = vmatmul.mubr.bf16.gmra.mxu0 %v144
    %v1081 = vpop.f32.mrf.mxu0
    %v1082 = vadd.f32 %v989, %v1081
    %v1083 = vpop.f32.mrf.mxu0
    %v1084 = vpop.f32.mrf.mxu0
    %v1085 = vadd.f32 %v989, %v1084
    %v1086 = vpop.f32.mrf.mxu0
    %1087 = vdwg.mxu0
    %v1088 = vmax.f32 %v1026, 0.0
    %v1089 = vmax.f32 %v1029, 0.0
    %v1090 = vmax.f32 %v1034, 0.0
    %v1091 = vmax.f32 %v1037, 0.0
    %v1092 = vmax.f32 %v1042, 0.0
    %v1093 = vmax.f32 %v1045, 0.0
    %v1094 = vmax.f32 %v1050, 0.0
    %v1095 = vmax.f32 %v1053, 0.0
    %v1096 = vmax.f32 %v1058, 0.0
    %v1097 = vmax.f32 %v1061, 0.0
    %v1098 = vmax.f32 %v1066, 0.0
    %v1099 = vmax.f32 %v1069, 0.0
    %v1100 = vmax.f32 %v1074, 0.0
    %v1101 = vmax.f32 %v1077, 0.0
    %v1102 = vmax.f32 %v1082, 0.0
    %v1103 = vmax.f32 %v1085, 0.0
    %v1104 = vadd.f32 %v1088, %v789
    %v1105 = vadd.f32 %v1089, %v790
    %v1106 = vadd.f32 %v1090, %v791
    %v1107 = vadd.f32 %v1091, %v792
    %v1108 = vadd.f32 %v1092, %v793
    %v1109 = vadd.f32 %v1093, %v794
    %v1110 = vadd.f32 %v1094, %v795
    %v1111 = vadd.f32 %v1095, %v796
    %v1112 = vadd.f32 %v1096, %v797
    %v1113 = vadd.f32 %v1097, %v798
    %v1114 = vadd.f32 %v1098, %v799
    %v1115 = vadd.f32 %v1099, %v800
    %v1116 = vadd.f32 %v1100, %v801
    %v1117 = vadd.f32 %v1101, %v802
    %v1118 = vadd.f32 %v1102, %v803
    %v1119 = vadd.f32 %v1103, %v804
    %v1120 = vpack.c.bf16 %v1105, %v1104
    %v1121 = vpack.c.bf16 %v1107, %v1106
    %v1122 = vpack.c.bf16 %v1109, %v1108
    %v1123 = vpack.c.bf16 %v1111, %v1110
    %v1124 = vpack.c.bf16 %v1113, %v1112
    %v1125 = vpack.c.bf16 %v1115, %v1114
    %v1126 = vpack.c.bf16 %v1117, %v1116
    %v1127 = vpack.c.bf16 %v1119, %v1118
    %s1128 = scalar_lea.vmem [#allocation6], 192
    %v1129 = vld [vmem:[%s1128] sm:$0xf]
    %v1130 = vld [vmem:[%s1128 + $0x4] sm:$0xf]
    %v1131 = vld [vmem:[%s1128 + $0x8] sm:$0xf]
    %v1132 = vld [vmem:[%s1128 + $0xc] sm:$0xf]
    %v1133 = vld [vmem:[%s1128 + $0x10] sm:$0xf]
    %v1134 = vld [vmem:[%s1128 + $0x14] sm:$0xf]
    %v1135 = vld [vmem:[%s1128 + $0x18] sm:$0xf]
    %v1136 = vld [vmem:[%s1128 + $0x1c] sm:$0xf]
    %v1137 = vld [vmem:[%s1128 + $0x20] sm:$0xf]
    %v1138 = vld [vmem:[%s1128 + $0x24] sm:$0xf]
    %v1139 = vld [vmem:[%s1128 + $0x28] sm:$0xf]
    %v1140 = vld [vmem:[%s1128 + $0x2c] sm:$0xf]
    %v1141 = vld [vmem:[%s1128 + $0x30] sm:$0xf]
    %v1142 = vld [vmem:[%s1128 + $0x34] sm:$0xf]
    %v1143 = vld [vmem:[%s1128 + $0x38] sm:$0xf]
    %v1144 = vld [vmem:[%s1128 + $0x3c] sm:$0xf]
    %v1161 = vunpack.c.l.b16 %v1129
    %v1162 = vunpack.c.l.b16 %v1130
    %v1163 = vunpack.c.l.b16 %v1131
    %v1164 = vunpack.c.l.b16 %v1132
    %v1165 = vunpack.c.l.b16 %v1133
    %v1166 = vunpack.c.l.b16 %v1134
    %v1167 = vunpack.c.l.b16 %v1135
    %v1168 = vunpack.c.l.b16 %v1136
    %v1169 = vunpack.c.l.b16 %v1137
    %v1170 = vunpack.c.l.b16 %v1138
    %v1171 = vunpack.c.l.b16 %v1139
    %v1172 = vunpack.c.l.b16 %v1140
    %v1173 = vunpack.c.l.b16 %v1141
    %v1174 = vunpack.c.l.b16 %v1142
    %v1175 = vunpack.c.l.b16 %v1143
    %v1176 = vunpack.c.l.b16 %v1144
    %v1177 = vpack.c.b16 %v1162, %v1161
    %v1178 = vpack.c.b16 %v1164, %v1163
    %v1179 = vpack.c.b16 %v1166, %v1165
    %v1180 = vpack.c.b16 %v1168, %v1167
    %v1181 = vpack.c.b16 %v1170, %v1169
    %v1182 = vpack.c.b16 %v1172, %v1171
    %v1183 = vpack.c.b16 %v1174, %v1173
    %v1184 = vpack.c.b16 %v1176, %v1175
    %1193 = vmatprep.subr.bf16.mxu0 0
    %1194 = vmatpush1.bf16.msra.mxu0 %v1184
    %1195 = vmatprep.subr.bf16.mxu0 0
    %1196 = vmatpush1.bf16.msra.mxu0 %v1183
    %1197 = vmatprep.subr.bf16.mxu0 0
    %1198 = vmatpush1.bf16.msra.mxu0 %v1182
    %1199 = vmatprep.subr.bf16.mxu0 0
    %1200 = vmatpush1.bf16.msra.mxu0 %v1181
    %1201 = vmatprep.subr.bf16.mxu0 0
    %1202 = vmatpush1.bf16.msra.mxu0 %v1180
    %1203 = vmatprep.subr.bf16.mxu0 0
    %1204 = vmatpush1.bf16.msra.mxu0 %v1179
    %1205 = vmatprep.subr.bf16.mxu0 0
    %1206 = vmatpush1.bf16.msra.mxu0 %v1178
    %1207 = vmatprep.subr.bf16.mxu0 0
    %1208 = vmatpush1.bf16.msra.mxu0 %v1177
    %1209 = vmatprep.subr.bf16.mxu0 0
    %1210 = vmatpush2.bf16.msra.mxu0 0
    %1211 = vmatprep.subr.bf16.mxu0 0
    %1212 = vmatpush2.bf16.msra.mxu0 0
    %1213 = vmatprep.subr.bf16.mxu0 0
    %1214 = vmatpush2.bf16.msra.mxu0 0
    %1215 = vmatprep.subr.bf16.mxu0 0
    %1216 = vmatpush2.bf16.msra.mxu0 0
    %1217 = vmatprep.subr.bf16.mxu0 0
    %1218 = vmatpush2.bf16.msra.mxu0 0
    %1219 = vmatprep.subr.bf16.mxu0 0
    %1220 = vmatpush2.bf16.msra.mxu0 0
    %1221 = vmatprep.subr.bf16.mxu0 0
    %1222 = vmatpush2.bf16.msra.mxu0 0
    %1223 = vmatprep.subr.bf16.mxu0 0
    %1224 = vmatpush2.bf16.msra.mxu0 0
    %1225 = vmatprep.mubr.bf16.mxu0 0
    %1226 = vmatmul.mubr.bf16.gmra.mxu0 %v1120
    %v1227 = vpop.f32.mrf.mxu0
    %v1228 = vadd.f32 0.0, %v1227
    %v1229 = vpop.f32.mrf.mxu0
    %v1230 = vpop.f32.mrf.mxu0
    %v1231 = vadd.f32 0.0, %v1230
    %v1232 = vpop.f32.mrf.mxu0
    %1233 = vmatprep.mubr.bf16.mxu0 0
    %1234 = vmatmul.mubr.bf16.gmra.mxu0 %v1121
    %v1235 = vpop.f32.mrf.mxu0
    %v1236 = vadd.f32 0.0, %v1235
    %v1237 = vpop.f32.mrf.mxu0
    %v1238 = vpop.f32.mrf.mxu0
    %v1239 = vadd.f32 0.0, %v1238
    %v1240 = vpop.f32.mrf.mxu0
    %1241 = vmatprep.mubr.bf16.mxu0 0
    %1242 = vmatmul.mubr.bf16.gmra.mxu0 %v1122
    %v1243 = vpop.f32.mrf.mxu0
    %v1244 = vadd.f32 0.0, %v1243
    %v1245 = vpop.f32.mrf.mxu0
    %v1246 = vpop.f32.mrf.mxu0
    %v1247 = vadd.f32 0.0, %v1246
    %v1248 = vpop.f32.mrf.mxu0
    %1249 = vmatprep.mubr.bf16.mxu0 0
    %1250 = vmatmul.mubr.bf16.gmra.mxu0 %v1123
    %v1251 = vpop.f32.mrf.mxu0
    %v1252 = vadd.f32 0.0, %v1251
    %v1253 = vpop.f32.mrf.mxu0
    %v1254 = vpop.f32.mrf.mxu0
    %v1255 = vadd.f32 0.0, %v1254
    %v1256 = vpop.f32.mrf.mxu0
    %1257 = vmatprep.mubr.bf16.mxu0 0
    %1258 = vmatmul.mubr.bf16.gmra.mxu0 %v1124
    %v1259 = vpop.f32.mrf.mxu0
    %v1260 = vadd.f32 0.0, %v1259
    %v1261 = vpop.f32.mrf.mxu0
    %v1262 = vpop.f32.mrf.mxu0
    %v1263 = vadd.f32 0.0, %v1262
    %v1264 = vpop.f32.mrf.mxu0
    %1265 = vmatprep.mubr.bf16.mxu0 0
    %1266 = vmatmul.mubr.bf16.gmra.mxu0 %v1125
    %v1267 = vpop.f32.mrf.mxu0
    %v1268 = vadd.f32 0.0, %v1267
    %v1269 = vpop.f32.mrf.mxu0
    %v1270 = vpop.f32.mrf.mxu0
    %v1271 = vadd.f32 0.0, %v1270
    %v1272 = vpop.f32.mrf.mxu0
    %1273 = vmatprep.mubr.bf16.mxu0 0
    %1274 = vmatmul.mubr.bf16.gmra.mxu0 %v1126
    %v1275 = vpop.f32.mrf.mxu0
    %v1276 = vadd.f32 0.0, %v1275
    %v1277 = vpop.f32.mrf.mxu0
    %v1278 = vpop.f32.mrf.mxu0
    %v1279 = vadd.f32 0.0, %v1278
    %v1280 = vpop.f32.mrf.mxu0
    %1281 = vmatprep.mubr.bf16.mxu0 0
    %1282 = vmatmul.mubr.bf16.gmra.mxu0 %v1127
    %v1283 = vpop.f32.mrf.mxu0
    %v1284 = vadd.f32 0.0, %v1283
    %v1285 = vpop.f32.mrf.mxu0
    %v1286 = vpop.f32.mrf.mxu0
    %v1287 = vadd.f32 0.0, %v1286
    %v1288 = vpop.f32.mrf.mxu0
    %1289 = vdwg.mxu0
    %v1290 = vpack.c.bf16 %v1231, %v1228
    %v1291 = vpack.c.bf16 %v1239, %v1236
    %v1292 = vpack.c.bf16 %v1247, %v1244
    %v1293 = vpack.c.bf16 %v1255, %v1252
    %v1294 = vpack.c.bf16 %v1263, %v1260
    %v1295 = vpack.c.bf16 %v1271, %v1268
    %v1296 = vpack.c.bf16 %v1279, %v1276
    %v1297 = vpack.c.bf16 %v1287, %v1284
    %s1298 = scalar_lea.vmem [#allocation7], 3
    %v1299 = vld [vmem:[%s1298] sm:$0x1]
    %v1301 = vlaneseq
    %v1302 = vshrl.u32 %v1301, 7
    %v1303 = vsub.s32 0, %v1302
    %v1304 = vrot.slane %v1299, %v1303
    %1306 = vmatprep.subr.bf16.mxu0 0
    %1307 = vmatpush1.bf16.msra.mxu0 %v1297
    %1308 = vmatprep.subr.bf16.mxu0 0
    %1309 = vmatpush1.bf16.msra.mxu0 %v1296
    %1310 = vmatprep.subr.bf16.mxu0 0
    %1311 = vmatpush1.bf16.msra.mxu0 %v1295
    %1312 = vmatprep.subr.bf16.mxu0 0
    %1313 = vmatpush1.bf16.msra.mxu0 %v1294
    %1314 = vmatprep.subr.bf16.mxu0 0
    %1315 = vmatpush1.bf16.msra.mxu0 %v1293
    %1316 = vmatprep.subr.bf16.mxu0 0
    %1317 = vmatpush1.bf16.msra.mxu0 %v1292
    %1318 = vmatprep.subr.bf16.mxu0 0
    %1319 = vmatpush1.bf16.msra.mxu0 %v1291
    %1320 = vmatprep.subr.bf16.mxu0 0
    %1321 = vmatpush1.bf16.msra.mxu0 %v1290
    %1322 = vmatprep.subr.bf16.mxu0 0
    %1323 = vmatpush2.bf16.msra.mxu0 0
    %1324 = vmatprep.subr.bf16.mxu0 0
    %1325 = vmatpush2.bf16.msra.mxu0 0
    %1326 = vmatprep.subr.bf16.mxu0 0
    %1327 = vmatpush2.bf16.msra.mxu0 0
    %1328 = vmatprep.subr.bf16.mxu0 0
    %1329 = vmatpush2.bf16.msra.mxu0 0
    %1330 = vmatprep.subr.bf16.mxu0 0
    %1331 = vmatpush2.bf16.msra.mxu0 0
    %1332 = vmatprep.subr.bf16.mxu0 0
    %1333 = vmatpush2.bf16.msra.mxu0 0
    %1334 = vmatprep.subr.bf16.mxu0 0
    %1335 = vmatpush2.bf16.msra.mxu0 0
    %1336 = vmatprep.subr.bf16.mxu0 0
    %1337 = vmatpush2.bf16.msra.mxu0 0
    %1338 = vmatprep.mubr.bf16.mxu0 0
    %1339 = vmatmul.mubr.bf16.gmra.mxu0 %v137
    %v1340 = vpop.f32.mrf.mxu0
    %v1341 = vadd.f32 %v1304, %v1340
    %v1342 = vpop.f32.mrf.mxu0
    %v1343 = vpop.f32.mrf.mxu0
    %v1344 = vadd.f32 %v1304, %v1343
    %v1345 = vpop.f32.mrf.mxu0
    %1346 = vmatprep.mubr.bf16.mxu0 0
    %1347 = vmatmul.mubr.bf16.gmra.mxu0 %v138
    %v1348 = vpop.f32.mrf.mxu0
    %v1349 = vadd.f32 %v1304, %v1348
    %v1350 = vpop.f32.mrf.mxu0
    %v1351 = vpop.f32.mrf.mxu0
    %v1352 = vadd.f32 %v1304, %v1351
    %v1353 = vpop.f32.mrf.mxu0
    %1354 = vmatprep.mubr.bf16.mxu0 0
    %1355 = vmatmul.mubr.bf16.gmra.mxu0 %v139
    %v1356 = vpop.f32.mrf.mxu0
    %v1357 = vadd.f32 %v1304, %v1356
    %v1358 = vpop.f32.mrf.mxu0
    %v1359 = vpop.f32.mrf.mxu0
    %v1360 = vadd.f32 %v1304, %v1359
    %v1361 = vpop.f32.mrf.mxu0
    %1362 = vmatprep.mubr.bf16.mxu0 0
    %1363 = vmatmul.mubr.bf16.gmra.mxu0 %v140
    %v1364 = vpop.f32.mrf.mxu0
    %v1365 = vadd.f32 %v1304, %v1364
    %v1366 = vpop.f32.mrf.mxu0
    %v1367 = vpop.f32.mrf.mxu0
    %v1368 = vadd.f32 %v1304, %v1367
    %v1369 = vpop.f32.mrf.mxu0
    %1370 = vmatprep.mubr.bf16.mxu0 0
    %1371 = vmatmul.mubr.bf16.gmra.mxu0 %v141
    %v1372 = vpop.f32.mrf.mxu0
    %v1373 = vadd.f32 %v1304, %v1372
    %v1374 = vpop.f32.mrf.mxu0
    %v1375 = vpop.f32.mrf.mxu0
    %v1376 = vadd.f32 %v1304, %v1375
    %v1377 = vpop.f32.mrf.mxu0
    %1378 = vmatprep.mubr.bf16.mxu0 0
    %1379 = vmatmul.mubr.bf16.gmra.mxu0 %v142
    %v1380 = vpop.f32.mrf.mxu0
    %v1381 = vadd.f32 %v1304, %v1380
    %v1382 = vpop.f32.mrf.mxu0
    %v1383 = vpop.f32.mrf.mxu0
    %v1384 = vadd.f32 %v1304, %v1383
    %v1385 = vpop.f32.mrf.mxu0
    %1386 = vmatprep.mubr.bf16.mxu0 0
    %1387 = vmatmul.mubr.bf16.gmra.mxu0 %v143
    %v1388 = vpop.f32.mrf.mxu0
    %v1389 = vadd.f32 %v1304, %v1388
    %v1390 = vpop.f32.mrf.mxu0
    %v1391 = vpop.f32.mrf.mxu0
    %v1392 = vadd.f32 %v1304, %v1391
    %v1393 = vpop.f32.mrf.mxu0
    %1394 = vmatprep.mubr.bf16.mxu0 0
    %1395 = vmatmul.mubr.bf16.gmra.mxu0 %v144
    %v1396 = vpop.f32.mrf.mxu0
    %v1397 = vadd.f32 %v1304, %v1396
    %v1398 = vpop.f32.mrf.mxu0
    %v1399 = vpop.f32.mrf.mxu0
    %v1400 = vadd.f32 %v1304, %v1399
    %v1401 = vpop.f32.mrf.mxu0
    %1402 = vdwg.mxu0
    %v1403 = vmax.f32 %v1341, 0.0
    %v1404 = vmax.f32 %v1344, 0.0
    %v1405 = vmax.f32 %v1349, 0.0
    %v1406 = vmax.f32 %v1352, 0.0
    %v1407 = vmax.f32 %v1357, 0.0
    %v1408 = vmax.f32 %v1360, 0.0
    %v1409 = vmax.f32 %v1365, 0.0
    %v1410 = vmax.f32 %v1368, 0.0
    %v1411 = vmax.f32 %v1373, 0.0
    %v1412 = vmax.f32 %v1376, 0.0
    %v1413 = vmax.f32 %v1381, 0.0
    %v1414 = vmax.f32 %v1384, 0.0
    %v1415 = vmax.f32 %v1389, 0.0
    %v1416 = vmax.f32 %v1392, 0.0
    %v1417 = vmax.f32 %v1397, 0.0
    %v1418 = vmax.f32 %v1400, 0.0
    %v1419 = vadd.f32 %v1403, %v1104
    %v1420 = vadd.f32 %v1404, %v1105
    %v1421 = vadd.f32 %v1405, %v1106
    %v1422 = vadd.f32 %v1406, %v1107
    %v1423 = vadd.f32 %v1407, %v1108
    %v1424 = vadd.f32 %v1408, %v1109
    %v1425 = vadd.f32 %v1409, %v1110
    %v1426 = vadd.f32 %v1410, %v1111
    %v1427 = vadd.f32 %v1411, %v1112
    %v1428 = vadd.f32 %v1412, %v1113
    %v1429 = vadd.f32 %v1413, %v1114
    %v1430 = vadd.f32 %v1414, %v1115
    %v1431 = vadd.f32 %v1415, %v1116
    %v1432 = vadd.f32 %v1416, %v1117
    %v1433 = vadd.f32 %v1417, %v1118
    %v1434 = vadd.f32 %v1418, %v1119
    %v1435 = vpack.c.bf16 %v1420, %v1419
    %v1436 = vpack.c.bf16 %v1422, %v1421
    %v1437 = vpack.c.bf16 %v1424, %v1423
    %v1438 = vpack.c.bf16 %v1426, %v1425
    %v1439 = vpack.c.bf16 %v1428, %v1427
    %v1440 = vpack.c.bf16 %v1430, %v1429
    %v1441 = vpack.c.bf16 %v1432, %v1431
    %v1442 = vpack.c.bf16 %v1434, %v1433
    %s1443 = scalar_lea.vmem [#allocation6], 256
    %v1444 = vld [vmem:[%s1443] sm:$0xf]
    %v1445 = vld [vmem:[%s1443 + $0x4] sm:$0xf]
    %v1446 = vld [vmem:[%s1443 + $0x8] sm:$0xf]
    %v1447 = vld [vmem:[%s1443 + $0xc] sm:$0xf]
    %v1448 = vld [vmem:[%s1443 + $0x10] sm:$0xf]
    %v1449 = vld [vmem:[%s1443 + $0x14] sm:$0xf]
    %v1450 = vld [vmem:[%s1443 + $0x18] sm:$0xf]
    %v1451 = vld [vmem:[%s1443 + $0x1c] sm:$0xf]
    %v1452 = vld [vmem:[%s1443 + $0x20] sm:$0xf]
    %v1453 = vld [vmem:[%s1443 + $0x24] sm:$0xf]
    %v1454 = vld [vmem:[%s1443 + $0x28] sm:$0xf]
    %v1455 = vld [vmem:[%s1443 + $0x2c] sm:$0xf]
    %v1456 = vld [vmem:[%s1443 + $0x30] sm:$0xf]
    %v1457 = vld [vmem:[%s1443 + $0x34] sm:$0xf]
    %v1458 = vld [vmem:[%s1443 + $0x38] sm:$0xf]
    %v1459 = vld [vmem:[%s1443 + $0x3c] sm:$0xf]
    %v1476 = vunpack.c.l.b16 %v1444
    %v1477 = vunpack.c.l.b16 %v1445
    %v1478 = vunpack.c.l.b16 %v1446
    %v1479 = vunpack.c.l.b16 %v1447
    %v1480 = vunpack.c.l.b16 %v1448
    %v1481 = vunpack.c.l.b16 %v1449
    %v1482 = vunpack.c.l.b16 %v1450
    %v1483 = vunpack.c.l.b16 %v1451
    %v1484 = vunpack.c.l.b16 %v1452
    %v1485 = vunpack.c.l.b16 %v1453
    %v1486 = vunpack.c.l.b16 %v1454
    %v1487 = vunpack.c.l.b16 %v1455
    %v1488 = vunpack.c.l.b16 %v1456
    %v1489 = vunpack.c.l.b16 %v1457
    %v1490 = vunpack.c.l.b16 %v1458
    %v1491 = vunpack.c.l.b16 %v1459
    %v1492 = vpack.c.b16 %v1477, %v1476
    %v1493 = vpack.c.b16 %v1479, %v1478
    %v1494 = vpack.c.b16 %v1481, %v1480
    %v1495 = vpack.c.b16 %v1483, %v1482
    %v1496 = vpack.c.b16 %v1485, %v1484
    %v1497 = vpack.c.b16 %v1487, %v1486
    %v1498 = vpack.c.b16 %v1489, %v1488
    %v1499 = vpack.c.b16 %v1491, %v1490
    %1508 = vmatprep.subr.bf16.mxu0 0
    %1509 = vmatpush1.bf16.msra.mxu0 %v1499
    %1510 = vmatprep.subr.bf16.mxu0 0
    %1511 = vmatpush1.bf16.msra.mxu0 %v1498
    %1512 = vmatprep.subr.bf16.mxu0 0
    %1513 = vmatpush1.bf16.msra.mxu0 %v1497
    %1514 = vmatprep.subr.bf16.mxu0 0
    %1515 = vmatpush1.bf16.msra.mxu0 %v1496
    %1516 = vmatprep.subr.bf16.mxu0 0
    %1517 = vmatpush1.bf16.msra.mxu0 %v1495
    %1518 = vmatprep.subr.bf16.mxu0 0
    %1519 = vmatpush1.bf16.msra.mxu0 %v1494
    %1520 = vmatprep.subr.bf16.mxu0 0
    %1521 = vmatpush1.bf16.msra.mxu0 %v1493
    %1522 = vmatprep.subr.bf16.mxu0 0
    %1523 = vmatpush1.bf16.msra.mxu0 %v1492
    %1524 = vmatprep.subr.bf16.mxu0 0
    %1525 = vmatpush2.bf16.msra.mxu0 0
    %1526 = vmatprep.subr.bf16.mxu0 0
    %1527 = vmatpush2.bf16.msra.mxu0 0
    %1528 = vmatprep.subr.bf16.mxu0 0
    %1529 = vmatpush2.bf16.msra.mxu0 0
    %1530 = vmatprep.subr.bf16.mxu0 0
    %1531 = vmatpush2.bf16.msra.mxu0 0
    %1532 = vmatprep.subr.bf16.mxu0 0
    %1533 = vmatpush2.bf16.msra.mxu0 0
    %1534 = vmatprep.subr.bf16.mxu0 0
    %1535 = vmatpush2.bf16.msra.mxu0 0
    %1536 = vmatprep.subr.bf16.mxu0 0
    %1537 = vmatpush2.bf16.msra.mxu0 0
    %1538 = vmatprep.subr.bf16.mxu0 0
    %1539 = vmatpush2.bf16.msra.mxu0 0
    %1540 = vmatprep.mubr.bf16.mxu0 0
    %1541 = vmatmul.mubr.bf16.gmra.mxu0 %v1435
    %v1542 = vpop.f32.mrf.mxu0
    %v1543 = vadd.f32 0.0, %v1542
    %v1544 = vpop.f32.mrf.mxu0
    %v1545 = vpop.f32.mrf.mxu0
    %v1546 = vadd.f32 0.0, %v1545
    %v1547 = vpop.f32.mrf.mxu0
    %1548 = vmatprep.mubr.bf16.mxu0 0
    %1549 = vmatmul.mubr.bf16.gmra.mxu0 %v1436
    %v1550 = vpop.f32.mrf.mxu0
    %v1551 = vadd.f32 0.0, %v1550
    %v1552 = vpop.f32.mrf.mxu0
    %v1553 = vpop.f32.mrf.mxu0
    %v1554 = vadd.f32 0.0, %v1553
    %v1555 = vpop.f32.mrf.mxu0
    %1556 = vmatprep.mubr.bf16.mxu0 0
    %1557 = vmatmul.mubr.bf16.gmra.mxu0 %v1437
    %v1558 = vpop.f32.mrf.mxu0
    %v1559 = vadd.f32 0.0, %v1558
    %v1560 = vpop.f32.mrf.mxu0
    %v1561 = vpop.f32.mrf.mxu0
    %v1562 = vadd.f32 0.0, %v1561
    %v1563 = vpop.f32.mrf.mxu0
    %1564 = vmatprep.mubr.bf16.mxu0 0
    %1565 = vmatmul.mubr.bf16.gmra.mxu0 %v1438
    %v1566 = vpop.f32.mrf.mxu0
    %v1567 = vadd.f32 0.0, %v1566
    %v1568 = vpop.f32.mrf.mxu0
    %v1569 = vpop.f32.mrf.mxu0
    %v1570 = vadd.f32 0.0, %v1569
    %v1571 = vpop.f32.mrf.mxu0
    %1572 = vmatprep.mubr.bf16.mxu0 0
    %1573 = vmatmul.mubr.bf16.gmra.mxu0 %v1439
    %v1574 = vpop.f32.mrf.mxu0
    %v1575 = vadd.f32 0.0, %v1574
    %v1576 = vpop.f32.mrf.mxu0
    %v1577 = vpop.f32.mrf.mxu0
    %v1578 = vadd.f32 0.0, %v1577
    %v1579 = vpop.f32.mrf.mxu0
    %1580 = vmatprep.mubr.bf16.mxu0 0
    %1581 = vmatmul.mubr.bf16.gmra.mxu0 %v1440
    %v1582 = vpop.f32.mrf.mxu0
    %v1583 = vadd.f32 0.0, %v1582
    %v1584 = vpop.f32.mrf.mxu0
    %v1585 = vpop.f32.mrf.mxu0
    %v1586 = vadd.f32 0.0, %v1585
    %v1587 = vpop.f32.mrf.mxu0
    %1588 = vmatprep.mubr.bf16.mxu0 0
    %1589 = vmatmul.mubr.bf16.gmra.mxu0 %v1441
    %v1590 = vpop.f32.mrf.mxu0
    %v1591 = vadd.f32 0.0, %v1590
    %v1592 = vpop.f32.mrf.mxu0
    %v1593 = vpop.f32.mrf.mxu0
    %v1594 = vadd.f32 0.0, %v1593
    %v1595 = vpop.f32.mrf.mxu0
    %1596 = vmatprep.mubr.bf16.mxu0 0
    %1597 = vmatmul.mubr.bf16.gmra.mxu0 %v1442
    %v1598 = vpop.f32.mrf.mxu0
    %v1599 = vadd.f32 0.0, %v1598
    %v1600 = vpop.f32.mrf.mxu0
    %v1601 = vpop.f32.mrf.mxu0
    %v1602 = vadd.f32 0.0, %v1601
    %v1603 = vpop.f32.mrf.mxu0
    %1604 = vdwg.mxu0
    %v1605 = vpack.c.bf16 %v1546, %v1543
    %v1606 = vpack.c.bf16 %v1554, %v1551
    %v1607 = vpack.c.bf16 %v1562, %v1559
    %v1608 = vpack.c.bf16 %v1570, %v1567
    %v1609 = vpack.c.bf16 %v1578, %v1575
    %v1610 = vpack.c.bf16 %v1586, %v1583
    %v1611 = vpack.c.bf16 %v1594, %v1591
    %v1612 = vpack.c.bf16 %v1602, %v1599
    %s1613 = scalar_lea.vmem [#allocation7], 4
    %v1614 = vld [vmem:[%s1613] sm:$0x1]
    %v1616 = vlaneseq
    %v1617 = vshrl.u32 %v1616, 7
    %v1618 = vsub.s32 0, %v1617
    %v1619 = vrot.slane %v1614, %v1618
    %1621 = vmatprep.subr.bf16.mxu0 0
    %1622 = vmatpush1.bf16.msra.mxu0 %v1612
    %1623 = vmatprep.subr.bf16.mxu0 0
    %1624 = vmatpush1.bf16.msra.mxu0 %v1611
    %1625 = vmatprep.subr.bf16.mxu0 0
    %1626 = vmatpush1.bf16.msra.mxu0 %v1610
    %1627 = vmatprep.subr.bf16.mxu0 0
    %1628 = vmatpush1.bf16.msra.mxu0 %v1609
    %1629 = vmatprep.subr.bf16.mxu0 0
    %1630 = vmatpush1.bf16.msra.mxu0 %v1608
    %1631 = vmatprep.subr.bf16.mxu0 0
    %1632 = vmatpush1.bf16.msra.mxu0 %v1607
    %1633 = vmatprep.subr.bf16.mxu0 0
    %1634 = vmatpush1.bf16.msra.mxu0 %v1606
    %1635 = vmatprep.subr.bf16.mxu0 0
    %1636 = vmatpush1.bf16.msra.mxu0 %v1605
    %1637 = vmatprep.subr.bf16.mxu0 0
    %1638 = vmatpush2.bf16.msra.mxu0 0
    %1639 = vmatprep.subr.bf16.mxu0 0
    %1640 = vmatpush2.bf16.msra.mxu0 0
    %1641 = vmatprep.subr.bf16.mxu0 0
    %1642 = vmatpush2.bf16.msra.mxu0 0
    %1643 = vmatprep.subr.bf16.mxu0 0
    %1644 = vmatpush2.bf16.msra.mxu0 0
    %1645 = vmatprep.subr.bf16.mxu0 0
    %1646 = vmatpush2.bf16.msra.mxu0 0
    %1647 = vmatprep.subr.bf16.mxu0 0
    %1648 = vmatpush2.bf16.msra.mxu0 0
    %1649 = vmatprep.subr.bf16.mxu0 0
    %1650 = vmatpush2.bf16.msra.mxu0 0
    %1651 = vmatprep.subr.bf16.mxu0 0
    %1652 = vmatpush2.bf16.msra.mxu0 0
    %1653 = vmatprep.mubr.bf16.mxu0 0
    %1654 = vmatmul.mubr.bf16.gmra.mxu0 %v137
    %v1655 = vpop.f32.mrf.mxu0
    %v1656 = vadd.f32 %v1619, %v1655
    %v1657 = vpop.f32.mrf.mxu0
    %v1658 = vpop.f32.mrf.mxu0
    %v1659 = vadd.f32 %v1619, %v1658
    %v1660 = vpop.f32.mrf.mxu0
    %1661 = vmatprep.mubr.bf16.mxu0 0
    %1662 = vmatmul.mubr.bf16.gmra.mxu0 %v138
    %v1663 = vpop.f32.mrf.mxu0
    %v1664 = vadd.f32 %v1619, %v1663
    %v1665 = vpop.f32.mrf.mxu0
    %v1666 = vpop.f32.mrf.mxu0
    %v1667 = vadd.f32 %v1619, %v1666
    %v1668 = vpop.f32.mrf.mxu0
    %1669 = vmatprep.mubr.bf16.mxu0 0
    %1670 = vmatmul.mubr.bf16.gmra.mxu0 %v139
    %v1671 = vpop.f32.mrf.mxu0
    %v1672 = vadd.f32 %v1619, %v1671
    %v1673 = vpop.f32.mrf.mxu0
    %v1674 = vpop.f32.mrf.mxu0
    %v1675 = vadd.f32 %v1619, %v1674
    %v1676 = vpop.f32.mrf.mxu0
    %1677 = vmatprep.mubr.bf16.mxu0 0
    %1678 = vmatmul.mubr.bf16.gmra.mxu0 %v140
    %v1679 = vpop.f32.mrf.mxu0
    %v1680 = vadd.f32 %v1619, %v1679
    %v1681 = vpop.f32.mrf.mxu0
    %v1682 = vpop.f32.mrf.mxu0
    %v1683 = vadd.f32 %v1619, %v1682
    %v1684 = vpop.f32.mrf.mxu0
    %1685 = vmatprep.mubr.bf16.mxu0 0
    %1686 = vmatmul.mubr.bf16.gmra.mxu0 %v141
    %v1687 = vpop.f32.mrf.mxu0
    %v1688 = vadd.f32 %v1619, %v1687
    %v1689 = vpop.f32.mrf.mxu0
    %v1690 = vpop.f32.mrf.mxu0
    %v1691 = vadd.f32 %v1619, %v1690
    %v1692 = vpop.f32.mrf.mxu0
    %1693 = vmatprep.mubr.bf16.mxu0 0
    %1694 = vmatmul.mubr.bf16.gmra.mxu0 %v142
    %v1695 = vpop.f32.mrf.mxu0
    %v1696 = vadd.f32 %v1619, %v1695
    %v1697 = vpop.f32.mrf.mxu0
    %v1698 = vpop.f32.mrf.mxu0
    %v1699 = vadd.f32 %v1619, %v1698
    %v1700 = vpop.f32.mrf.mxu0
    %1701 = vmatprep.mubr.bf16.mxu0 0
    %1702 = vmatmul.mubr.bf16.gmra.mxu0 %v143
    %v1703 = vpop.f32.mrf.mxu0
    %v1704 = vadd.f32 %v1619, %v1703
    %v1705 = vpop.f32.mrf.mxu0
    %v1706 = vpop.f32.mrf.mxu0
    %v1707 = vadd.f32 %v1619, %v1706
    %v1708 = vpop.f32.mrf.mxu0
    %1709 = vmatprep.mubr.bf16.mxu0 0
    %1710 = vmatmul.mubr.bf16.gmra.mxu0 %v144
    %v1711 = vpop.f32.mrf.mxu0
    %v1712 = vadd.f32 %v1619, %v1711
    %v1713 = vpop.f32.mrf.mxu0
    %v1714 = vpop.f32.mrf.mxu0
    %v1715 = vadd.f32 %v1619, %v1714
    %v1716 = vpop.f32.mrf.mxu0
    %1717 = vdwg.mxu0
    %v1718 = vmax.f32 %v1656, 0.0
    %v1719 = vmax.f32 %v1659, 0.0
    %v1720 = vmax.f32 %v1664, 0.0
    %v1721 = vmax.f32 %v1667, 0.0
    %v1722 = vmax.f32 %v1672, 0.0
    %v1723 = vmax.f32 %v1675, 0.0
    %v1724 = vmax.f32 %v1680, 0.0
    %v1725 = vmax.f32 %v1683, 0.0
    %v1726 = vmax.f32 %v1688, 0.0
    %v1727 = vmax.f32 %v1691, 0.0
    %v1728 = vmax.f32 %v1696, 0.0
    %v1729 = vmax.f32 %v1699, 0.0
    %v1730 = vmax.f32 %v1704, 0.0
    %v1731 = vmax.f32 %v1707, 0.0
    %v1732 = vmax.f32 %v1712, 0.0
    %v1733 = vmax.f32 %v1715, 0.0
    %v1734 = vadd.f32 %v1718, %v1419
    %v1735 = vadd.f32 %v1719, %v1420
    %v1736 = vadd.f32 %v1720, %v1421
    %v1737 = vadd.f32 %v1721, %v1422
    %v1738 = vadd.f32 %v1722, %v1423
    %v1739 = vadd.f32 %v1723, %v1424
    %v1740 = vadd.f32 %v1724, %v1425
    %v1741 = vadd.f32 %v1725, %v1426
    %v1742 = vadd.f32 %v1726, %v1427
    %v1743 = vadd.f32 %v1727, %v1428
    %v1744 = vadd.f32 %v1728, %v1429
    %v1745 = vadd.f32 %v1729, %v1430
    %v1746 = vadd.f32 %v1730, %v1431
    %v1747 = vadd.f32 %v1731, %v1432
    %v1748 = vadd.f32 %v1732, %v1433
    %v1749 = vadd.f32 %v1733, %v1434
    %v1750 = vpack.c.bf16 %v1735, %v1734
    %v1751 = vpack.c.bf16 %v1737, %v1736
    %v1752 = vpack.c.bf16 %v1739, %v1738
    %v1753 = vpack.c.bf16 %v1741, %v1740
    %v1754 = vpack.c.bf16 %v1743, %v1742
    %v1755 = vpack.c.bf16 %v1745, %v1744
    %v1756 = vpack.c.bf16 %v1747, %v1746
    %v1757 = vpack.c.bf16 %v1749, %v1748
    %s1758 = scalar_lea.vmem [#allocation6], 320
    %v1759 = vld [vmem:[%s1758] sm:$0xf]
    %v1760 = vld [vmem:[%s1758 + $0x4] sm:$0xf]
    %v1761 = vld [vmem:[%s1758 + $0x8] sm:$0xf]
    %v1762 = vld [vmem:[%s1758 + $0xc] sm:$0xf]
    %v1763 = vld [vmem:[%s1758 + $0x10] sm:$0xf]
    %v1764 = vld [vmem:[%s1758 + $0x14] sm:$0xf]
    %v1765 = vld [vmem:[%s1758 + $0x18] sm:$0xf]
    %v1766 = vld [vmem:[%s1758 + $0x1c] sm:$0xf]
    %v1767 = vld [vmem:[%s1758 + $0x20] sm:$0xf]
    %v1768 = vld [vmem:[%s1758 + $0x24] sm:$0xf]
    %v1769 = vld [vmem:[%s1758 + $0x28] sm:$0xf]
    %v1770 = vld [vmem:[%s1758 + $0x2c] sm:$0xf]
    %v1771 = vld [vmem:[%s1758 + $0x30] sm:$0xf]
    %v1772 = vld [vmem:[%s1758 + $0x34] sm:$0xf]
    %v1773 = vld [vmem:[%s1758 + $0x38] sm:$0xf]
    %v1774 = vld [vmem:[%s1758 + $0x3c] sm:$0xf]
    %v1791 = vunpack.c.l.b16 %v1759
    %v1792 = vunpack.c.l.b16 %v1760
    %v1793 = vunpack.c.l.b16 %v1761
    %v1794 = vunpack.c.l.b16 %v1762
    %v1795 = vunpack.c.l.b16 %v1763
    %v1796 = vunpack.c.l.b16 %v1764
    %v1797 = vunpack.c.l.b16 %v1765
    %v1798 = vunpack.c.l.b16 %v1766
    %v1799 = vunpack.c.l.b16 %v1767
    %v1800 = vunpack.c.l.b16 %v1768
    %v1801 = vunpack.c.l.b16 %v1769
    %v1802 = vunpack.c.l.b16 %v1770
    %v1803 = vunpack.c.l.b16 %v1771
    %v1804 = vunpack.c.l.b16 %v1772
    %v1805 = vunpack.c.l.b16 %v1773
    %v1806 = vunpack.c.l.b16 %v1774
    %v1807 = vpack.c.b16 %v1792, %v1791
    %v1808 = vpack.c.b16 %v1794, %v1793
    %v1809 = vpack.c.b16 %v1796, %v1795
    %v1810 = vpack.c.b16 %v1798, %v1797
    %v1811 = vpack.c.b16 %v1800, %v1799
    %v1812 = vpack.c.b16 %v1802, %v1801
    %v1813 = vpack.c.b16 %v1804, %v1803
    %v1814 = vpack.c.b16 %v1806, %v1805
    %1823 = vmatprep.subr.bf16.mxu0 0
    %1824 = vmatpush1.bf16.msra.mxu0 %v1814
    %1825 = vmatprep.subr.bf16.mxu0 0
    %1826 = vmatpush1.bf16.msra.mxu0 %v1813
    %1827 = vmatprep.subr.bf16.mxu0 0
    %1828 = vmatpush1.bf16.msra.mxu0 %v1812
    %1829 = vmatprep.subr.bf16.mxu0 0
    %1830 = vmatpush1.bf16.msra.mxu0 %v1811
    %1831 = vmatprep.subr.bf16.mxu0 0
    %1832 = vmatpush1.bf16.msra.mxu0 %v1810
    %1833 = vmatprep.subr.bf16.mxu0 0
    %1834 = vmatpush1.bf16.msra.mxu0 %v1809
    %1835 = vmatprep.subr.bf16.mxu0 0
    %1836 = vmatpush1.bf16.msra.mxu0 %v1808
    %1837 = vmatprep.subr.bf16.mxu0 0
    %1838 = vmatpush1.bf16.msra.mxu0 %v1807
    %1839 = vmatprep.subr.bf16.mxu0 0
    %1840 = vmatpush2.bf16.msra.mxu0 0
    %1841 = vmatprep.subr.bf16.mxu0 0
    %1842 = vmatpush2.bf16.msra.mxu0 0
    %1843 = vmatprep.subr.bf16.mxu0 0
    %1844 = vmatpush2.bf16.msra.mxu0 0
    %1845 = vmatprep.subr.bf16.mxu0 0
    %1846 = vmatpush2.bf16.msra.mxu0 0
    %1847 = vmatprep.subr.bf16.mxu0 0
    %1848 = vmatpush2.bf16.msra.mxu0 0
    %1849 = vmatprep.subr.bf16.mxu0 0
    %1850 = vmatpush2.bf16.msra.mxu0 0
    %1851 = vmatprep.subr.bf16.mxu0 0
    %1852 = vmatpush2.bf16.msra.mxu0 0
    %1853 = vmatprep.subr.bf16.mxu0 0
    %1854 = vmatpush2.bf16.msra.mxu0 0
    %1855 = vmatprep.mubr.bf16.mxu0 0
    %1856 = vmatmul.mubr.bf16.gmra.mxu0 %v1750
    %v1857 = vpop.f32.mrf.mxu0
    %v1858 = vadd.f32 0.0, %v1857
    %v1859 = vpop.f32.mrf.mxu0
    %v1860 = vpop.f32.mrf.mxu0
    %v1861 = vadd.f32 0.0, %v1860
    %v1862 = vpop.f32.mrf.mxu0
    %1863 = vmatprep.mubr.bf16.mxu0 0
    %1864 = vmatmul.mubr.bf16.gmra.mxu0 %v1751
    %v1865 = vpop.f32.mrf.mxu0
    %v1866 = vadd.f32 0.0, %v1865
    %v1867 = vpop.f32.mrf.mxu0
    %v1868 = vpop.f32.mrf.mxu0
    %v1869 = vadd.f32 0.0, %v1868
    %v1870 = vpop.f32.mrf.mxu0
    %1871 = vmatprep.mubr.bf16.mxu0 0
    %1872 = vmatmul.mubr.bf16.gmra.mxu0 %v1752
    %v1873 = vpop.f32.mrf.mxu0
    %v1874 = vadd.f32 0.0, %v1873
    %v1875 = vpop.f32.mrf.mxu0
    %v1876 = vpop.f32.mrf.mxu0
    %v1877 = vadd.f32 0.0, %v1876
    %v1878 = vpop.f32.mrf.mxu0
    %1879 = vmatprep.mubr.bf16.mxu0 0
    %1880 = vmatmul.mubr.bf16.gmra.mxu0 %v1753
    %v1881 = vpop.f32.mrf.mxu0
    %v1882 = vadd.f32 0.0, %v1881
    %v1883 = vpop.f32.mrf.mxu0
    %v1884 = vpop.f32.mrf.mxu0
    %v1885 = vadd.f32 0.0, %v1884
    %v1886 = vpop.f32.mrf.mxu0
    %1887 = vmatprep.mubr.bf16.mxu0 0
    %1888 = vmatmul.mubr.bf16.gmra.mxu0 %v1754
    %v1889 = vpop.f32.mrf.mxu0
    %v1890 = vadd.f32 0.0, %v1889
    %v1891 = vpop.f32.mrf.mxu0
    %v1892 = vpop.f32.mrf.mxu0
    %v1893 = vadd.f32 0.0, %v1892
    %v1894 = vpop.f32.mrf.mxu0
    %1895 = vmatprep.mubr.bf16.mxu0 0
    %1896 = vmatmul.mubr.bf16.gmra.mxu0 %v1755
    %v1897 = vpop.f32.mrf.mxu0
    %v1898 = vadd.f32 0.0, %v1897
    %v1899 = vpop.f32.mrf.mxu0
    %v1900 = vpop.f32.mrf.mxu0
    %v1901 = vadd.f32 0.0, %v1900
    %v1902 = vpop.f32.mrf.mxu0
    %1903 = vmatprep.mubr.bf16.mxu0 0
    %1904 = vmatmul.mubr.bf16.gmra.mxu0 %v1756
    %v1905 = vpop.f32.mrf.mxu0
    %v1906 = vadd.f32 0.0, %v1905
    %v1907 = vpop.f32.mrf.mxu0
    %v1908 = vpop.f32.mrf.mxu0
    %v1909 = vadd.f32 0.0, %v1908
    %v1910 = vpop.f32.mrf.mxu0
    %1911 = vmatprep.mubr.bf16.mxu0 0
    %1912 = vmatmul.mubr.bf16.gmra.mxu0 %v1757
    %v1913 = vpop.f32.mrf.mxu0
    %v1914 = vadd.f32 0.0, %v1913
    %v1915 = vpop.f32.mrf.mxu0
    %v1916 = vpop.f32.mrf.mxu0
    %v1917 = vadd.f32 0.0, %v1916
    %v1918 = vpop.f32.mrf.mxu0
    %1919 = vdwg.mxu0
    %v1920 = vpack.c.bf16 %v1861, %v1858
    %v1921 = vpack.c.bf16 %v1869, %v1866
    %v1922 = vpack.c.bf16 %v1877, %v1874
    %v1923 = vpack.c.bf16 %v1885, %v1882
    %v1924 = vpack.c.bf16 %v1893, %v1890
    %v1925 = vpack.c.bf16 %v1901, %v1898
    %v1926 = vpack.c.bf16 %v1909, %v1906
    %v1927 = vpack.c.bf16 %v1917, %v1914
    %s1928 = scalar_lea.vmem [#allocation7], 5
    %v1929 = vld [vmem:[%s1928] sm:$0x1]
    %v1931 = vlaneseq
    %v1932 = vshrl.u32 %v1931, 7
    %v1933 = vsub.s32 0, %v1932
    %v1934 = vrot.slane %v1929, %v1933
    %1936 = vmatprep.subr.bf16.mxu0 0
    %1937 = vmatpush1.bf16.msra.mxu0 %v1927
    %1938 = vmatprep.subr.bf16.mxu0 0
    %1939 = vmatpush1.bf16.msra.mxu0 %v1926
    %1940 = vmatprep.subr.bf16.mxu0 0
    %1941 = vmatpush1.bf16.msra.mxu0 %v1925
    %1942 = vmatprep.subr.bf16.mxu0 0
    %1943 = vmatpush1.bf16.msra.mxu0 %v1924
    %1944 = vmatprep.subr.bf16.mxu0 0
    %1945 = vmatpush1.bf16.msra.mxu0 %v1923
    %1946 = vmatprep.subr.bf16.mxu0 0
    %1947 = vmatpush1.bf16.msra.mxu0 %v1922
    %1948 = vmatprep.subr.bf16.mxu0 0
    %1949 = vmatpush1.bf16.msra.mxu0 %v1921
    %1950 = vmatprep.subr.bf16.mxu0 0
    %1951 = vmatpush1.bf16.msra.mxu0 %v1920
    %1952 = vmatprep.subr.bf16.mxu0 0
    %1953 = vmatpush2.bf16.msra.mxu0 0
    %1954 = vmatprep.subr.bf16.mxu0 0
    %1955 = vmatpush2.bf16.msra.mxu0 0
    %1956 = vmatprep.subr.bf16.mxu0 0
    %1957 = vmatpush2.bf16.msra.mxu0 0
    %1958 = vmatprep.subr.bf16.mxu0 0
    %1959 = vmatpush2.bf16.msra.mxu0 0
    %1960 = vmatprep.subr.bf16.mxu0 0
    %1961 = vmatpush2.bf16.msra.mxu0 0
    %1962 = vmatprep.subr.bf16.mxu0 0
    %1963 = vmatpush2.bf16.msra.mxu0 0
    %1964 = vmatprep.subr.bf16.mxu0 0
    %1965 = vmatpush2.bf16.msra.mxu0 0
    %1966 = vmatprep.subr.bf16.mxu0 0
    %1967 = vmatpush2.bf16.msra.mxu0 0
    %1968 = vmatprep.mubr.bf16.mxu0 0
    %1969 = vmatmul.mubr.bf16.gmra.mxu0 %v137
    %v1970 = vpop.f32.mrf.mxu0
    %v1971 = vadd.f32 %v1934, %v1970
    %v1972 = vpop.f32.mrf.mxu0
    %v1973 = vpop.f32.mrf.mxu0
    %v1974 = vadd.f32 %v1934, %v1973
    %v1975 = vpop.f32.mrf.mxu0
    %1976 = vmatprep.mubr.bf16.mxu0 0
    %1977 = vmatmul.mubr.bf16.gmra.mxu0 %v138
    %v1978 = vpop.f32.mrf.mxu0
    %v1979 = vadd.f32 %v1934, %v1978
    %v1980 = vpop.f32.mrf.mxu0
    %v1981 = vpop.f32.mrf.mxu0
    %v1982 = vadd.f32 %v1934, %v1981
    %v1983 = vpop.f32.mrf.mxu0
    %1984 = vmatprep.mubr.bf16.mxu0 0
    %1985 = vmatmul.mubr.bf16.gmra.mxu0 %v139
    %v1986 = vpop.f32.mrf.mxu0
    %v1987 = vadd.f32 %v1934, %v1986
    %v1988 = vpop.f32.mrf.mxu0
    %v1989 = vpop.f32.mrf.mxu0
    %v1990 = vadd.f32 %v1934, %v1989
    %v1991 = vpop.f32.mrf.mxu0
    %1992 = vmatprep.mubr.bf16.mxu0 0
    %1993 = vmatmul.mubr.bf16.gmra.mxu0 %v140
    %v1994 = vpop.f32.mrf.mxu0
    %v1995 = vadd.f32 %v1934, %v1994
    %v1996 = vpop.f32.mrf.mxu0
    %v1997 = vpop.f32.mrf.mxu0
    %v1998 = vadd.f32 %v1934, %v1997
    %v1999 = vpop.f32.mrf.mxu0
    %2000 = vmatprep.mubr.bf16.mxu0 0
    %2001 = vmatmul.mubr.bf16.gmra.mxu0 %v141
    %v2002 = vpop.f32.mrf.mxu0
    %v2003 = vadd.f32 %v1934, %v2002
    %v2004 = vpop.f32.mrf.mxu0
    %v2005 = vpop.f32.mrf.mxu0
    %v2006 = vadd.f32 %v1934, %v2005
    %v2007 = vpop.f32.mrf.mxu0
    %2008 = vmatprep.mubr.bf16.mxu0 0
    %2009 = vmatmul.mubr.bf16.gmra.mxu0 %v142
    %v2010 = vpop.f32.mrf.mxu0
    %v2011 = vadd.f32 %v1934, %v2010
    %v2012 = vpop.f32.mrf.mxu0
    %v2013 = vpop.f32.mrf.mxu0
    %v2014 = vadd.f32 %v1934, %v2013
    %v2015 = vpop.f32.mrf.mxu0
    %2016 = vmatprep.mubr.bf16.mxu0 0
    %2017 = vmatmul.mubr.bf16.gmra.mxu0 %v143
    %v2018 = vpop.f32.mrf.mxu0
    %v2019 = vadd.f32 %v1934, %v2018
    %v2020 = vpop.f32.mrf.mxu0
    %v2021 = vpop.f32.mrf.mxu0
    %v2022 = vadd.f32 %v1934, %v2021
    %v2023 = vpop.f32.mrf.mxu0
    %2024 = vmatprep.mubr.bf16.mxu0 0
    %2025 = vmatmul.mubr.bf16.gmra.mxu0 %v144
    %v2026 = vpop.f32.mrf.mxu0
    %v2027 = vadd.f32 %v1934, %v2026
    %v2028 = vpop.f32.mrf.mxu0
    %v2029 = vpop.f32.mrf.mxu0
    %v2030 = vadd.f32 %v1934, %v2029
    %v2031 = vpop.f32.mrf.mxu0
    %2032 = vdwg.mxu0
    %v2033 = vmax.f32 %v1971, 0.0
    %v2034 = vmax.f32 %v1974, 0.0
    %v2035 = vmax.f32 %v1979, 0.0
    %v2036 = vmax.f32 %v1982, 0.0
    %v2037 = vmax.f32 %v1987, 0.0
    %v2038 = vmax.f32 %v1990, 0.0
    %v2039 = vmax.f32 %v1995, 0.0
    %v2040 = vmax.f32 %v1998, 0.0
    %v2041 = vmax.f32 %v2003, 0.0
    %v2042 = vmax.f32 %v2006, 0.0
    %v2043 = vmax.f32 %v2011, 0.0
    %v2044 = vmax.f32 %v2014, 0.0
    %v2045 = vmax.f32 %v2019, 0.0
    %v2046 = vmax.f32 %v2022, 0.0
    %v2047 = vmax.f32 %v2027, 0.0
    %v2048 = vmax.f32 %v2030, 0.0
    %v2049 = vadd.f32 %v2033, %v1734
    %v2050 = vadd.f32 %v2034, %v1735
    %v2051 = vadd.f32 %v2035, %v1736
    %v2052 = vadd.f32 %v2036, %v1737
    %v2053 = vadd.f32 %v2037, %v1738
    %v2054 = vadd.f32 %v2038, %v1739
    %v2055 = vadd.f32 %v2039, %v1740
    %v2056 = vadd.f32 %v2040, %v1741
    %v2057 = vadd.f32 %v2041, %v1742
    %v2058 = vadd.f32 %v2042, %v1743
    %v2059 = vadd.f32 %v2043, %v1744
    %v2060 = vadd.f32 %v2044, %v1745
    %v2061 = vadd.f32 %v2045, %v1746
    %v2062 = vadd.f32 %v2046, %v1747
    %v2063 = vadd.f32 %v2047, %v1748
    %v2064 = vadd.f32 %v2048, %v1749
    %v2065 = vpack.c.bf16 %v2050, %v2049
    %v2066 = vpack.c.bf16 %v2052, %v2051
    %v2067 = vpack.c.bf16 %v2054, %v2053
    %v2068 = vpack.c.bf16 %v2056, %v2055
    %v2069 = vpack.c.bf16 %v2058, %v2057
    %v2070 = vpack.c.bf16 %v2060, %v2059
    %v2071 = vpack.c.bf16 %v2062, %v2061
    %v2072 = vpack.c.bf16 %v2064, %v2063
    %s2073 = scalar_lea.vmem [#allocation6], 384
    %v2074 = vld [vmem:[%s2073] sm:$0xf]
    %v2075 = vld [vmem:[%s2073 + $0x4] sm:$0xf]
    %v2076 = vld [vmem:[%s2073 + $0x8] sm:$0xf]
    %v2077 = vld [vmem:[%s2073 + $0xc] sm:$0xf]
    %v2078 = vld [vmem:[%s2073 + $0x10] sm:$0xf]
    %v2079 = vld [vmem:[%s2073 + $0x14] sm:$0xf]
    %v2080 = vld [vmem:[%s2073 + $0x18] sm:$0xf]
    %v2081 = vld [vmem:[%s2073 + $0x1c] sm:$0xf]
    %v2082 = vld [vmem:[%s2073 + $0x20] sm:$0xf]
    %v2083 = vld [vmem:[%s2073 + $0x24] sm:$0xf]
    %v2084 = vld [vmem:[%s2073 + $0x28] sm:$0xf]
    %v2085 = vld [vmem:[%s2073 + $0x2c] sm:$0xf]
    %v2086 = vld [vmem:[%s2073 + $0x30] sm:$0xf]
    %v2087 = vld [vmem:[%s2073 + $0x34] sm:$0xf]
    %v2088 = vld [vmem:[%s2073 + $0x38] sm:$0xf]
    %v2089 = vld [vmem:[%s2073 + $0x3c] sm:$0xf]
    %v2106 = vunpack.c.l.b16 %v2074
    %v2107 = vunpack.c.l.b16 %v2075
    %v2108 = vunpack.c.l.b16 %v2076
    %v2109 = vunpack.c.l.b16 %v2077
    %v2110 = vunpack.c.l.b16 %v2078
    %v2111 = vunpack.c.l.b16 %v2079
    %v2112 = vunpack.c.l.b16 %v2080
    %v2113 = vunpack.c.l.b16 %v2081
    %v2114 = vunpack.c.l.b16 %v2082
    %v2115 = vunpack.c.l.b16 %v2083
    %v2116 = vunpack.c.l.b16 %v2084
    %v2117 = vunpack.c.l.b16 %v2085
    %v2118 = vunpack.c.l.b16 %v2086
    %v2119 = vunpack.c.l.b16 %v2087
    %v2120 = vunpack.c.l.b16 %v2088
    %v2121 = vunpack.c.l.b16 %v2089
    %v2122 = vpack.c.b16 %v2107, %v2106
    %v2123 = vpack.c.b16 %v2109, %v2108
    %v2124 = vpack.c.b16 %v2111, %v2110
    %v2125 = vpack.c.b16 %v2113, %v2112
    %v2126 = vpack.c.b16 %v2115, %v2114
    %v2127 = vpack.c.b16 %v2117, %v2116
    %v2128 = vpack.c.b16 %v2119, %v2118
    %v2129 = vpack.c.b16 %v2121, %v2120
    %2138 = vmatprep.subr.bf16.mxu0 0
    %2139 = vmatpush1.bf16.msra.mxu0 %v2129
    %2140 = vmatprep.subr.bf16.mxu0 0
    %2141 = vmatpush1.bf16.msra.mxu0 %v2128
    %2142 = vmatprep.subr.bf16.mxu0 0
    %2143 = vmatpush1.bf16.msra.mxu0 %v2127
    %2144 = vmatprep.subr.bf16.mxu0 0
    %2145 = vmatpush1.bf16.msra.mxu0 %v2126
    %2146 = vmatprep.subr.bf16.mxu0 0
    %2147 = vmatpush1.bf16.msra.mxu0 %v2125
    %2148 = vmatprep.subr.bf16.mxu0 0
    %2149 = vmatpush1.bf16.msra.mxu0 %v2124
    %2150 = vmatprep.subr.bf16.mxu0 0
    %2151 = vmatpush1.bf16.msra.mxu0 %v2123
    %2152 = vmatprep.subr.bf16.mxu0 0
    %2153 = vmatpush1.bf16.msra.mxu0 %v2122
    %2154 = vmatprep.subr.bf16.mxu0 0
    %2155 = vmatpush2.bf16.msra.mxu0 0
    %2156 = vmatprep.subr.bf16.mxu0 0
    %2157 = vmatpush2.bf16.msra.mxu0 0
    %2158 = vmatprep.subr.bf16.mxu0 0
    %2159 = vmatpush2.bf16.msra.mxu0 0
    %2160 = vmatprep.subr.bf16.mxu0 0
    %2161 = vmatpush2.bf16.msra.mxu0 0
    %2162 = vmatprep.subr.bf16.mxu0 0
    %2163 = vmatpush2.bf16.msra.mxu0 0
    %2164 = vmatprep.subr.bf16.mxu0 0
    %2165 = vmatpush2.bf16.msra.mxu0 0
    %2166 = vmatprep.subr.bf16.mxu0 0
    %2167 = vmatpush2.bf16.msra.mxu0 0
    %2168 = vmatprep.subr.bf16.mxu0 0
    %2169 = vmatpush2.bf16.msra.mxu0 0
    %2170 = vmatprep.mubr.bf16.mxu0 0
    %2171 = vmatmul.mubr.bf16.gmra.mxu0 %v2065
    %v2172 = vpop.f32.mrf.mxu0
    %v2173 = vadd.f32 0.0, %v2172
    %v2174 = vpop.f32.mrf.mxu0
    %v2175 = vpop.f32.mrf.mxu0
    %v2176 = vadd.f32 0.0, %v2175
    %v2177 = vpop.f32.mrf.mxu0
    %2178 = vmatprep.mubr.bf16.mxu0 0
    %2179 = vmatmul.mubr.bf16.gmra.mxu0 %v2066
    %v2180 = vpop.f32.mrf.mxu0
    %v2181 = vadd.f32 0.0, %v2180
    %v2182 = vpop.f32.mrf.mxu0
    %v2183 = vpop.f32.mrf.mxu0
    %v2184 = vadd.f32 0.0, %v2183
    %v2185 = vpop.f32.mrf.mxu0
    %2186 = vmatprep.mubr.bf16.mxu0 0
    %2187 = vmatmul.mubr.bf16.gmra.mxu0 %v2067
    %v2188 = vpop.f32.mrf.mxu0
    %v2189 = vadd.f32 0.0, %v2188
    %v2190 = vpop.f32.mrf.mxu0
    %v2191 = vpop.f32.mrf.mxu0
    %v2192 = vadd.f32 0.0, %v2191
    %v2193 = vpop.f32.mrf.mxu0
    %2194 = vmatprep.mubr.bf16.mxu0 0
    %2195 = vmatmul.mubr.bf16.gmra.mxu0 %v2068
    %v2196 = vpop.f32.mrf.mxu0
    %v2197 = vadd.f32 0.0, %v2196
    %v2198 = vpop.f32.mrf.mxu0
    %v2199 = vpop.f32.mrf.mxu0
    %v2200 = vadd.f32 0.0, %v2199
    %v2201 = vpop.f32.mrf.mxu0
    %2202 = vmatprep.mubr.bf16.mxu0 0
    %2203 = vmatmul.mubr.bf16.gmra.mxu0 %v2069
    %v2204 = vpop.f32.mrf.mxu0
    %v2205 = vadd.f32 0.0, %v2204
    %v2206 = vpop.f32.mrf.mxu0
    %v2207 = vpop.f32.mrf.mxu0
    %v2208 = vadd.f32 0.0, %v2207
    %v2209 = vpop.f32.mrf.mxu0
    %2210 = vmatprep.mubr.bf16.mxu0 0
    %2211 = vmatmul.mubr.bf16.gmra.mxu0 %v2070
    %v2212 = vpop.f32.mrf.mxu0
    %v2213 = vadd.f32 0.0, %v2212
    %v2214 = vpop.f32.mrf.mxu0
    %v2215 = vpop.f32.mrf.mxu0
    %v2216 = vadd.f32 0.0, %v2215
    %v2217 = vpop.f32.mrf.mxu0
    %2218 = vmatprep.mubr.bf16.mxu0 0
    %2219 = vmatmul.mubr.bf16.gmra.mxu0 %v2071
    %v2220 = vpop.f32.mrf.mxu0
    %v2221 = vadd.f32 0.0, %v2220
    %v2222 = vpop.f32.mrf.mxu0
    %v2223 = vpop.f32.mrf.mxu0
    %v2224 = vadd.f32 0.0, %v2223
    %v2225 = vpop.f32.mrf.mxu0
    %2226 = vmatprep.mubr.bf16.mxu0 0
    %2227 = vmatmul.mubr.bf16.gmra.mxu0 %v2072
    %v2228 = vpop.f32.mrf.mxu0
    %v2229 = vadd.f32 0.0, %v2228
    %v2230 = vpop.f32.mrf.mxu0
    %v2231 = vpop.f32.mrf.mxu0
    %v2232 = vadd.f32 0.0, %v2231
    %v2233 = vpop.f32.mrf.mxu0
    %2234 = vdwg.mxu0
    %v2235 = vpack.c.bf16 %v2176, %v2173
    %v2236 = vpack.c.bf16 %v2184, %v2181
    %v2237 = vpack.c.bf16 %v2192, %v2189
    %v2238 = vpack.c.bf16 %v2200, %v2197
    %v2239 = vpack.c.bf16 %v2208, %v2205
    %v2240 = vpack.c.bf16 %v2216, %v2213
    %v2241 = vpack.c.bf16 %v2224, %v2221
    %v2242 = vpack.c.bf16 %v2232, %v2229
    %s2243 = scalar_lea.vmem [#allocation7], 6
    %v2244 = vld [vmem:[%s2243] sm:$0x1]
    %v2246 = vlaneseq
    %v2247 = vshrl.u32 %v2246, 7
    %v2248 = vsub.s32 0, %v2247
    %v2249 = vrot.slane %v2244, %v2248
    %2251 = vmatprep.subr.bf16.mxu0 0
    %2252 = vmatpush1.bf16.msra.mxu0 %v2242
    %2253 = vmatprep.subr.bf16.mxu0 0
    %2254 = vmatpush1.bf16.msra.mxu0 %v2241
    %2255 = vmatprep.subr.bf16.mxu0 0
    %2256 = vmatpush1.bf16.msra.mxu0 %v2240
    %2257 = vmatprep.subr.bf16.mxu0 0
    %2258 = vmatpush1.bf16.msra.mxu0 %v2239
    %2259 = vmatprep.subr.bf16.mxu0 0
    %2260 = vmatpush1.bf16.msra.mxu0 %v2238
    %2261 = vmatprep.subr.bf16.mxu0 0
    %2262 = vmatpush1.bf16.msra.mxu0 %v2237
    %2263 = vmatprep.subr.bf16.mxu0 0
    %2264 = vmatpush1.bf16.msra.mxu0 %v2236
    %2265 = vmatprep.subr.bf16.mxu0 0
    %2266 = vmatpush1.bf16.msra.mxu0 %v2235
    %2267 = vmatprep.subr.bf16.mxu0 0
    %2268 = vmatpush2.bf16.msra.mxu0 0
    %2269 = vmatprep.subr.bf16.mxu0 0
    %2270 = vmatpush2.bf16.msra.mxu0 0
    %2271 = vmatprep.subr.bf16.mxu0 0
    %2272 = vmatpush2.bf16.msra.mxu0 0
    %2273 = vmatprep.subr.bf16.mxu0 0
    %2274 = vmatpush2.bf16.msra.mxu0 0
    %2275 = vmatprep.subr.bf16.mxu0 0
    %2276 = vmatpush2.bf16.msra.mxu0 0
    %2277 = vmatprep.subr.bf16.mxu0 0
    %2278 = vmatpush2.bf16.msra.mxu0 0
    %2279 = vmatprep.subr.bf16.mxu0 0
    %2280 = vmatpush2.bf16.msra.mxu0 0
    %2281 = vmatprep.subr.bf16.mxu0 0
    %2282 = vmatpush2.bf16.msra.mxu0 0
    %2283 = vmatprep.mubr.bf16.mxu0 0
    %2284 = vmatmul.mubr.bf16.gmra.mxu0 %v137
    %v2285 = vpop.f32.mrf.mxu0
    %v2286 = vadd.f32 %v2249, %v2285
    %v2287 = vpop.f32.mrf.mxu0
    %v2288 = vpop.f32.mrf.mxu0
    %v2289 = vadd.f32 %v2249, %v2288
    %v2290 = vpop.f32.mrf.mxu0
    %2291 = vmatprep.mubr.bf16.mxu0 0
    %2292 = vmatmul.mubr.bf16.gmra.mxu0 %v138
    %v2293 = vpop.f32.mrf.mxu0
    %v2294 = vadd.f32 %v2249, %v2293
    %v2295 = vpop.f32.mrf.mxu0
    %v2296 = vpop.f32.mrf.mxu0
    %v2297 = vadd.f32 %v2249, %v2296
    %v2298 = vpop.f32.mrf.mxu0
    %2299 = vmatprep.mubr.bf16.mxu0 0
    %2300 = vmatmul.mubr.bf16.gmra.mxu0 %v139
    %v2301 = vpop.f32.mrf.mxu0
    %v2302 = vadd.f32 %v2249, %v2301
    %v2303 = vpop.f32.mrf.mxu0
    %v2304 = vpop.f32.mrf.mxu0
    %v2305 = vadd.f32 %v2249, %v2304
    %v2306 = vpop.f32.mrf.mxu0
    %2307 = vmatprep.mubr.bf16.mxu0 0
    %2308 = vmatmul.mubr.bf16.gmra.mxu0 %v140
    %v2309 = vpop.f32.mrf.mxu0
    %v2310 = vadd.f32 %v2249, %v2309
    %v2311 = vpop.f32.mrf.mxu0
    %v2312 = vpop.f32.mrf.mxu0
    %v2313 = vadd.f32 %v2249, %v2312
    %v2314 = vpop.f32.mrf.mxu0
    %2315 = vmatprep.mubr.bf16.mxu0 0
    %2316 = vmatmul.mubr.bf16.gmra.mxu0 %v141
    %v2317 = vpop.f32.mrf.mxu0
    %v2318 = vadd.f32 %v2249, %v2317
    %v2319 = vpop.f32.mrf.mxu0
    %v2320 = vpop.f32.mrf.mxu0
    %v2321 = vadd.f32 %v2249, %v2320
    %v2322 = vpop.f32.mrf.mxu0
    %2323 = vmatprep.mubr.bf16.mxu0 0
    %2324 = vmatmul.mubr.bf16.gmra.mxu0 %v142
    %v2325 = vpop.f32.mrf.mxu0
    %v2326 = vadd.f32 %v2249, %v2325
    %v2327 = vpop.f32.mrf.mxu0
    %v2328 = vpop.f32.mrf.mxu0
    %v2329 = vadd.f32 %v2249, %v2328
    %v2330 = vpop.f32.mrf.mxu0
    %2331 = vmatprep.mubr.bf16.mxu0 0
    %2332 = vmatmul.mubr.bf16.gmra.mxu0 %v143
    %v2333 = vpop.f32.mrf.mxu0
    %v2334 = vadd.f32 %v2249, %v2333
    %v2335 = vpop.f32.mrf.mxu0
    %v2336 = vpop.f32.mrf.mxu0
    %v2337 = vadd.f32 %v2249, %v2336
    %v2338 = vpop.f32.mrf.mxu0
    %2339 = vmatprep.mubr.bf16.mxu0 0
    %2340 = vmatmul.mubr.bf16.gmra.mxu0 %v144
    %v2341 = vpop.f32.mrf.mxu0
    %v2342 = vadd.f32 %v2249, %v2341
    %v2343 = vpop.f32.mrf.mxu0
    %v2344 = vpop.f32.mrf.mxu0
    %v2345 = vadd.f32 %v2249, %v2344
    %v2346 = vpop.f32.mrf.mxu0
    %2347 = vdwg.mxu0
    %v2348 = vmax.f32 %v2286, 0.0
    %v2349 = vmax.f32 %v2289, 0.0
    %v2350 = vmax.f32 %v2294, 0.0
    %v2351 = vmax.f32 %v2297, 0.0
    %v2352 = vmax.f32 %v2302, 0.0
    %v2353 = vmax.f32 %v2305, 0.0
    %v2354 = vmax.f32 %v2310, 0.0
    %v2355 = vmax.f32 %v2313, 0.0
    %v2356 = vmax.f32 %v2318, 0.0
    %v2357 = vmax.f32 %v2321, 0.0
    %v2358 = vmax.f32 %v2326, 0.0
    %v2359 = vmax.f32 %v2329, 0.0
    %v2360 = vmax.f32 %v2334, 0.0
    %v2361 = vmax.f32 %v2337, 0.0
    %v2362 = vmax.f32 %v2342, 0.0
    %v2363 = vmax.f32 %v2345, 0.0
    %v2364 = vadd.f32 %v2348, %v2049
    %v2365 = vadd.f32 %v2349, %v2050
    %v2366 = vadd.f32 %v2350, %v2051
    %v2367 = vadd.f32 %v2351, %v2052
    %v2368 = vadd.f32 %v2352, %v2053
    %v2369 = vadd.f32 %v2353, %v2054
    %v2370 = vadd.f32 %v2354, %v2055
    %v2371 = vadd.f32 %v2355, %v2056
    %v2372 = vadd.f32 %v2356, %v2057
    %v2373 = vadd.f32 %v2357, %v2058
    %v2374 = vadd.f32 %v2358, %v2059
    %v2375 = vadd.f32 %v2359, %v2060
    %v2376 = vadd.f32 %v2360, %v2061
    %v2377 = vadd.f32 %v2361, %v2062
    %v2378 = vadd.f32 %v2362, %v2063
    %v2379 = vadd.f32 %v2363, %v2064
    %v2380 = vpack.c.bf16 %v2365, %v2364
    %v2381 = vpack.c.bf16 %v2367, %v2366
    %v2382 = vpack.c.bf16 %v2369, %v2368
    %v2383 = vpack.c.bf16 %v2371, %v2370
    %v2384 = vpack.c.bf16 %v2373, %v2372
    %v2385 = vpack.c.bf16 %v2375, %v2374
    %v2386 = vpack.c.bf16 %v2377, %v2376
    %v2387 = vpack.c.bf16 %v2379, %v2378
    %s2388 = scalar_lea.vmem [#allocation6], 448
    %v2389 = vld [vmem:[%s2388] sm:$0xf]
    %v2390 = vld [vmem:[%s2388 + $0x4] sm:$0xf]
    %v2391 = vld [vmem:[%s2388 + $0x8] sm:$0xf]
    %v2392 = vld [vmem:[%s2388 + $0xc] sm:$0xf]
    %v2393 = vld [vmem:[%s2388 + $0x10] sm:$0xf]
    %v2394 = vld [vmem:[%s2388 + $0x14] sm:$0xf]
    %v2395 = vld [vmem:[%s2388 + $0x18] sm:$0xf]
    %v2396 = vld [vmem:[%s2388 + $0x1c] sm:$0xf]
    %v2397 = vld [vmem:[%s2388 + $0x20] sm:$0xf]
    %v2398 = vld [vmem:[%s2388 + $0x24] sm:$0xf]
    %v2399 = vld [vmem:[%s2388 + $0x28] sm:$0xf]
    %v2400 = vld [vmem:[%s2388 + $0x2c] sm:$0xf]
    %v2401 = vld [vmem:[%s2388 + $0x30] sm:$0xf]
    %v2402 = vld [vmem:[%s2388 + $0x34] sm:$0xf]
    %v2403 = vld [vmem:[%s2388 + $0x38] sm:$0xf]
    %v2404 = vld [vmem:[%s2388 + $0x3c] sm:$0xf]
    %v2421 = vunpack.c.l.b16 %v2389
    %v2422 = vunpack.c.l.b16 %v2390
    %v2423 = vunpack.c.l.b16 %v2391
    %v2424 = vunpack.c.l.b16 %v2392
    %v2425 = vunpack.c.l.b16 %v2393
    %v2426 = vunpack.c.l.b16 %v2394
    %v2427 = vunpack.c.l.b16 %v2395
    %v2428 = vunpack.c.l.b16 %v2396
    %v2429 = vunpack.c.l.b16 %v2397
    %v2430 = vunpack.c.l.b16 %v2398
    %v2431 = vunpack.c.l.b16 %v2399
    %v2432 = vunpack.c.l.b16 %v2400
    %v2433 = vunpack.c.l.b16 %v2401
    %v2434 = vunpack.c.l.b16 %v2402
    %v2435 = vunpack.c.l.b16 %v2403
    %v2436 = vunpack.c.l.b16 %v2404
    %v2437 = vpack.c.b16 %v2422, %v2421
    %v2438 = vpack.c.b16 %v2424, %v2423
    %v2439 = vpack.c.b16 %v2426, %v2425
    %v2440 = vpack.c.b16 %v2428, %v2427
    %v2441 = vpack.c.b16 %v2430, %v2429
    %v2442 = vpack.c.b16 %v2432, %v2431
    %v2443 = vpack.c.b16 %v2434, %v2433
    %v2444 = vpack.c.b16 %v2436, %v2435
    %2453 = vmatprep.subr.bf16.mxu0 0
    %2454 = vmatpush1.bf16.msra.mxu0 %v2444
    %2455 = vmatprep.subr.bf16.mxu0 0
    %2456 = vmatpush1.bf16.msra.mxu0 %v2443
    %2457 = vmatprep.subr.bf16.mxu0 0
    %2458 = vmatpush1.bf16.msra.mxu0 %v2442
    %2459 = vmatprep.subr.bf16.mxu0 0
    %2460 = vmatpush1.bf16.msra.mxu0 %v2441
    %2461 = vmatprep.subr.bf16.mxu0 0
    %2462 = vmatpush1.bf16.msra.mxu0 %v2440
    %2463 = vmatprep.subr.bf16.mxu0 0
    %2464 = vmatpush1.bf16.msra.mxu0 %v2439
    %2465 = vmatprep.subr.bf16.mxu0 0
    %2466 = vmatpush1.bf16.msra.mxu0 %v2438
    %2467 = vmatprep.subr.bf16.mxu0 0
    %2468 = vmatpush1.bf16.msra.mxu0 %v2437
    %2469 = vmatprep.subr.bf16.mxu0 0
    %2470 = vmatpush2.bf16.msra.mxu0 0
    %2471 = vmatprep.subr.bf16.mxu0 0
    %2472 = vmatpush2.bf16.msra.mxu0 0
    %2473 = vmatprep.subr.bf16.mxu0 0
    %2474 = vmatpush2.bf16.msra.mxu0 0
    %2475 = vmatprep.subr.bf16.mxu0 0
    %2476 = vmatpush2.bf16.msra.mxu0 0
    %2477 = vmatprep.subr.bf16.mxu0 0
    %2478 = vmatpush2.bf16.msra.mxu0 0
    %2479 = vmatprep.subr.bf16.mxu0 0
    %2480 = vmatpush2.bf16.msra.mxu0 0
    %2481 = vmatprep.subr.bf16.mxu0 0
    %2482 = vmatpush2.bf16.msra.mxu0 0
    %2483 = vmatprep.subr.bf16.mxu0 0
    %2484 = vmatpush2.bf16.msra.mxu0 0
    %2485 = vmatprep.mubr.bf16.mxu0 0
    %2486 = vmatmul.mubr.bf16.gmra.mxu0 %v2380
    %v2487 = vpop.f32.mrf.mxu0
    %v2488 = vadd.f32 0.0, %v2487
    %v2489 = vpop.f32.mrf.mxu0
    %v2490 = vpop.f32.mrf.mxu0
    %v2491 = vadd.f32 0.0, %v2490
    %v2492 = vpop.f32.mrf.mxu0
    %2493 = vmatprep.mubr.bf16.mxu0 0
    %2494 = vmatmul.mubr.bf16.gmra.mxu0 %v2381
    %v2495 = vpop.f32.mrf.mxu0
    %v2496 = vadd.f32 0.0, %v2495
    %v2497 = vpop.f32.mrf.mxu0
    %v2498 = vpop.f32.mrf.mxu0
    %v2499 = vadd.f32 0.0, %v2498
    %v2500 = vpop.f32.mrf.mxu0
    %2501 = vmatprep.mubr.bf16.mxu0 0
    %2502 = vmatmul.mubr.bf16.gmra.mxu0 %v2382
    %v2503 = vpop.f32.mrf.mxu0
    %v2504 = vadd.f32 0.0, %v2503
    %v2505 = vpop.f32.mrf.mxu0
    %v2506 = vpop.f32.mrf.mxu0
    %v2507 = vadd.f32 0.0, %v2506
    %v2508 = vpop.f32.mrf.mxu0
    %2509 = vmatprep.mubr.bf16.mxu0 0
    %2510 = vmatmul.mubr.bf16.gmra.mxu0 %v2383
    %v2511 = vpop.f32.mrf.mxu0
    %v2512 = vadd.f32 0.0, %v2511
    %v2513 = vpop.f32.mrf.mxu0
    %v2514 = vpop.f32.mrf.mxu0
    %v2515 = vadd.f32 0.0, %v2514
    %v2516 = vpop.f32.mrf.mxu0
    %2517 = vmatprep.mubr.bf16.mxu0 0
    %2518 = vmatmul.mubr.bf16.gmra.mxu0 %v2384
    %v2519 = vpop.f32.mrf.mxu0
    %v2520 = vadd.f32 0.0, %v2519
    %v2521 = vpop.f32.mrf.mxu0
    %v2522 = vpop.f32.mrf.mxu0
    %v2523 = vadd.f32 0.0, %v2522
    %v2524 = vpop.f32.mrf.mxu0
    %2525 = vmatprep.mubr.bf16.mxu0 0
    %2526 = vmatmul.mubr.bf16.gmra.mxu0 %v2385
    %v2527 = vpop.f32.mrf.mxu0
    %v2528 = vadd.f32 0.0, %v2527
    %v2529 = vpop.f32.mrf.mxu0
    %v2530 = vpop.f32.mrf.mxu0
    %v2531 = vadd.f32 0.0, %v2530
    %v2532 = vpop.f32.mrf.mxu0
    %2533 = vmatprep.mubr.bf16.mxu0 0
    %2534 = vmatmul.mubr.bf16.gmra.mxu0 %v2386
    %v2535 = vpop.f32.mrf.mxu0
    %v2536 = vadd.f32 0.0, %v2535
    %v2537 = vpop.f32.mrf.mxu0
    %v2538 = vpop.f32.mrf.mxu0
    %v2539 = vadd.f32 0.0, %v2538
    %v2540 = vpop.f32.mrf.mxu0
    %2541 = vmatprep.mubr.bf16.mxu0 0
    %2542 = vmatmul.mubr.bf16.gmra.mxu0 %v2387
    %v2543 = vpop.f32.mrf.mxu0
    %v2544 = vadd.f32 0.0, %v2543
    %v2545 = vpop.f32.mrf.mxu0
    %v2546 = vpop.f32.mrf.mxu0
    %v2547 = vadd.f32 0.0, %v2546
    %v2548 = vpop.f32.mrf.mxu0
    %2549 = vdwg.mxu0
    %v2550 = vpack.c.bf16 %v2491, %v2488
    %v2551 = vpack.c.bf16 %v2499, %v2496
    %v2552 = vpack.c.bf16 %v2507, %v2504
    %v2553 = vpack.c.bf16 %v2515, %v2512
    %v2554 = vpack.c.bf16 %v2523, %v2520
    %v2555 = vpack.c.bf16 %v2531, %v2528
    %v2556 = vpack.c.bf16 %v2539, %v2536
    %v2557 = vpack.c.bf16 %v2547, %v2544
    %s2558 = scalar_lea.vmem [#allocation7], 7
    %v2559 = vld [vmem:[%s2558] sm:$0x1]
    %v2561 = vlaneseq
    %v2562 = vshrl.u32 %v2561, 7
    %v2563 = vsub.s32 0, %v2562
    %v2564 = vrot.slane %v2559, %v2563
    %2566 = vmatprep.subr.bf16.mxu0 0
    %2567 = vmatpush1.bf16.msra.mxu0 %v2557
    %2568 = vmatprep.subr.bf16.mxu0 0
    %2569 = vmatpush1.bf16.msra.mxu0 %v2556
    %2570 = vmatprep.subr.bf16.mxu0 0
    %2571 = vmatpush1.bf16.msra.mxu0 %v2555
    %2572 = vmatprep.subr.bf16.mxu0 0
    %2573 = vmatpush1.bf16.msra.mxu0 %v2554
    %2574 = vmatprep.subr.bf16.mxu0 0
    %2575 = vmatpush1.bf16.msra.mxu0 %v2553
    %2576 = vmatprep.subr.bf16.mxu0 0
    %2577 = vmatpush1.bf16.msra.mxu0 %v2552
    %2578 = vmatprep.subr.bf16.mxu0 0
    %2579 = vmatpush1.bf16.msra.mxu0 %v2551
    %2580 = vmatprep.subr.bf16.mxu0 0
    %2581 = vmatpush1.bf16.msra.mxu0 %v2550
    %2582 = vmatprep.subr.bf16.mxu0 0
    %2583 = vmatpush2.bf16.msra.mxu0 0
    %2584 = vmatprep.subr.bf16.mxu0 0
    %2585 = vmatpush2.bf16.msra.mxu0 0
    %2586 = vmatprep.subr.bf16.mxu0 0
    %2587 = vmatpush2.bf16.msra.mxu0 0
    %2588 = vmatprep.subr.bf16.mxu0 0
    %2589 = vmatpush2.bf16.msra.mxu0 0
    %2590 = vmatprep.subr.bf16.mxu0 0
    %2591 = vmatpush2.bf16.msra.mxu0 0
    %2592 = vmatprep.subr.bf16.mxu0 0
    %2593 = vmatpush2.bf16.msra.mxu0 0
    %2594 = vmatprep.subr.bf16.mxu0 0
    %2595 = vmatpush2.bf16.msra.mxu0 0
    %2596 = vmatprep.subr.bf16.mxu0 0
    %2597 = vmatpush2.bf16.msra.mxu0 0
    %2598 = vmatprep.mubr.bf16.mxu0 0
    %2599 = vmatmul.mubr.bf16.gmra.mxu0 %v137
    %v2600 = vpop.f32.mrf.mxu0
    %v2601 = vadd.f32 %v2564, %v2600
    %v2602 = vpop.f32.mrf.mxu0
    %v2603 = vpop.f32.mrf.mxu0
    %v2604 = vadd.f32 %v2564, %v2603
    %v2605 = vpop.f32.mrf.mxu0
    %2606 = vmatprep.mubr.bf16.mxu0 0
    %2607 = vmatmul.mubr.bf16.gmra.mxu0 %v138
    %v2608 = vpop.f32.mrf.mxu0
    %v2609 = vadd.f32 %v2564, %v2608
    %v2610 = vpop.f32.mrf.mxu0
    %v2611 = vpop.f32.mrf.mxu0
    %v2612 = vadd.f32 %v2564, %v2611
    %v2613 = vpop.f32.mrf.mxu0
    %2614 = vmatprep.mubr.bf16.mxu0 0
    %2615 = vmatmul.mubr.bf16.gmra.mxu0 %v139
    %v2616 = vpop.f32.mrf.mxu0
    %v2617 = vadd.f32 %v2564, %v2616
    %v2618 = vpop.f32.mrf.mxu0
    %v2619 = vpop.f32.mrf.mxu0
    %v2620 = vadd.f32 %v2564, %v2619
    %v2621 = vpop.f32.mrf.mxu0
    %2622 = vmatprep.mubr.bf16.mxu0 0
    %2623 = vmatmul.mubr.bf16.gmra.mxu0 %v140
    %v2624 = vpop.f32.mrf.mxu0
    %v2625 = vadd.f32 %v2564, %v2624
    %v2626 = vpop.f32.mrf.mxu0
    %v2627 = vpop.f32.mrf.mxu0
    %v2628 = vadd.f32 %v2564, %v2627
    %v2629 = vpop.f32.mrf.mxu0
    %2630 = vmatprep.mubr.bf16.mxu0 0
    %2631 = vmatmul.mubr.bf16.gmra.mxu0 %v141
    %v2632 = vpop.f32.mrf.mxu0
    %v2633 = vadd.f32 %v2564, %v2632
    %v2634 = vpop.f32.mrf.mxu0
    %v2635 = vpop.f32.mrf.mxu0
    %v2636 = vadd.f32 %v2564, %v2635
    %v2637 = vpop.f32.mrf.mxu0
    %2638 = vmatprep.mubr.bf16.mxu0 0
    %2639 = vmatmul.mubr.bf16.gmra.mxu0 %v142
    %v2640 = vpop.f32.mrf.mxu0
    %v2641 = vadd.f32 %v2564, %v2640
    %v2642 = vpop.f32.mrf.mxu0
    %v2643 = vpop.f32.mrf.mxu0
    %v2644 = vadd.f32 %v2564, %v2643
    %v2645 = vpop.f32.mrf.mxu0
    %2646 = vmatprep.mubr.bf16.mxu0 0
    %2647 = vmatmul.mubr.bf16.gmra.mxu0 %v143
    %v2648 = vpop.f32.mrf.mxu0
    %v2649 = vadd.f32 %v2564, %v2648
    %v2650 = vpop.f32.mrf.mxu0
    %v2651 = vpop.f32.mrf.mxu0
    %v2652 = vadd.f32 %v2564, %v2651
    %v2653 = vpop.f32.mrf.mxu0
    %2654 = vmatprep.mubr.bf16.mxu0 0
    %2655 = vmatmul.mubr.bf16.gmra.mxu0 %v144
    %v2656 = vpop.f32.mrf.mxu0
    %v2657 = vadd.f32 %v2564, %v2656
    %v2658 = vpop.f32.mrf.mxu0
    %v2659 = vpop.f32.mrf.mxu0
    %v2660 = vadd.f32 %v2564, %v2659
    %v2661 = vpop.f32.mrf.mxu0
    %2662 = vdwg.mxu0
    %v2663 = vmax.f32 %v2601, 0.0
    %v2664 = vmax.f32 %v2604, 0.0
    %v2665 = vmax.f32 %v2609, 0.0
    %v2666 = vmax.f32 %v2612, 0.0
    %v2667 = vmax.f32 %v2617, 0.0
    %v2668 = vmax.f32 %v2620, 0.0
    %v2669 = vmax.f32 %v2625, 0.0
    %v2670 = vmax.f32 %v2628, 0.0
    %v2671 = vmax.f32 %v2633, 0.0
    %v2672 = vmax.f32 %v2636, 0.0
    %v2673 = vmax.f32 %v2641, 0.0
    %v2674 = vmax.f32 %v2644, 0.0
    %v2675 = vmax.f32 %v2649, 0.0
    %v2676 = vmax.f32 %v2652, 0.0
    %v2677 = vmax.f32 %v2657, 0.0
    %v2678 = vmax.f32 %v2660, 0.0
    %v2679 = vadd.f32 %v2663, %v2364
    %v2680 = vadd.f32 %v2664, %v2365
    %v2681 = vadd.f32 %v2665, %v2366
    %v2682 = vadd.f32 %v2666, %v2367
    %v2683 = vadd.f32 %v2667, %v2368
    %v2684 = vadd.f32 %v2668, %v2369
    %v2685 = vadd.f32 %v2669, %v2370
    %v2686 = vadd.f32 %v2670, %v2371
    %v2687 = vadd.f32 %v2671, %v2372
    %v2688 = vadd.f32 %v2672, %v2373
    %v2689 = vadd.f32 %v2673, %v2374
    %v2690 = vadd.f32 %v2674, %v2375
    %v2691 = vadd.f32 %v2675, %v2376
    %v2692 = vadd.f32 %v2676, %v2377
    %v2693 = vadd.f32 %v2677, %v2378
    %v2694 = vadd.f32 %v2678, %v2379
    %v2695 = vpack.c.bf16 %v2680, %v2679
    %v2696 = vpack.c.bf16 %v2682, %v2681
    %v2697 = vpack.c.bf16 %v2684, %v2683
    %v2698 = vpack.c.bf16 %v2686, %v2685
    %v2699 = vpack.c.bf16 %v2688, %v2687
    %v2700 = vpack.c.bf16 %v2690, %v2689
    %v2701 = vpack.c.bf16 %v2692, %v2691
    %v2702 = vpack.c.bf16 %v2694, %v2693
    %s2703 = scalar_lea.vmem [#allocation6], 512
    %v2704 = vld [vmem:[%s2703] sm:$0xf]
    %v2705 = vld [vmem:[%s2703 + $0x4] sm:$0xf]
    %v2706 = vld [vmem:[%s2703 + $0x8] sm:$0xf]
    %v2707 = vld [vmem:[%s2703 + $0xc] sm:$0xf]
    %v2708 = vld [vmem:[%s2703 + $0x10] sm:$0xf]
    %v2709 = vld [vmem:[%s2703 + $0x14] sm:$0xf]
    %v2710 = vld [vmem:[%s2703 + $0x18] sm:$0xf]
    %v2711 = vld [vmem:[%s2703 + $0x1c] sm:$0xf]
    %v2712 = vld [vmem:[%s2703 + $0x20] sm:$0xf]
    %v2713 = vld [vmem:[%s2703 + $0x24] sm:$0xf]
    %v2714 = vld [vmem:[%s2703 + $0x28] sm:$0xf]
    %v2715 = vld [vmem:[%s2703 + $0x2c] sm:$0xf]
    %v2716 = vld [vmem:[%s2703 + $0x30] sm:$0xf]
    %v2717 = vld [vmem:[%s2703 + $0x34] sm:$0xf]
    %v2718 = vld [vmem:[%s2703 + $0x38] sm:$0xf]
    %v2719 = vld [vmem:[%s2703 + $0x3c] sm:$0xf]
    %v2736 = vunpack.c.l.b16 %v2704
    %v2737 = vunpack.c.l.b16 %v2705
    %v2738 = vunpack.c.l.b16 %v2706
    %v2739 = vunpack.c.l.b16 %v2707
    %v2740 = vunpack.c.l.b16 %v2708
    %v2741 = vunpack.c.l.b16 %v2709
    %v2742 = vunpack.c.l.b16 %v2710
    %v2743 = vunpack.c.l.b16 %v2711
    %v2744 = vunpack.c.l.b16 %v2712
    %v2745 = vunpack.c.l.b16 %v2713
    %v2746 = vunpack.c.l.b16 %v2714
    %v2747 = vunpack.c.l.b16 %v2715
    %v2748 = vunpack.c.l.b16 %v2716
    %v2749 = vunpack.c.l.b16 %v2717
    %v2750 = vunpack.c.l.b16 %v2718
    %v2751 = vunpack.c.l.b16 %v2719
    %v2752 = vpack.c.b16 %v2737, %v2736
    %v2753 = vpack.c.b16 %v2739, %v2738
    %v2754 = vpack.c.b16 %v2741, %v2740
    %v2755 = vpack.c.b16 %v2743, %v2742
    %v2756 = vpack.c.b16 %v2745, %v2744
    %v2757 = vpack.c.b16 %v2747, %v2746
    %v2758 = vpack.c.b16 %v2749, %v2748
    %v2759 = vpack.c.b16 %v2751, %v2750
    %2768 = vmatprep.subr.bf16.mxu0 0
    %2769 = vmatpush1.bf16.msra.mxu0 %v2759
    %2770 = vmatprep.subr.bf16.mxu0 0
    %2771 = vmatpush1.bf16.msra.mxu0 %v2758
    %2772 = vmatprep.subr.bf16.mxu0 0
    %2773 = vmatpush1.bf16.msra.mxu0 %v2757
    %2774 = vmatprep.subr.bf16.mxu0 0
    %2775 = vmatpush1.bf16.msra.mxu0 %v2756
    %2776 = vmatprep.subr.bf16.mxu0 0
    %2777 = vmatpush1.bf16.msra.mxu0 %v2755
    %2778 = vmatprep.subr.bf16.mxu0 0
    %2779 = vmatpush1.bf16.msra.mxu0 %v2754
    %2780 = vmatprep.subr.bf16.mxu0 0
    %2781 = vmatpush1.bf16.msra.mxu0 %v2753
    %2782 = vmatprep.subr.bf16.mxu0 0
    %2783 = vmatpush1.bf16.msra.mxu0 %v2752
    %2784 = vmatprep.subr.bf16.mxu0 0
    %2785 = vmatpush2.bf16.msra.mxu0 0
    %2786 = vmatprep.subr.bf16.mxu0 0
    %2787 = vmatpush2.bf16.msra.mxu0 0
    %2788 = vmatprep.subr.bf16.mxu0 0
    %2789 = vmatpush2.bf16.msra.mxu0 0
    %2790 = vmatprep.subr.bf16.mxu0 0
    %2791 = vmatpush2.bf16.msra.mxu0 0
    %2792 = vmatprep.subr.bf16.mxu0 0
    %2793 = vmatpush2.bf16.msra.mxu0 0
    %2794 = vmatprep.subr.bf16.mxu0 0
    %2795 = vmatpush2.bf16.msra.mxu0 0
    %2796 = vmatprep.subr.bf16.mxu0 0
    %2797 = vmatpush2.bf16.msra.mxu0 0
    %2798 = vmatprep.subr.bf16.mxu0 0
    %2799 = vmatpush2.bf16.msra.mxu0 0
    %2800 = vmatprep.mubr.bf16.mxu0 0
    %2801 = vmatmul.mubr.bf16.gmra.mxu0 %v2695
    %v2802 = vpop.f32.mrf.mxu0
    %v2803 = vadd.f32 0.0, %v2802
    %v2804 = vpop.f32.mrf.mxu0
    %v2805 = vpop.f32.mrf.mxu0
    %v2806 = vadd.f32 0.0, %v2805
    %v2807 = vpop.f32.mrf.mxu0
    %2808 = vmatprep.mubr.bf16.mxu0 0
    %2809 = vmatmul.mubr.bf16.gmra.mxu0 %v2696
    %v2810 = vpop.f32.mrf.mxu0
    %v2811 = vadd.f32 0.0, %v2810
    %v2812 = vpop.f32.mrf.mxu0
    %v2813 = vpop.f32.mrf.mxu0
    %v2814 = vadd.f32 0.0, %v2813
    %v2815 = vpop.f32.mrf.mxu0
    %2816 = vmatprep.mubr.bf16.mxu0 0
    %2817 = vmatmul.mubr.bf16.gmra.mxu0 %v2697
    %v2818 = vpop.f32.mrf.mxu0
    %v2819 = vadd.f32 0.0, %v2818
    %v2820 = vpop.f32.mrf.mxu0
    %v2821 = vpop.f32.mrf.mxu0
    %v2822 = vadd.f32 0.0, %v2821
    %v2823 = vpop.f32.mrf.mxu0
    %2824 = vmatprep.mubr.bf16.mxu0 0
    %2825 = vmatmul.mubr.bf16.gmra.mxu0 %v2698
    %v2826 = vpop.f32.mrf.mxu0
    %v2827 = vadd.f32 0.0, %v2826
    %v2828 = vpop.f32.mrf.mxu0
    %v2829 = vpop.f32.mrf.mxu0
    %v2830 = vadd.f32 0.0, %v2829
    %v2831 = vpop.f32.mrf.mxu0
    %2832 = vmatprep.mubr.bf16.mxu0 0
    %2833 = vmatmul.mubr.bf16.gmra.mxu0 %v2699
    %v2834 = vpop.f32.mrf.mxu0
    %v2835 = vadd.f32 0.0, %v2834
    %v2836 = vpop.f32.mrf.mxu0
    %v2837 = vpop.f32.mrf.mxu0
    %v2838 = vadd.f32 0.0, %v2837
    %v2839 = vpop.f32.mrf.mxu0
    %2840 = vmatprep.mubr.bf16.mxu0 0
    %2841 = vmatmul.mubr.bf16.gmra.mxu0 %v2700
    %v2842 = vpop.f32.mrf.mxu0
    %v2843 = vadd.f32 0.0, %v2842
    %v2844 = vpop.f32.mrf.mxu0
    %v2845 = vpop.f32.mrf.mxu0
    %v2846 = vadd.f32 0.0, %v2845
    %v2847 = vpop.f32.mrf.mxu0
    %2848 = vmatprep.mubr.bf16.mxu0 0
    %2849 = vmatmul.mubr.bf16.gmra.mxu0 %v2701
    %v2850 = vpop.f32.mrf.mxu0
    %v2851 = vadd.f32 0.0, %v2850
    %v2852 = vpop.f32.mrf.mxu0
    %v2853 = vpop.f32.mrf.mxu0
    %v2854 = vadd.f32 0.0, %v2853
    %v2855 = vpop.f32.mrf.mxu0
    %2856 = vmatprep.mubr.bf16.mxu0 0
    %2857 = vmatmul.mubr.bf16.gmra.mxu0 %v2702
    %v2858 = vpop.f32.mrf.mxu0
    %v2859 = vadd.f32 0.0, %v2858
    %v2860 = vpop.f32.mrf.mxu0
    %v2861 = vpop.f32.mrf.mxu0
    %v2862 = vadd.f32 0.0, %v2861
    %v2863 = vpop.f32.mrf.mxu0
    %2864 = vdwg.mxu0
    %v2865 = vpack.c.bf16 %v2806, %v2803
    %v2866 = vpack.c.bf16 %v2814, %v2811
    %v2867 = vpack.c.bf16 %v2822, %v2819
    %v2868 = vpack.c.bf16 %v2830, %v2827
    %v2869 = vpack.c.bf16 %v2838, %v2835
    %v2870 = vpack.c.bf16 %v2846, %v2843
    %v2871 = vpack.c.bf16 %v2854, %v2851
    %v2872 = vpack.c.bf16 %v2862, %v2859
    %s2873 = scalar_lea.vmem [#allocation7], 8
    %v2874 = vld [vmem:[%s2873] sm:$0x1]
    %v2876 = vlaneseq
    %v2877 = vshrl.u32 %v2876, 7
    %v2878 = vsub.s32 0, %v2877
    %v2879 = vrot.slane %v2874, %v2878
    %2881 = vmatprep.subr.bf16.mxu0 0
    %2882 = vmatpush1.bf16.msra.mxu0 %v2872
    %2883 = vmatprep.subr.bf16.mxu0 0
    %2884 = vmatpush1.bf16.msra.mxu0 %v2871
    %2885 = vmatprep.subr.bf16.mxu0 0
    %2886 = vmatpush1.bf16.msra.mxu0 %v2870
    %2887 = vmatprep.subr.bf16.mxu0 0
    %2888 = vmatpush1.bf16.msra.mxu0 %v2869
    %2889 = vmatprep.subr.bf16.mxu0 0
    %2890 = vmatpush1.bf16.msra.mxu0 %v2868
    %2891 = vmatprep.subr.bf16.mxu0 0
    %2892 = vmatpush1.bf16.msra.mxu0 %v2867
    %2893 = vmatprep.subr.bf16.mxu0 0
    %2894 = vmatpush1.bf16.msra.mxu0 %v2866
    %2895 = vmatprep.subr.bf16.mxu0 0
    %2896 = vmatpush1.bf16.msra.mxu0 %v2865
    %2897 = vmatprep.subr.bf16.mxu0 0
    %2898 = vmatpush2.bf16.msra.mxu0 0
    %2899 = vmatprep.subr.bf16.mxu0 0
    %2900 = vmatpush2.bf16.msra.mxu0 0
    %2901 = vmatprep.subr.bf16.mxu0 0
    %2902 = vmatpush2.bf16.msra.mxu0 0
    %2903 = vmatprep.subr.bf16.mxu0 0
    %2904 = vmatpush2.bf16.msra.mxu0 0
    %2905 = vmatprep.subr.bf16.mxu0 0
    %2906 = vmatpush2.bf16.msra.mxu0 0
    %2907 = vmatprep.subr.bf16.mxu0 0
    %2908 = vmatpush2.bf16.msra.mxu0 0
    %2909 = vmatprep.subr.bf16.mxu0 0
    %2910 = vmatpush2.bf16.msra.mxu0 0
    %2911 = vmatprep.subr.bf16.mxu0 0
    %2912 = vmatpush2.bf16.msra.mxu0 0
    %2913 = vmatprep.mubr.bf16.mxu0 0
    %2914 = vmatmul.mubr.bf16.gmra.mxu0 %v137
    %v2915 = vpop.f32.mrf.mxu0
    %v2916 = vadd.f32 %v2879, %v2915
    %v2917 = vpop.f32.mrf.mxu0
    %v2918 = vpop.f32.mrf.mxu0
    %v2919 = vadd.f32 %v2879, %v2918
    %v2920 = vpop.f32.mrf.mxu0
    %2921 = vmatprep.mubr.bf16.mxu0 0
    %2922 = vmatmul.mubr.bf16.gmra.mxu0 %v138
    %v2923 = vpop.f32.mrf.mxu0
    %v2924 = vadd.f32 %v2879, %v2923
    %v2925 = vpop.f32.mrf.mxu0
    %v2926 = vpop.f32.mrf.mxu0
    %v2927 = vadd.f32 %v2879, %v2926
    %v2928 = vpop.f32.mrf.mxu0
    %2929 = vmatprep.mubr.bf16.mxu0 0
    %2930 = vmatmul.mubr.bf16.gmra.mxu0 %v139
    %v2931 = vpop.f32.mrf.mxu0
    %v2932 = vadd.f32 %v2879, %v2931
    %v2933 = vpop.f32.mrf.mxu0
    %v2934 = vpop.f32.mrf.mxu0
    %v2935 = vadd.f32 %v2879, %v2934
    %v2936 = vpop.f32.mrf.mxu0
    %2937 = vmatprep.mubr.bf16.mxu0 0
    %2938 = vmatmul.mubr.bf16.gmra.mxu0 %v140
    %v2939 = vpop.f32.mrf.mxu0
    %v2940 = vadd.f32 %v2879, %v2939
    %v2941 = vpop.f32.mrf.mxu0
    %v2942 = vpop.f32.mrf.mxu0
    %v2943 = vadd.f32 %v2879, %v2942
    %v2944 = vpop.f32.mrf.mxu0
    %2945 = vmatprep.mubr.bf16.mxu0 0
    %2946 = vmatmul.mubr.bf16.gmra.mxu0 %v141
    %v2947 = vpop.f32.mrf.mxu0
    %v2948 = vadd.f32 %v2879, %v2947
    %v2949 = vpop.f32.mrf.mxu0
    %v2950 = vpop.f32.mrf.mxu0
    %v2951 = vadd.f32 %v2879, %v2950
    %v2952 = vpop.f32.mrf.mxu0
    %2953 = vmatprep.mubr.bf16.mxu0 0
    %2954 = vmatmul.mubr.bf16.gmra.mxu0 %v142
    %v2955 = vpop.f32.mrf.mxu0
    %v2956 = vadd.f32 %v2879, %v2955
    %v2957 = vpop.f32.mrf.mxu0
    %v2958 = vpop.f32.mrf.mxu0
    %v2959 = vadd.f32 %v2879, %v2958
    %v2960 = vpop.f32.mrf.mxu0
    %2961 = vmatprep.mubr.bf16.mxu0 0
    %2962 = vmatmul.mubr.bf16.gmra.mxu0 %v143
    %v2963 = vpop.f32.mrf.mxu0
    %v2964 = vadd.f32 %v2879, %v2963
    %v2965 = vpop.f32.mrf.mxu0
    %v2966 = vpop.f32.mrf.mxu0
    %v2967 = vadd.f32 %v2879, %v2966
    %v2968 = vpop.f32.mrf.mxu0
    %2969 = vmatprep.mubr.bf16.mxu0 0
    %2970 = vmatmul.mubr.bf16.gmra.mxu0 %v144
    %v2971 = vpop.f32.mrf.mxu0
    %v2972 = vadd.f32 %v2879, %v2971
    %v2973 = vpop.f32.mrf.mxu0
    %v2974 = vpop.f32.mrf.mxu0
    %v2975 = vadd.f32 %v2879, %v2974
    %v2976 = vpop.f32.mrf.mxu0
    %2977 = vdwg.mxu0
    %v2978 = vmax.f32 %v2916, 0.0
    %v2979 = vmax.f32 %v2919, 0.0
    %v2980 = vmax.f32 %v2924, 0.0
    %v2981 = vmax.f32 %v2927, 0.0
    %v2982 = vmax.f32 %v2932, 0.0
    %v2983 = vmax.f32 %v2935, 0.0
    %v2984 = vmax.f32 %v2940, 0.0
    %v2985 = vmax.f32 %v2943, 0.0
    %v2986 = vmax.f32 %v2948, 0.0
    %v2987 = vmax.f32 %v2951, 0.0
    %v2988 = vmax.f32 %v2956, 0.0
    %v2989 = vmax.f32 %v2959, 0.0
    %v2990 = vmax.f32 %v2964, 0.0
    %v2991 = vmax.f32 %v2967, 0.0
    %v2992 = vmax.f32 %v2972, 0.0
    %v2993 = vmax.f32 %v2975, 0.0
    %v2994 = vadd.f32 %v2978, %v2679
    %v2995 = vadd.f32 %v2979, %v2680
    %v2996 = vadd.f32 %v2980, %v2681
    %v2997 = vadd.f32 %v2981, %v2682
    %v2998 = vadd.f32 %v2982, %v2683
    %v2999 = vadd.f32 %v2983, %v2684
    %v3000 = vadd.f32 %v2984, %v2685
    %v3001 = vadd.f32 %v2985, %v2686
    %v3002 = vadd.f32 %v2986, %v2687
    %v3003 = vadd.f32 %v2987, %v2688
    %v3004 = vadd.f32 %v2988, %v2689
    %v3005 = vadd.f32 %v2989, %v2690
    %v3006 = vadd.f32 %v2990, %v2691
    %v3007 = vadd.f32 %v2991, %v2692
    %v3008 = vadd.f32 %v2992, %v2693
    %v3009 = vadd.f32 %v2993, %v2694
    %v3010 = vpack.c.bf16 %v2995, %v2994
    %v3011 = vpack.c.bf16 %v2997, %v2996
    %v3012 = vpack.c.bf16 %v2999, %v2998
    %v3013 = vpack.c.bf16 %v3001, %v3000
    %v3014 = vpack.c.bf16 %v3003, %v3002
    %v3015 = vpack.c.bf16 %v3005, %v3004
    %v3016 = vpack.c.bf16 %v3007, %v3006
    %v3017 = vpack.c.bf16 %v3009, %v3008
    %s3018 = scalar_lea.vmem [#allocation6], 576
    %v3019 = vld [vmem:[%s3018] sm:$0xf]
    %v3020 = vld [vmem:[%s3018 + $0x4] sm:$0xf]
    %v3021 = vld [vmem:[%s3018 + $0x8] sm:$0xf]
    %v3022 = vld [vmem:[%s3018 + $0xc] sm:$0xf]
    %v3023 = vld [vmem:[%s3018 + $0x10] sm:$0xf]
    %v3024 = vld [vmem:[%s3018 + $0x14] sm:$0xf]
    %v3025 = vld [vmem:[%s3018 + $0x18] sm:$0xf]
    %v3026 = vld [vmem:[%s3018 + $0x1c] sm:$0xf]
    %v3027 = vld [vmem:[%s3018 + $0x20] sm:$0xf]
    %v3028 = vld [vmem:[%s3018 + $0x24] sm:$0xf]
    %v3029 = vld [vmem:[%s3018 + $0x28] sm:$0xf]
    %v3030 = vld [vmem:[%s3018 + $0x2c] sm:$0xf]
    %v3031 = vld [vmem:[%s3018 + $0x30] sm:$0xf]
    %v3032 = vld [vmem:[%s3018 + $0x34] sm:$0xf]
    %v3033 = vld [vmem:[%s3018 + $0x38] sm:$0xf]
    %v3034 = vld [vmem:[%s3018 + $0x3c] sm:$0xf]
    %v3051 = vunpack.c.l.b16 %v3019
    %v3052 = vunpack.c.l.b16 %v3020
    %v3053 = vunpack.c.l.b16 %v3021
    %v3054 = vunpack.c.l.b16 %v3022
    %v3055 = vunpack.c.l.b16 %v3023
    %v3056 = vunpack.c.l.b16 %v3024
    %v3057 = vunpack.c.l.b16 %v3025
    %v3058 = vunpack.c.l.b16 %v3026
    %v3059 = vunpack.c.l.b16 %v3027
    %v3060 = vunpack.c.l.b16 %v3028
    %v3061 = vunpack.c.l.b16 %v3029
    %v3062 = vunpack.c.l.b16 %v3030
    %v3063 = vunpack.c.l.b16 %v3031
    %v3064 = vunpack.c.l.b16 %v3032
    %v3065 = vunpack.c.l.b16 %v3033
    %v3066 = vunpack.c.l.b16 %v3034
    %v3067 = vpack.c.b16 %v3052, %v3051
    %v3068 = vpack.c.b16 %v3054, %v3053
    %v3069 = vpack.c.b16 %v3056, %v3055
    %v3070 = vpack.c.b16 %v3058, %v3057
    %v3071 = vpack.c.b16 %v3060, %v3059
    %v3072 = vpack.c.b16 %v3062, %v3061
    %v3073 = vpack.c.b16 %v3064, %v3063
    %v3074 = vpack.c.b16 %v3066, %v3065
    %3083 = vmatprep.subr.bf16.mxu0 0
    %3084 = vmatpush1.bf16.msra.mxu0 %v3074
    %3085 = vmatprep.subr.bf16.mxu0 0
    %3086 = vmatpush1.bf16.msra.mxu0 %v3073
    %3087 = vmatprep.subr.bf16.mxu0 0
    %3088 = vmatpush1.bf16.msra.mxu0 %v3072
    %3089 = vmatprep.subr.bf16.mxu0 0
    %3090 = vmatpush1.bf16.msra.mxu0 %v3071
    %3091 = vmatprep.subr.bf16.mxu0 0
    %3092 = vmatpush1.bf16.msra.mxu0 %v3070
    %3093 = vmatprep.subr.bf16.mxu0 0
    %3094 = vmatpush1.bf16.msra.mxu0 %v3069
    %3095 = vmatprep.subr.bf16.mxu0 0
    %3096 = vmatpush1.bf16.msra.mxu0 %v3068
    %3097 = vmatprep.subr.bf16.mxu0 0
    %3098 = vmatpush1.bf16.msra.mxu0 %v3067
    %3099 = vmatprep.subr.bf16.mxu0 0
    %3100 = vmatpush2.bf16.msra.mxu0 0
    %3101 = vmatprep.subr.bf16.mxu0 0
    %3102 = vmatpush2.bf16.msra.mxu0 0
    %3103 = vmatprep.subr.bf16.mxu0 0
    %3104 = vmatpush2.bf16.msra.mxu0 0
    %3105 = vmatprep.subr.bf16.mxu0 0
    %3106 = vmatpush2.bf16.msra.mxu0 0
    %3107 = vmatprep.subr.bf16.mxu0 0
    %3108 = vmatpush2.bf16.msra.mxu0 0
    %3109 = vmatprep.subr.bf16.mxu0 0
    %3110 = vmatpush2.bf16.msra.mxu0 0
    %3111 = vmatprep.subr.bf16.mxu0 0
    %3112 = vmatpush2.bf16.msra.mxu0 0
    %3113 = vmatprep.subr.bf16.mxu0 0
    %3114 = vmatpush2.bf16.msra.mxu0 0
    %3115 = vmatprep.mubr.bf16.mxu0 0
    %3116 = vmatmul.mubr.bf16.gmra.mxu0 %v3010
    %v3117 = vpop.f32.mrf.mxu0
    %v3118 = vadd.f32 0.0, %v3117
    %v3119 = vpop.f32.mrf.mxu0
    %v3120 = vpop.f32.mrf.mxu0
    %v3121 = vadd.f32 0.0, %v3120
    %v3122 = vpop.f32.mrf.mxu0
    %3123 = vmatprep.mubr.bf16.mxu0 0
    %3124 = vmatmul.mubr.bf16.gmra.mxu0 %v3011
    %v3125 = vpop.f32.mrf.mxu0
    %v3126 = vadd.f32 0.0, %v3125
    %v3127 = vpop.f32.mrf.mxu0
    %v3128 = vpop.f32.mrf.mxu0
    %v3129 = vadd.f32 0.0, %v3128
    %v3130 = vpop.f32.mrf.mxu0
    %3131 = vmatprep.mubr.bf16.mxu0 0
    %3132 = vmatmul.mubr.bf16.gmra.mxu0 %v3012
    %v3133 = vpop.f32.mrf.mxu0
    %v3134 = vadd.f32 0.0, %v3133
    %v3135 = vpop.f32.mrf.mxu0
    %v3136 = vpop.f32.mrf.mxu0
    %v3137 = vadd.f32 0.0, %v3136
    %v3138 = vpop.f32.mrf.mxu0
    %3139 = vmatprep.mubr.bf16.mxu0 0
    %3140 = vmatmul.mubr.bf16.gmra.mxu0 %v3013
    %v3141 = vpop.f32.mrf.mxu0
    %v3142 = vadd.f32 0.0, %v3141
    %v3143 = vpop.f32.mrf.mxu0
    %v3144 = vpop.f32.mrf.mxu0
    %v3145 = vadd.f32 0.0, %v3144
    %v3146 = vpop.f32.mrf.mxu0
    %3147 = vmatprep.mubr.bf16.mxu0 0
    %3148 = vmatmul.mubr.bf16.gmra.mxu0 %v3014
    %v3149 = vpop.f32.mrf.mxu0
    %v3150 = vadd.f32 0.0, %v3149
    %v3151 = vpop.f32.mrf.mxu0
    %v3152 = vpop.f32.mrf.mxu0
    %v3153 = vadd.f32 0.0, %v3152
    %v3154 = vpop.f32.mrf.mxu0
    %3155 = vmatprep.mubr.bf16.mxu0 0
    %3156 = vmatmul.mubr.bf16.gmra.mxu0 %v3015
    %v3157 = vpop.f32.mrf.mxu0
    %v3158 = vadd.f32 0.0, %v3157
    %v3159 = vpop.f32.mrf.mxu0
    %v3160 = vpop.f32.mrf.mxu0
    %v3161 = vadd.f32 0.0, %v3160
    %v3162 = vpop.f32.mrf.mxu0
    %3163 = vmatprep.mubr.bf16.mxu0 0
    %3164 = vmatmul.mubr.bf16.gmra.mxu0 %v3016
    %v3165 = vpop.f32.mrf.mxu0
    %v3166 = vadd.f32 0.0, %v3165
    %v3167 = vpop.f32.mrf.mxu0
    %v3168 = vpop.f32.mrf.mxu0
    %v3169 = vadd.f32 0.0, %v3168
    %v3170 = vpop.f32.mrf.mxu0
    %3171 = vmatprep.mubr.bf16.mxu0 0
    %3172 = vmatmul.mubr.bf16.gmra.mxu0 %v3017
    %v3173 = vpop.f32.mrf.mxu0
    %v3174 = vadd.f32 0.0, %v3173
    %v3175 = vpop.f32.mrf.mxu0
    %v3176 = vpop.f32.mrf.mxu0
    %v3177 = vadd.f32 0.0, %v3176
    %v3178 = vpop.f32.mrf.mxu0
    %3179 = vdwg.mxu0
    %v3180 = vpack.c.bf16 %v3121, %v3118
    %v3181 = vpack.c.bf16 %v3129, %v3126
    %v3182 = vpack.c.bf16 %v3137, %v3134
    %v3183 = vpack.c.bf16 %v3145, %v3142
    %v3184 = vpack.c.bf16 %v3153, %v3150
    %v3185 = vpack.c.bf16 %v3161, %v3158
    %v3186 = vpack.c.bf16 %v3169, %v3166
    %v3187 = vpack.c.bf16 %v3177, %v3174
    %s3188 = scalar_lea.vmem [#allocation7], 9
    %v3189 = vld [vmem:[%s3188] sm:$0x1]
    %v3191 = vlaneseq
    %v3192 = vshrl.u32 %v3191, 7
    %v3193 = vsub.s32 0, %v3192
    %v3194 = vrot.slane %v3189, %v3193
    %3196 = vmatprep.subr.bf16.mxu0 0
    %3197 = vmatpush1.bf16.msra.mxu0 %v3187
    %3198 = vmatprep.subr.bf16.mxu0 0
    %3199 = vmatpush1.bf16.msra.mxu0 %v3186
    %3200 = vmatprep.subr.bf16.mxu0 0
    %3201 = vmatpush1.bf16.msra.mxu0 %v3185
    %3202 = vmatprep.subr.bf16.mxu0 0
    %3203 = vmatpush1.bf16.msra.mxu0 %v3184
    %3204 = vmatprep.subr.bf16.mxu0 0
    %3205 = vmatpush1.bf16.msra.mxu0 %v3183
    %3206 = vmatprep.subr.bf16.mxu0 0
    %3207 = vmatpush1.bf16.msra.mxu0 %v3182
    %3208 = vmatprep.subr.bf16.mxu0 0
    %3209 = vmatpush1.bf16.msra.mxu0 %v3181
    %3210 = vmatprep.subr.bf16.mxu0 0
    %3211 = vmatpush1.bf16.msra.mxu0 %v3180
    %3212 = vmatprep.subr.bf16.mxu0 0
    %3213 = vmatpush2.bf16.msra.mxu0 0
    %3214 = vmatprep.subr.bf16.mxu0 0
    %3215 = vmatpush2.bf16.msra.mxu0 0
    %3216 = vmatprep.subr.bf16.mxu0 0
    %3217 = vmatpush2.bf16.msra.mxu0 0
    %3218 = vmatprep.subr.bf16.mxu0 0
    %3219 = vmatpush2.bf16.msra.mxu0 0
    %3220 = vmatprep.subr.bf16.mxu0 0
    %3221 = vmatpush2.bf16.msra.mxu0 0
    %3222 = vmatprep.subr.bf16.mxu0 0
    %3223 = vmatpush2.bf16.msra.mxu0 0
    %3224 = vmatprep.subr.bf16.mxu0 0
    %3225 = vmatpush2.bf16.msra.mxu0 0
    %3226 = vmatprep.subr.bf16.mxu0 0
    %3227 = vmatpush2.bf16.msra.mxu0 0
    %3228 = vmatprep.mubr.bf16.mxu0 0
    %3229 = vmatmul.mubr.bf16.gmra.mxu0 %v137
    %v3230 = vpop.f32.mrf.mxu0
    %v3231 = vadd.f32 %v3194, %v3230
    %v3232 = vpop.f32.mrf.mxu0
    %v3233 = vpop.f32.mrf.mxu0
    %v3234 = vadd.f32 %v3194, %v3233
    %v3235 = vpop.f32.mrf.mxu0
    %3236 = vmatprep.mubr.bf16.mxu0 0
    %3237 = vmatmul.mubr.bf16.gmra.mxu0 %v138
    %v3238 = vpop.f32.mrf.mxu0
    %v3239 = vadd.f32 %v3194, %v3238
    %v3240 = vpop.f32.mrf.mxu0
    %v3241 = vpop.f32.mrf.mxu0
    %v3242 = vadd.f32 %v3194, %v3241
    %v3243 = vpop.f32.mrf.mxu0
    %3244 = vmatprep.mubr.bf16.mxu0 0
    %3245 = vmatmul.mubr.bf16.gmra.mxu0 %v139
    %v3246 = vpop.f32.mrf.mxu0
    %v3247 = vadd.f32 %v3194, %v3246
    %v3248 = vpop.f32.mrf.mxu0
    %v3249 = vpop.f32.mrf.mxu0
    %v3250 = vadd.f32 %v3194, %v3249
    %v3251 = vpop.f32.mrf.mxu0
    %3252 = vmatprep.mubr.bf16.mxu0 0
    %3253 = vmatmul.mubr.bf16.gmra.mxu0 %v140
    %v3254 = vpop.f32.mrf.mxu0
    %v3255 = vadd.f32 %v3194, %v3254
    %v3256 = vpop.f32.mrf.mxu0
    %v3257 = vpop.f32.mrf.mxu0
    %v3258 = vadd.f32 %v3194, %v3257
    %v3259 = vpop.f32.mrf.mxu0
    %3260 = vmatprep.mubr.bf16.mxu0 0
    %3261 = vmatmul.mubr.bf16.gmra.mxu0 %v141
    %v3262 = vpop.f32.mrf.mxu0
    %v3263 = vadd.f32 %v3194, %v3262
    %v3264 = vpop.f32.mrf.mxu0
    %v3265 = vpop.f32.mrf.mxu0
    %v3266 = vadd.f32 %v3194, %v3265
    %v3267 = vpop.f32.mrf.mxu0
    %3268 = vmatprep.mubr.bf16.mxu0 0
    %3269 = vmatmul.mubr.bf16.gmra.mxu0 %v142
    %v3270 = vpop.f32.mrf.mxu0
    %v3271 = vadd.f32 %v3194, %v3270
    %v3272 = vpop.f32.mrf.mxu0
    %v3273 = vpop.f32.mrf.mxu0
    %v3274 = vadd.f32 %v3194, %v3273
    %v3275 = vpop.f32.mrf.mxu0
    %3276 = vmatprep.mubr.bf16.mxu0 0
    %3277 = vmatmul.mubr.bf16.gmra.mxu0 %v143
    %v3278 = vpop.f32.mrf.mxu0
    %v3279 = vadd.f32 %v3194, %v3278
    %v3280 = vpop.f32.mrf.mxu0
    %v3281 = vpop.f32.mrf.mxu0
    %v3282 = vadd.f32 %v3194, %v3281
    %v3283 = vpop.f32.mrf.mxu0
    %3284 = vmatprep.mubr.bf16.mxu0 0
    %3285 = vmatmul.mubr.bf16.gmra.mxu0 %v144
    %v3286 = vpop.f32.mrf.mxu0
    %v3287 = vadd.f32 %v3194, %v3286
    %v3288 = vpop.f32.mrf.mxu0
    %v3289 = vpop.f32.mrf.mxu0
    %v3290 = vadd.f32 %v3194, %v3289
    %v3291 = vpop.f32.mrf.mxu0
    %3292 = vdwg.mxu0
    %v3293 = vmax.f32 %v3231, 0.0
    %v3294 = vmax.f32 %v3234, 0.0
    %v3295 = vmax.f32 %v3239, 0.0
    %v3296 = vmax.f32 %v3242, 0.0
    %v3297 = vmax.f32 %v3247, 0.0
    %v3298 = vmax.f32 %v3250, 0.0
    %v3299 = vmax.f32 %v3255, 0.0
    %v3300 = vmax.f32 %v3258, 0.0
    %v3301 = vmax.f32 %v3263, 0.0
    %v3302 = vmax.f32 %v3266, 0.0
    %v3303 = vmax.f32 %v3271, 0.0
    %v3304 = vmax.f32 %v3274, 0.0
    %v3305 = vmax.f32 %v3279, 0.0
    %v3306 = vmax.f32 %v3282, 0.0
    %v3307 = vmax.f32 %v3287, 0.0
    %v3308 = vmax.f32 %v3290, 0.0
    %v3309 = vlaneseq
    %v3310 = vand.u32 %v3309, 127
    %vm3311 = vcmp.lt.s32.totalorder %v3310, 8
    %v3312 = vsel %vm3311, %v3293, -inf
    %v3313 = vsel %vm3311, %v3294, -inf
    %v3314 = vsel %vm3311, %v3295, -inf
    %v3315 = vsel %vm3311, %v3296, -inf
    %v3316 = vsel %vm3311, %v3297, -inf
    %v3317 = vsel %vm3311, %v3298, -inf
    %v3318 = vsel %vm3311, %v3299, -inf
    %v3319 = vsel %vm3311, %v3300, -inf
    %v3320 = vsel %vm3311, %v3301, -inf
    %v3321 = vsel %vm3311, %v3302, -inf
    %v3322 = vsel %vm3311, %v3303, -inf
    %v3323 = vsel %vm3311, %v3304, -inf
    %v3324 = vsel %vm3311, %v3305, -inf
    %v3325 = vsel %vm3311, %v3306, -inf
    %v3326 = vsel %vm3311, %v3307, -inf
    %v3327 = vsel %vm3311, %v3308, -inf
    %3328 = vmax.xlane.f32.xlu0 %v3312
    %v3329 = vpop.xlane.xlu0 %3328
    %3330 = vmax.xlane.f32.xlu0 %v3313
    %v3331 = vpop.xlane.xlu0 %3330
    %3332 = vmax.xlane.f32.xlu0 %v3314
    %v3333 = vpop.xlane.xlu0 %3332
    %3334 = vmax.xlane.f32.xlu0 %v3315
    %v3335 = vpop.xlane.xlu0 %3334
    %3336 = vmax.xlane.f32.xlu0 %v3316
    %v3337 = vpop.xlane.xlu0 %3336
    %3338 = vmax.xlane.f32.xlu0 %v3317
    %v3339 = vpop.xlane.xlu0 %3338
    %3340 = vmax.xlane.f32.xlu0 %v3318
    %v3341 = vpop.xlane.xlu0 %3340
    %3342 = vmax.xlane.f32.xlu0 %v3319
    %v3343 = vpop.xlane.xlu0 %3342
    %3344 = vmax.xlane.f32.xlu0 %v3320
    %v3345 = vpop.xlane.xlu0 %3344
    %3346 = vmax.xlane.f32.xlu0 %v3321
    %v3347 = vpop.xlane.xlu0 %3346
    %3348 = vmax.xlane.f32.xlu0 %v3322
    %v3349 = vpop.xlane.xlu0 %3348
    %3350 = vmax.xlane.f32.xlu0 %v3323
    %v3351 = vpop.xlane.xlu0 %3350
    %3352 = vmax.xlane.f32.xlu0 %v3324
    %v3353 = vpop.xlane.xlu0 %3352
    %3354 = vmax.xlane.f32.xlu0 %v3325
    %v3355 = vpop.xlane.xlu0 %3354
    %3356 = vmax.xlane.f32.xlu0 %v3326
    %v3357 = vpop.xlane.xlu0 %3356
    %3358 = vmax.xlane.f32.xlu0 %v3327
    %v3359 = vpop.xlane.xlu0 %3358
    %v3360 = vsub.f32 %v3312, %v3329
    %v3361 = vsub.f32 %v3313, %v3331
    %v3362 = vsub.f32 %v3314, %v3333
    %v3363 = vsub.f32 %v3315, %v3335
    %v3364 = vsub.f32 %v3316, %v3337
    %v3365 = vsub.f32 %v3317, %v3339
    %v3366 = vsub.f32 %v3318, %v3341
    %v3367 = vsub.f32 %v3319, %v3343
    %v3368 = vsub.f32 %v3320, %v3345
    %v3369 = vsub.f32 %v3321, %v3347
    %v3370 = vsub.f32 %v3322, %v3349
    %v3371 = vsub.f32 %v3323, %v3351
    %v3372 = vsub.f32 %v3324, %v3353
    %v3373 = vsub.f32 %v3325, %v3355
    %v3374 = vsub.f32 %v3326, %v3357
    %v3375 = vsub.f32 %v3327, %v3359
    %v3376 = vmul.f32 %v3360, 1.442695
    %v3377 = vpow.pop %v3376
    %v3378 = vmul.f32 %v3361, 1.442695
    %v3379 = vpow.pop %v3378
    %v3380 = vmul.f32 %v3362, 1.442695
    %v3381 = vpow.pop %v3380
    %v3382 = vmul.f32 %v3363, 1.442695
    %v3383 = vpow.pop %v3382
    %v3384 = vmul.f32 %v3364, 1.442695
    %v3385 = vpow.pop %v3384
    %v3386 = vmul.f32 %v3365, 1.442695
    %v3387 = vpow.pop %v3386
    %v3388 = vmul.f32 %v3366, 1.442695
    %v3389 = vpow.pop %v3388
    %v3390 = vmul.f32 %v3367, 1.442695
    %v3391 = vpow.pop %v3390
    %v3392 = vmul.f32 %v3368, 1.442695
    %v3393 = vpow.pop %v3392
    %v3394 = vmul.f32 %v3369, 1.442695
    %v3395 = vpow.pop %v3394
    %v3396 = vmul.f32 %v3370, 1.442695
    %v3397 = vpow.pop %v3396
    %v3398 = vmul.f32 %v3371, 1.442695
    %v3399 = vpow.pop %v3398
    %v3400 = vmul.f32 %v3372, 1.442695
    %v3401 = vpow.pop %v3400
    %v3402 = vmul.f32 %v3373, 1.442695
    %v3403 = vpow.pop %v3402
    %v3404 = vmul.f32 %v3374, 1.442695
    %v3405 = vpow.pop %v3404
    %v3406 = vmul.f32 %v3375, 1.442695
    %v3407 = vpow.pop %v3406
    %3408 = vadd.xlane.f32.xlu0 %v3377
    %v3409 = vpop.xlane.xlu0 %3408
    %3410 = vadd.xlane.f32.xlu0 %v3379
    %v3411 = vpop.xlane.xlu0 %3410
    %3412 = vadd.xlane.f32.xlu0 %v3381
    %v3413 = vpop.xlane.xlu0 %3412
    %3414 = vadd.xlane.f32.xlu0 %v3383
    %v3415 = vpop.xlane.xlu0 %3414
    %3416 = vadd.xlane.f32.xlu0 %v3385
    %v3417 = vpop.xlane.xlu0 %3416
    %3418 = vadd.xlane.f32.xlu0 %v3387
    %v3419 = vpop.xlane.xlu0 %3418
    %3420 = vadd.xlane.f32.xlu0 %v3389
    %v3421 = vpop.xlane.xlu0 %3420
    %3422 = vadd.xlane.f32.xlu0 %v3391
    %v3423 = vpop.xlane.xlu0 %3422
    %3424 = vadd.xlane.f32.xlu0 %v3393
    %v3425 = vpop.xlane.xlu0 %3424
    %3426 = vadd.xlane.f32.xlu0 %v3395
    %v3427 = vpop.xlane.xlu0 %3426
    %3428 = vadd.xlane.f32.xlu0 %v3397
    %v3429 = vpop.xlane.xlu0 %3428
    %3430 = vadd.xlane.f32.xlu0 %v3399
    %v3431 = vpop.xlane.xlu0 %3430
    %3432 = vadd.xlane.f32.xlu0 %v3401
    %v3433 = vpop.xlane.xlu0 %3432
    %3434 = vadd.xlane.f32.xlu0 %v3403
    %v3435 = vpop.xlane.xlu0 %3434
    %3436 = vadd.xlane.f32.xlu0 %v3405
    %v3437 = vpop.xlane.xlu0 %3436
    %3438 = vadd.xlane.f32.xlu0 %v3407
    %v3439 = vpop.xlane.xlu0 %3438
    %v3440 = vlog2.pop %v3409
    %v3441 = vmul.f32 %v3440, 0.6931472
    %v3442 = vlog2.pop %v3411
    %v3443 = vmul.f32 %v3442, 0.6931472
    %v3444 = vlog2.pop %v3413
    %v3445 = vmul.f32 %v3444, 0.6931472
    %v3446 = vlog2.pop %v3415
    %v3447 = vmul.f32 %v3446, 0.6931472
    %v3448 = vlog2.pop %v3417
    %v3449 = vmul.f32 %v3448, 0.6931472
    %v3450 = vlog2.pop %v3419
    %v3451 = vmul.f32 %v3450, 0.6931472
    %v3452 = vlog2.pop %v3421
    %v3453 = vmul.f32 %v3452, 0.6931472
    %v3454 = vlog2.pop %v3423
    %v3455 = vmul.f32 %v3454, 0.6931472
    %v3456 = vlog2.pop %v3425
    %v3457 = vmul.f32 %v3456, 0.6931472
    %v3458 = vlog2.pop %v3427
    %v3459 = vmul.f32 %v3458, 0.6931472
    %v3460 = vlog2.pop %v3429
    %v3461 = vmul.f32 %v3460, 0.6931472
    %v3462 = vlog2.pop %v3431
    %v3463 = vmul.f32 %v3462, 0.6931472
    %v3464 = vlog2.pop %v3433
    %v3465 = vmul.f32 %v3464, 0.6931472
    %v3466 = vlog2.pop %v3435
    %v3467 = vmul.f32 %v3466, 0.6931472
    %v3468 = vlog2.pop %v3437
    %v3469 = vmul.f32 %v3468, 0.6931472
    %v3470 = vlog2.pop %v3439
    %v3471 = vmul.f32 %v3470, 0.6931472
    %v3472 = vsub.f32 %v3360, %v3441
    %v3473 = vsub.f32 %v3361, %v3443
    %v3474 = vsub.f32 %v3362, %v3445
    %v3475 = vsub.f32 %v3363, %v3447
    %v3476 = vsub.f32 %v3364, %v3449
    %v3477 = vsub.f32 %v3365, %v3451
    %v3478 = vsub.f32 %v3366, %v3453
    %v3479 = vsub.f32 %v3367, %v3455
    %v3480 = vsub.f32 %v3368, %v3457
    %v3481 = vsub.f32 %v3369, %v3459
    %v3482 = vsub.f32 %v3370, %v3461
    %v3483 = vsub.f32 %v3371, %v3463
    %v3484 = vsub.f32 %v3372, %v3465
    %v3485 = vsub.f32 %v3373, %v3467
    %v3486 = vsub.f32 %v3374, %v3469
    %v3487 = vsub.f32 %v3375, %v3471
    %v3488 = vsel %vm3311, %v3472, 0.0
    %v3489 = vsel %vm3311, %v3473, 0.0
    %v3490 = vsel %vm3311, %v3474, 0.0
    %v3491 = vsel %vm3311, %v3475, 0.0
    %v3492 = vsel %vm3311, %v3476, 0.0
    %v3493 = vsel %vm3311, %v3477, 0.0
    %v3494 = vsel %vm3311, %v3478, 0.0
    %v3495 = vsel %vm3311, %v3479, 0.0
    %v3496 = vsel %vm3311, %v3480, 0.0
    %v3497 = vsel %vm3311, %v3481, 0.0
    %v3498 = vsel %vm3311, %v3482, 0.0
    %v3499 = vsel %vm3311, %v3483, 0.0
    %v3500 = vsel %vm3311, %v3484, 0.0
    %v3501 = vsel %vm3311, %v3485, 0.0
    %v3502 = vsel %vm3311, %v3486, 0.0
    %v3503 = vsel %vm3311, %v3487, 0.0
    %3504 = vst [vmem:[%s4] sm:$0xff] %v3488
    %3505 = vst [vmem:[%s4 + $0x8] sm:$0xff] %v3489
    %3506 = vst [vmem:[%s4 + $0x10] sm:$0xff] %v3490
    %3507 = vst [vmem:[%s4 + $0x18] sm:$0xff] %v3491
    %3508 = vst [vmem:[%s4 + $0x20] sm:$0xff] %v3492
    %3509 = vst [vmem:[%s4 + $0x28] sm:$0xff] %v3493
    %3510 = vst [vmem:[%s4 + $0x30] sm:$0xff] %v3494
    %3511 = vst [vmem:[%s4 + $0x38] sm:$0xff] %v3495
    %3512 = vst [vmem:[%s4 + $0x40] sm:$0xff] %v3496
    %3513 = vst [vmem:[%s4 + $0x48] sm:$0xff] %v3497
    %3514 = vst [vmem:[%s4 + $0x50] sm:$0xff] %v3498
    %3515 = vst [vmem:[%s4 + $0x58] sm:$0xff] %v3499
    %3516 = vst [vmem:[%s4 + $0x60] sm:$0xff] %v3500
    %3517 = vst [vmem:[%s4 + $0x68] sm:$0xff] %v3501
    %3518 = vst [vmem:[%s4 + $0x70] sm:$0xff] %v3502
    %3519 = vst [vmem:[%s4 + $0x78] sm:$0xff] %v3503
    // Predicated region
    $region34: #{resgcn_forward.1} parent=1 // pred_check
      _
    $region35: #{resgcn_forward.1} parent=1 // pred_check_branch
      %3521 = sbr.rel (0) target = $region37
    $region36: #{resgcn_forward.1} parent=1 // pred_region
      _
    $region37: #{resgcn_forward.1} parent=1 // pred_fallthru
      _
    // Predicated region
    $region38: #{resgcn_forward.1} parent=1 // pred_check
      _
    $region39: #{resgcn_forward.1} parent=1 // pred_check_branch
      %3523 = sbr.rel (0) target = $region41
    $region40: #{resgcn_forward.1} parent=1 // pred_region
      _
    $region41: #{resgcn_forward.1} parent=1 // pred_fallthru
      _
    %3524 = vsyncpa [#allocation3], 1
    %3525 = vsyncpa [#allocation5], 1
    %3526 = vsyncpa [#allocation8], 1

</llo_original>
